<compile_context>
chip_gen: v7x
topology: tpu7x:2x2x1
jax: 0.10.0
libtpu: 0.0.40
codegen_flags: <defaults>
</compile_context>

<pallas_src>
import functools

import jax
import jax.numpy as jnp
from jax.experimental import pallas as pl
from jax.experimental.pallas import tpu as pltpu

MAX_NORM = 1.0  # nn.Embedding(max_norm=True) -> max_norm == 1.0


def _round_up(x, m):
    return (x + m - 1) // m * m


# ---------------------------------------------------------------------------
# Kernel A: HBM row gather + max_norm renorm + context mean  ->  x (B_pad, E)
# ---------------------------------------------------------------------------
def gather_mean_kernel(idx_ref, emb_hbm, x_ref, buf_ref, sem_ref, *,
                       context, n_valid):
    # idx_ref: (N,) int32 in SMEM (scalar prefetch) -- flattened token ids
    # emb_hbm: (V, E) f32 in HBM (memory_space=pl.ANY) -- never copied wholesale
    # x_ref:   (B_pad, E) f32 output -- averaged context embeddings
    # buf_ref: (N_pad, E) f32 VMEM scratch for the gathered rows
    # sem_ref: (N,) DMA semaphores
    n_pad, e = buf_ref.shape
    b_pad = x_ref.shape[0]

    # Zero padding rows (disjoint from the DMA'd region) so the averaging matmul
    # never touches uninitialized VMEM.  Static check: traced only if needed.
    if n_pad > n_valid:
        buf_ref[pl.ds(n_valid, n_pad - n_valid), :] = jnp.zeros(
            (n_pad - n_valid, e), jnp.float32)

    # Gather only the N = batch*context needed embedding rows from HBM.
    copies = []
    for n in range(n_valid):
        cp = pltpu.make_async_copy(
            emb_hbm.at[pl.ds(idx_ref[n], 1), :],
            buf_ref.at[pl.ds(n, 1), :],
            sem_ref.at[n],
        )
        cp.start()
        copies.append(cp)
    for cp in copies:
        cp.wait()

    rows = buf_ref[...]                                           # (N_pad, E) f32

    # Embedding max_norm renormalization (PyTorch lookup-time renorm), f32 only.
    ssq = jnp.sum(rows * rows, axis=-1, keepdims=True)            # (N_pad, 1)
    norm = jnp.sqrt(ssq)
    scale = jnp.where(norm > MAX_NORM, MAX_NORM / (norm + 1e-7), 1.0)
    rows = rows * scale

    # Mean over the context axis via a constant averaging matmul on the MXU.
    n_ids = jax.lax.broadcasted_iota(jnp.int32, (b_pad, n_pad), 1)
    b_ids = jax.lax.broadcasted_iota(jnp.int32, (b_pad, n_pad), 0)
    lo = b_ids * context
    in_row = jnp.logical_and(n_ids >= lo, n_ids < lo + context)
    avg = jnp.where(in_row, 1.0 / context, 0.0)                   # (B_pad, N_pad)
    # Padded batch rows (b >= B) select only zeroed / out-of-range buffer rows,
    # so they stay zero and are sliced off in the wrapper.
    x_ref[...] = jnp.dot(avg, rows, preferred_element_type=jnp.float32)


# ---------------------------------------------------------------------------
# Kernel B: vocab-tiled Linear, W streamed as bf16, f32 accumulate + f32 bias
# ---------------------------------------------------------------------------
def linear_kernel(x_ref, w_ref, b_ref, out_ref):
    # x_ref:   (B_pad, E) f32 (tiny, constant across vocab tiles)
    # w_ref:   (E, TV) bf16 vocab tile of the transposed Linear weight (streamed)
    # b_ref:   (1, TV) f32 bias tile
    # out_ref: (B_pad, TV) f32 lane-dense output tile
    w = w_ref[...].astype(jnp.float32)     # bf16 on the wire, f32 on the MXU
    out_ref[...] = (
        jnp.dot(x_ref[...], w, preferred_element_type=jnp.float32) + b_ref[...]
    )


def cbow_forward(indices, emb_table, w_t, bias, *, tv=1024):
    """indices: (B, C) int32; emb_table: (V, E); w_t: (E, V); bias: (V,)."""
    B, C = indices.shape
    V, E = emb_table.shape

    B_pad = _round_up(B, 8)
    N = B * C
    N_pad = _round_up(N, 8)

    idx_flat = indices.reshape(-1).astype(jnp.int32)

    # ---- Kernel A: x = mean(renorm(emb[idx]), context) -----------------------
    gather = functools.partial(gather_mean_kernel, context=C, n_valid=N)
    x = pl.pallas_call(
        gather,
        out_shape=jax.ShapeDtypeStruct((B_pad, E), jnp.float32),
        grid_spec=pltpu.PrefetchScalarGridSpec(
            num_scalar_prefetch=1,                       # token ids -> SMEM
            grid=(1,),
            in_specs=[pl.BlockSpec(memory_space=pl.ANY)],  # emb table stays in HBM
            out_specs=pl.BlockSpec((B_pad, E), lambda i, idx: (0, 0)),
            scratch_shapes=[
                pltpu.VMEM((N_pad, E), jnp.float32),
                pltpu.SemaphoreType.DMA((N,)),
            ],
        ),
        compiler_params=pltpu.CompilerParams(
            dimension_semantics=("arbitrary",),
        ),
        cost_estimate=pl.CostEstimate(
            flops=2 * B_pad * N_pad * E + 6 * N_pad * E,
            transcendentals=N_pad,
            bytes_accessed=4 * (N + N * E + B_pad * E),  # only N rows leave HBM
        ),
    )(idx_flat, emb_table.astype(jnp.float32))

    # ---- Kernel B: out = x @ W.T + b, vocab-tiled -----------------------------
    TV = max(128, min(_round_up(tv, 128), _round_up(V, 128)))

    # Budget double-buffered tiles against the smallest scoped-VMEM target (v7x).
    vmem_budget = 24 * 1024 * 1024

    def _need(t):
        return (2 * (E * t * 2)          # W tiles, bf16, double-buffered
                + 2 * (t * 4)            # bias tiles
                + 2 * (B_pad * t * 4)    # output tiles
                + 2 * (B_pad * E * 4))   # x input

    while TV > 128 and _need(TV) > vmem_budget:
        TV -= 128
    V_pad = _round_up(V, TV)
    num_tiles = V_pad // TV

    w_p = jnp.zeros((E, V_pad), jnp.bfloat16).at[:, :V].set(w_t.astype(jnp.bfloat16))
    b_p = jnp.zeros((1, V_pad), jnp.float32).at[:, :V].set(
        bias.reshape(1, V).astype(jnp.float32))

    vmem_limit = min(32 * 1024 * 1024, max(8 * 1024 * 1024, 2 * _need(TV)))

    out_padded = pl.pallas_call(
        linear_kernel,
        out_shape=jax.ShapeDtypeStruct((B_pad, V_pad), jnp.float32),
        grid_spec=pltpu.PrefetchScalarGridSpec(
            num_scalar_prefetch=0,
            grid=(num_tiles,),
            in_specs=[
                pl.BlockSpec((B_pad, E), lambda j: (0, 0)),   # x (tiny, constant)
                pl.BlockSpec((E, TV), lambda j: (0, j)),      # bf16 W.T tile (streamed)
                pl.BlockSpec((1, TV), lambda j: (0, j)),      # f32 bias tile
            ],
            out_specs=pl.BlockSpec((B_pad, TV), lambda j: (0, j)),
        ),
        compiler_params=pltpu.CompilerParams(
            dimension_semantics=("parallel",),   # vocab tiles are independent
            vmem_limit_bytes=vmem_limit,
        ),
        cost_estimate=pl.CostEstimate(
            flops=2 * B_pad * E * V_pad,
            transcendentals=0,
            bytes_accessed=(2 * E * V_pad + 4 * V_pad
                            + 4 * B_pad * E + 4 * B_pad * V_pad),
        ),
    )(x, w_p, b_p)

    return out_padded[:B, :V]


def cbow_ref(indices, emb_table, w_t, bias):
    rows = emb_table[indices]                              # (B, C, E)
    norms = jnp.linalg.norm(rows, axis=-1, keepdims=True)  # (B, C, 1)
    scale = jnp.where(norms > MAX_NORM, MAX_NORM / (norms + 1e-7), 1.0)
    x = (rows * scale).mean(axis=1)                        # (B, E)
    return (
        jnp.dot(x, w_t, precision=jax.lax.Precision.HIGHEST)
        + bias.reshape(1, -1)
    )


if __name__ == "__main__":
    vocab_size = 64
    embed_dim = 32
    batch = 4
    context = 6

    key = jax.random.PRNGKey(0)
    k_emb, k_w, k_b, k_idx = jax.random.split(key, 4)

    # Deterministic synthetic parameters (shapes follow the module __init__).
    emb_table = jax.random.normal(k_emb, (vocab_size, embed_dim), dtype=jnp.float32)
    linear_w = jax.random.normal(k_w, (vocab_size, embed_dim), dtype=jnp.float32) * 0.1
    linear_b = jax.random.normal(k_b, (vocab_size,), dtype=jnp.float32) * 0.1

    w_t = linear_w.T  # (E, V): lane-dense on the vocab axis inside kernel B

    indices = jax.random.randint(
        k_idx, (batch, context), 0, vocab_size, dtype=jnp.int32
    )

    out = cbow_forward(indices, emb_table, w_t, linear_b)
    out = jax.block_until_ready(out)

    ref = cbow_ref(indices, emb_table, w_t, linear_b)
    assert out.shape == (batch, vocab_size)
    # Tolerance accounts for the bf16-streamed Linear weight (quantization error
    # ~1e-4..1e-3 vs the full-f32 reference); everything else is f32.
    assert jnp.allclose(out, ref, atol=5e-3, rtol=5e-3), float(
        jnp.max(jnp.abs(out - ref))
    )

    print("KERNEL_OK")
</pallas_src>

<mosaic_0001>
module attributes {stable_mosaic.version = 11 : i64} {
  func.func @gather_mean_kernel(%arg0: i32, %arg1: memref<24xi32, #tpu.memory_space<smem>>, %arg2: memref<64x32xf32, #tpu.memory_space<any>>, %arg3: memref<8x32xf32, #tpu.memory_space<vmem>>, %arg4: memref<24x32xf32, #tpu.memory_space<vmem>>, %arg5: memref<24x!tpu.dma_semaphore, #tpu.memory_space<semaphore_mem>>) attributes {dimension_semantics = [#tpu.dimension_semantics<arbitrary>], iteration_bounds = array<i64: 1>, scalar_prefetch = 1 : i64, scratch_operands = 2 : i64, tpu.core_type = #tpu.core_type<tc>, window_params = [{}, {pipeline_mode = #tpu.pipeline_mode<synchronous>, transform_indices = @transform_1, window_bounds = array<i64: 8, 32>}]} {
    %c0 = arith.constant 0 : index
    %0 = memref.load %arg1[%c0] : memref<24xi32, #tpu.memory_space<smem>>
    %c0_i32 = arith.constant 0 : i32
    %c0_i32_0 = arith.constant 0 : i32
    %1 = tpu.memref_slice %arg2[%0, %c0_i32_0] : memref<64x32xf32, #tpu.memory_space<any>> -> memref<1x32xf32, #tpu.memory_space<any>>
    %c0_i32_1 = arith.constant 0 : i32
    %c0_i32_2 = arith.constant 0 : i32
    %2 = tpu.memref_slice %arg4[%c0_i32_1, %c0_i32_2] : memref<24x32xf32, #tpu.memory_space<vmem>> -> memref<1x32xf32, #tpu.memory_space<vmem>>
    %3 = tpu.memref_slice %arg5[%c0_i32] : memref<24x!tpu.dma_semaphore, #tpu.memory_space<semaphore_mem>> -> memref<1x!tpu.dma_semaphore, #tpu.memory_space<semaphore_mem>>
    %4 = tpu.memref_squeeze %3 : memref<1x!tpu.dma_semaphore, #tpu.memory_space<semaphore_mem>> -> memref<!tpu.dma_semaphore, #tpu.memory_space<semaphore_mem>>
    tpu.enqueue_dma source(%1 : memref<1x32xf32, #tpu.memory_space<any>>) target(%2 : memref<1x32xf32, #tpu.memory_space<vmem>>) target_semaphore(%4 : memref<!tpu.dma_semaphore, #tpu.memory_space<semaphore_mem>>)
    %c1 = arith.constant 1 : index
    %5 = memref.load %arg1[%c1] : memref<24xi32, #tpu.memory_space<smem>>
    %c1_i32 = arith.constant 1 : i32
    %c0_i32_3 = arith.constant 0 : i32
    %6 = tpu.memref_slice %arg2[%5, %c0_i32_3] : memref<64x32xf32, #tpu.memory_space<any>> -> memref<1x32xf32, #tpu.memory_space<any>>
    %c1_i32_4 = arith.constant 1 : i32
    %c0_i32_5 = arith.constant 0 : i32
    %7 = tpu.memref_slice %arg4[%c1_i32_4, %c0_i32_5] : memref<24x32xf32, #tpu.memory_space<vmem>> -> memref<1x32xf32, #tpu.memory_space<vmem>>
    %8 = tpu.memref_slice %arg5[%c1_i32] : memref<24x!tpu.dma_semaphore, #tpu.memory_space<semaphore_mem>> -> memref<1x!tpu.dma_semaphore, #tpu.memory_space<semaphore_mem>>
    %9 = tpu.memref_squeeze %8 : memref<1x!tpu.dma_semaphore, #tpu.memory_space<semaphore_mem>> -> memref<!tpu.dma_semaphore, #tpu.memory_space<semaphore_mem>>
    tpu.enqueue_dma source(%6 : memref<1x32xf32, #tpu.memory_space<any>>) target(%7 : memref<1x32xf32, #tpu.memory_space<vmem>>) target_semaphore(%9 : memref<!tpu.dma_semaphore, #tpu.memory_space<semaphore_mem>>)
    %c2 = arith.constant 2 : index
    %10 = memref.load %arg1[%c2] : memref<24xi32, #tpu.memory_space<smem>>
    %c2_i32 = arith.constant 2 : i32
    %c0_i32_6 = arith.constant 0 : i32
    %11 = tpu.memref_slice %arg2[%10, %c0_i32_6] : memref<64x32xf32, #tpu.memory_space<any>> -> memref<1x32xf32, #tpu.memory_space<any>>
    %c2_i32_7 = arith.constant 2 : i32
    %c0_i32_8 = arith.constant 0 : i32
    %12 = tpu.memref_slice %arg4[%c2_i32_7, %c0_i32_8] : memref<24x32xf32, #tpu.memory_space<vmem>> -> memref<1x32xf32, #tpu.memory_space<vmem>>
    %13 = tpu.memref_slice %arg5[%c2_i32] : memref<24x!tpu.dma_semaphore, #tpu.memory_space<semaphore_mem>> -> memref<1x!tpu.dma_semaphore, #tpu.memory_space<semaphore_mem>>
    %14 = tpu.memref_squeeze %13 : memref<1x!tpu.dma_semaphore, #tpu.memory_space<semaphore_mem>> -> memref<!tpu.dma_semaphore, #tpu.memory_space<semaphore_mem>>
    tpu.enqueue_dma source(%11 : memref<1x32xf32, #tpu.memory_space<any>>) target(%12 : memref<1x32xf32, #tpu.memory_space<vmem>>) target_semaphore(%14 : memref<!tpu.dma_semaphore, #tpu.memory_space<semaphore_mem>>)
    %c3 = arith.constant 3 : index
    %15 = memref.load %arg1[%c3] : memref<24xi32, #tpu.memory_space<smem>>
    %c3_i32 = arith.constant 3 : i32
    %c0_i32_9 = arith.constant 0 : i32
    %16 = tpu.memref_slice %arg2[%15, %c0_i32_9] : memref<64x32xf32, #tpu.memory_space<any>> -> memref<1x32xf32, #tpu.memory_space<any>>
    %c3_i32_10 = arith.constant 3 : i32
    %c0_i32_11 = arith.constant 0 : i32
    %17 = tpu.memref_slice %arg4[%c3_i32_10, %c0_i32_11] : memref<24x32xf32, #tpu.memory_space<vmem>> -> memref<1x32xf32, #tpu.memory_space<vmem>>
    %18 = tpu.memref_slice %arg5[%c3_i32] : memref<24x!tpu.dma_semaphore, #tpu.memory_space<semaphore_mem>> -> memref<1x!tpu.dma_semaphore, #tpu.memory_space<semaphore_mem>>
    %19 = tpu.memref_squeeze %18 : memref<1x!tpu.dma_semaphore, #tpu.memory_space<semaphore_mem>> -> memref<!tpu.dma_semaphore, #tpu.memory_space<semaphore_mem>>
    tpu.enqueue_dma source(%16 : memref<1x32xf32, #tpu.memory_space<any>>) target(%17 : memref<1x32xf32, #tpu.memory_space<vmem>>) target_semaphore(%19 : memref<!tpu.dma_semaphore, #tpu.memory_space<semaphore_mem>>)
    %c4 = arith.constant 4 : index
    %20 = memref.load %arg1[%c4] : memref<24xi32, #tpu.memory_space<smem>>
    %c4_i32 = arith.constant 4 : i32
    %c0_i32_12 = arith.constant 0 : i32
    %21 = tpu.memref_slice %arg2[%20, %c0_i32_12] : memref<64x32xf32, #tpu.memory_space<any>> -> memref<1x32xf32, #tpu.memory_space<any>>
    %c4_i32_13 = arith.constant 4 : i32
    %c0_i32_14 = arith.constant 0 : i32
    %22 = tpu.memref_slice %arg4[%c4_i32_13, %c0_i32_14] : memref<24x32xf32, #tpu.memory_space<vmem>> -> memref<1x32xf32, #tpu.memory_space<vmem>>
    %23 = tpu.memref_slice %arg5[%c4_i32] : memref<24x!tpu.dma_semaphore, #tpu.memory_space<semaphore_mem>> -> memref<1x!tpu.dma_semaphore, #tpu.memory_space<semaphore_mem>>
    %24 = tpu.memref_squeeze %23 : memref<1x!tpu.dma_semaphore, #tpu.memory_space<semaphore_mem>> -> memref<!tpu.dma_semaphore, #tpu.memory_space<semaphore_mem>>
    tpu.enqueue_dma source(%21 : memref<1x32xf32, #tpu.memory_space<any>>) target(%22 : memref<1x32xf32, #tpu.memory_space<vmem>>) target_semaphore(%24 : memref<!tpu.dma_semaphore, #tpu.memory_space<semaphore_mem>>)
    %c5 = arith.constant 5 : index
    %25 = memref.load %arg1[%c5] : memref<24xi32, #tpu.memory_space<smem>>
    %c5_i32 = arith.constant 5 : i32
    %c0_i32_15 = arith.constant 0 : i32
    %26 = tpu.memref_slice %arg2[%25, %c0_i32_15] : memref<64x32xf32, #tpu.memory_space<any>> -> memref<1x32xf32, #tpu.memory_space<any>>
    %c5_i32_16 = arith.constant 5 : i32
    %c0_i32_17 = arith.constant 0 : i32
    %27 = tpu.memref_slice %arg4[%c5_i32_16, %c0_i32_17] : memref<24x32xf32, #tpu.memory_space<vmem>> -> memref<1x32xf32, #tpu.memory_space<vmem>>
    %28 = tpu.memref_slice %arg5[%c5_i32] : memref<24x!tpu.dma_semaphore, #tpu.memory_space<semaphore_mem>> -> memref<1x!tpu.dma_semaphore, #tpu.memory_space<semaphore_mem>>
    %29 = tpu.memref_squeeze %28 : memref<1x!tpu.dma_semaphore, #tpu.memory_space<semaphore_mem>> -> memref<!tpu.dma_semaphore, #tpu.memory_space<semaphore_mem>>
    tpu.enqueue_dma source(%26 : memref<1x32xf32, #tpu.memory_space<any>>) target(%27 : memref<1x32xf32, #tpu.memory_space<vmem>>) target_semaphore(%29 : memref<!tpu.dma_semaphore, #tpu.memory_space<semaphore_mem>>)
    %c6 = arith.constant 6 : index
    %30 = memref.load %arg1[%c6] : memref<24xi32, #tpu.memory_space<smem>>
    %c6_i32 = arith.constant 6 : i32
    %c0_i32_18 = arith.constant 0 : i32
    %31 = tpu.memref_slice %arg2[%30, %c0_i32_18] : memref<64x32xf32, #tpu.memory_space<any>> -> memref<1x32xf32, #tpu.memory_space<any>>
    %c6_i32_19 = arith.constant 6 : i32
    %c0_i32_20 = arith.constant 0 : i32
    %32 = tpu.memref_slice %arg4[%c6_i32_19, %c0_i32_20] : memref<24x32xf32, #tpu.memory_space<vmem>> -> memref<1x32xf32, #tpu.memory_space<vmem>>
    %33 = tpu.memref_slice %arg5[%c6_i32] : memref<24x!tpu.dma_semaphore, #tpu.memory_space<semaphore_mem>> -> memref<1x!tpu.dma_semaphore, #tpu.memory_space<semaphore_mem>>
    %34 = tpu.memref_squeeze %33 : memref<1x!tpu.dma_semaphore, #tpu.memory_space<semaphore_mem>> -> memref<!tpu.dma_semaphore, #tpu.memory_space<semaphore_mem>>
    tpu.enqueue_dma source(%31 : memref<1x32xf32, #tpu.memory_space<any>>) target(%32 : memref<1x32xf32, #tpu.memory_space<vmem>>) target_semaphore(%34 : memref<!tpu.dma_semaphore, #tpu.memory_space<semaphore_mem>>)
    %c7 = arith.constant 7 : index
    %35 = memref.load %arg1[%c7] : memref<24xi32, #tpu.memory_space<smem>>
    %c7_i32 = arith.constant 7 : i32
    %c0_i32_21 = arith.constant 0 : i32
    %36 = tpu.memref_slice %arg2[%35, %c0_i32_21] : memref<64x32xf32, #tpu.memory_space<any>> -> memref<1x32xf32, #tpu.memory_space<any>>
    %c7_i32_22 = arith.constant 7 : i32
    %c0_i32_23 = arith.constant 0 : i32
    %37 = tpu.memref_slice %arg4[%c7_i32_22, %c0_i32_23] : memref<24x32xf32, #tpu.memory_space<vmem>> -> memref<1x32xf32, #tpu.memory_space<vmem>>
    %38 = tpu.memref_slice %arg5[%c7_i32] : memref<24x!tpu.dma_semaphore, #tpu.memory_space<semaphore_mem>> -> memref<1x!tpu.dma_semaphore, #tpu.memory_space<semaphore_mem>>
    %39 = tpu.memref_squeeze %38 : memref<1x!tpu.dma_semaphore, #tpu.memory_space<semaphore_mem>> -> memref<!tpu.dma_semaphore, #tpu.memory_space<semaphore_mem>>
    tpu.enqueue_dma source(%36 : memref<1x32xf32, #tpu.memory_space<any>>) target(%37 : memref<1x32xf32, #tpu.memory_space<vmem>>) target_semaphore(%39 : memref<!tpu.dma_semaphore, #tpu.memory_space<semaphore_mem>>)
    %c8 = arith.constant 8 : index
    %40 = memref.load %arg1[%c8] : memref<24xi32, #tpu.memory_space<smem>>
    %c8_i32 = arith.constant 8 : i32
    %c0_i32_24 = arith.constant 0 : i32
    %41 = tpu.memref_slice %arg2[%40, %c0_i32_24] : memref<64x32xf32, #tpu.memory_space<any>> -> memref<1x32xf32, #tpu.memory_space<any>>
    %c8_i32_25 = arith.constant 8 : i32
    %c0_i32_26 = arith.constant 0 : i32
    %42 = tpu.memref_slice %arg4[%c8_i32_25, %c0_i32_26] : memref<24x32xf32, #tpu.memory_space<vmem>> -> memref<1x32xf32, #tpu.memory_space<vmem>>
    %43 = tpu.memref_slice %arg5[%c8_i32] : memref<24x!tpu.dma_semaphore, #tpu.memory_space<semaphore_mem>> -> memref<1x!tpu.dma_semaphore, #tpu.memory_space<semaphore_mem>>
    %44 = tpu.memref_squeeze %43 : memref<1x!tpu.dma_semaphore, #tpu.memory_space<semaphore_mem>> -> memref<!tpu.dma_semaphore, #tpu.memory_space<semaphore_mem>>
    tpu.enqueue_dma source(%41 : memref<1x32xf32, #tpu.memory_space<any>>) target(%42 : memref<1x32xf32, #tpu.memory_space<vmem>>) target_semaphore(%44 : memref<!tpu.dma_semaphore, #tpu.memory_space<semaphore_mem>>)
    %c9 = arith.constant 9 : index
    %45 = memref.load %arg1[%c9] : memref<24xi32, #tpu.memory_space<smem>>
    %c9_i32 = arith.constant 9 : i32
    %c0_i32_27 = arith.constant 0 : i32
    %46 = tpu.memref_slice %arg2[%45, %c0_i32_27] : memref<64x32xf32, #tpu.memory_space<any>> -> memref<1x32xf32, #tpu.memory_space<any>>
    %c9_i32_28 = arith.constant 9 : i32
    %c0_i32_29 = arith.constant 0 : i32
    %47 = tpu.memref_slice %arg4[%c9_i32_28, %c0_i32_29] : memref<24x32xf32, #tpu.memory_space<vmem>> -> memref<1x32xf32, #tpu.memory_space<vmem>>
    %48 = tpu.memref_slice %arg5[%c9_i32] : memref<24x!tpu.dma_semaphore, #tpu.memory_space<semaphore_mem>> -> memref<1x!tpu.dma_semaphore, #tpu.memory_space<semaphore_mem>>
    %49 = tpu.memref_squeeze %48 : memref<1x!tpu.dma_semaphore, #tpu.memory_space<semaphore_mem>> -> memref<!tpu.dma_semaphore, #tpu.memory_space<semaphore_mem>>
    tpu.enqueue_dma source(%46 : memref<1x32xf32, #tpu.memory_space<any>>) target(%47 : memref<1x32xf32, #tpu.memory_space<vmem>>) target_semaphore(%49 : memref<!tpu.dma_semaphore, #tpu.memory_space<semaphore_mem>>)
    %c10 = arith.constant 10 : index
    %50 = memref.load %arg1[%c10] : memref<24xi32, #tpu.memory_space<smem>>
    %c10_i32 = arith.constant 10 : i32
    %c0_i32_30 = arith.constant 0 : i32
    %51 = tpu.memref_slice %arg2[%50, %c0_i32_30] : memref<64x32xf32, #tpu.memory_space<any>> -> memref<1x32xf32, #tpu.memory_space<any>>
    %c10_i32_31 = arith.constant 10 : i32
    %c0_i32_32 = arith.constant 0 : i32
    %52 = tpu.memref_slice %arg4[%c10_i32_31, %c0_i32_32] : memref<24x32xf32, #tpu.memory_space<vmem>> -> memref<1x32xf32, #tpu.memory_space<vmem>>
    %53 = tpu.memref_slice %arg5[%c10_i32] : memref<24x!tpu.dma_semaphore, #tpu.memory_space<semaphore_mem>> -> memref<1x!tpu.dma_semaphore, #tpu.memory_space<semaphore_mem>>
    %54 = tpu.memref_squeeze %53 : memref<1x!tpu.dma_semaphore, #tpu.memory_space<semaphore_mem>> -> memref<!tpu.dma_semaphore, #tpu.memory_space<semaphore_mem>>
    tpu.enqueue_dma source(%51 : memref<1x32xf32, #tpu.memory_space<any>>) target(%52 : memref<1x32xf32, #tpu.memory_space<vmem>>) target_semaphore(%54 : memref<!tpu.dma_semaphore, #tpu.memory_space<semaphore_mem>>)
    %c11 = arith.constant 11 : index
    %55 = memref.load %arg1[%c11] : memref<24xi32, #tpu.memory_space<smem>>
    %c11_i32 = arith.constant 11 : i32
    %c0_i32_33 = arith.constant 0 : i32
    %56 = tpu.memref_slice %arg2[%55, %c0_i32_33] : memref<64x32xf32, #tpu.memory_space<any>> -> memref<1x32xf32, #tpu.memory_space<any>>
    %c11_i32_34 = arith.constant 11 : i32
    %c0_i32_35 = arith.constant 0 : i32
    %57 = tpu.memref_slice %arg4[%c11_i32_34, %c0_i32_35] : memref<24x32xf32, #tpu.memory_space<vmem>> -> memref<1x32xf32, #tpu.memory_space<vmem>>
    %58 = tpu.memref_slice %arg5[%c11_i32] : memref<24x!tpu.dma_semaphore, #tpu.memory_space<semaphore_mem>> -> memref<1x!tpu.dma_semaphore, #tpu.memory_space<semaphore_mem>>
    %59 = tpu.memref_squeeze %58 : memref<1x!tpu.dma_semaphore, #tpu.memory_space<semaphore_mem>> -> memref<!tpu.dma_semaphore, #tpu.memory_space<semaphore_mem>>
    tpu.enqueue_dma source(%56 : memref<1x32xf32, #tpu.memory_space<any>>) target(%57 : memref<1x32xf32, #tpu.memory_space<vmem>>) target_semaphore(%59 : memref<!tpu.dma_semaphore, #tpu.memory_space<semaphore_mem>>)
    %c12 = arith.constant 12 : index
    %60 = memref.load %arg1[%c12] : memref<24xi32, #tpu.memory_space<smem>>
    %c12_i32 = arith.constant 12 : i32
    %c0_i32_36 = arith.constant 0 : i32
    %61 = tpu.memref_slice %arg2[%60, %c0_i32_36] : memref<64x32xf32, #tpu.memory_space<any>> -> memref<1x32xf32, #tpu.memory_space<any>>
    %c12_i32_37 = arith.constant 12 : i32
    %c0_i32_38 = arith.constant 0 : i32
    %62 = tpu.memref_slice %arg4[%c12_i32_37, %c0_i32_38] : memref<24x32xf32, #tpu.memory_space<vmem>> -> memref<1x32xf32, #tpu.memory_space<vmem>>
    %63 = tpu.memref_slice %arg5[%c12_i32] : memref<24x!tpu.dma_semaphore, #tpu.memory_space<semaphore_mem>> -> memref<1x!tpu.dma_semaphore, #tpu.memory_space<semaphore_mem>>
    %64 = tpu.memref_squeeze %63 : memref<1x!tpu.dma_semaphore, #tpu.memory_space<semaphore_mem>> -> memref<!tpu.dma_semaphore, #tpu.memory_space<semaphore_mem>>
    tpu.enqueue_dma source(%61 : memref<1x32xf32, #tpu.memory_space<any>>) target(%62 : memref<1x32xf32, #tpu.memory_space<vmem>>) target_semaphore(%64 : memref<!tpu.dma_semaphore, #tpu.memory_space<semaphore_mem>>)
    %c13 = arith.constant 13 : index
    %65 = memref.load %arg1[%c13] : memref<24xi32, #tpu.memory_space<smem>>
    %c13_i32 = arith.constant 13 : i32
    %c0_i32_39 = arith.constant 0 : i32
    %66 = tpu.memref_slice %arg2[%65, %c0_i32_39] : memref<64x32xf32, #tpu.memory_space<any>> -> memref<1x32xf32, #tpu.memory_space<any>>
    %c13_i32_40 = arith.constant 13 : i32
    %c0_i32_41 = arith.constant 0 : i32
    %67 = tpu.memref_slice %arg4[%c13_i32_40, %c0_i32_41] : memref<24x32xf32, #tpu.memory_space<vmem>> -> memref<1x32xf32, #tpu.memory_space<vmem>>
    %68 = tpu.memref_slice %arg5[%c13_i32] : memref<24x!tpu.dma_semaphore, #tpu.memory_space<semaphore_mem>> -> memref<1x!tpu.dma_semaphore, #tpu.memory_space<semaphore_mem>>
    %69 = tpu.memref_squeeze %68 : memref<1x!tpu.dma_semaphore, #tpu.memory_space<semaphore_mem>> -> memref<!tpu.dma_semaphore, #tpu.memory_space<semaphore_mem>>
    tpu.enqueue_dma source(%66 : memref<1x32xf32, #tpu.memory_space<any>>) target(%67 : memref<1x32xf32, #tpu.memory_space<vmem>>) target_semaphore(%69 : memref<!tpu.dma_semaphore, #tpu.memory_space<semaphore_mem>>)
    %c14 = arith.constant 14 : index
    %70 = memref.load %arg1[%c14] : memref<24xi32, #tpu.memory_space<smem>>
    %c14_i32 = arith.constant 14 : i32
    %c0_i32_42 = arith.constant 0 : i32
    %71 = tpu.memref_slice %arg2[%70, %c0_i32_42] : memref<64x32xf32, #tpu.memory_space<any>> -> memref<1x32xf32, #tpu.memory_space<any>>
    %c14_i32_43 = arith.constant 14 : i32
    %c0_i32_44 = arith.constant 0 : i32
    %72 = tpu.memref_slice %arg4[%c14_i32_43, %c0_i32_44] : memref<24x32xf32, #tpu.memory_space<vmem>> -> memref<1x32xf32, #tpu.memory_space<vmem>>
    %73 = tpu.memref_slice %arg5[%c14_i32] : memref<24x!tpu.dma_semaphore, #tpu.memory_space<semaphore_mem>> -> memref<1x!tpu.dma_semaphore, #tpu.memory_space<semaphore_mem>>
    %74 = tpu.memref_squeeze %73 : memref<1x!tpu.dma_semaphore, #tpu.memory_space<semaphore_mem>> -> memref<!tpu.dma_semaphore, #tpu.memory_space<semaphore_mem>>
    tpu.enqueue_dma source(%71 : memref<1x32xf32, #tpu.memory_space<any>>) target(%72 : memref<1x32xf32, #tpu.memory_space<vmem>>) target_semaphore(%74 : memref<!tpu.dma_semaphore, #tpu.memory_space<semaphore_mem>>)
    %c15 = arith.constant 15 : index
    %75 = memref.load %arg1[%c15] : memref<24xi32, #tpu.memory_space<smem>>
    %c15_i32 = arith.constant 15 : i32
    %c0_i32_45 = arith.constant 0 : i32
    %76 = tpu.memref_slice %arg2[%75, %c0_i32_45] : memref<64x32xf32, #tpu.memory_space<any>> -> memref<1x32xf32, #tpu.memory_space<any>>
    %c15_i32_46 = arith.constant 15 : i32
    %c0_i32_47 = arith.constant 0 : i32
    %77 = tpu.memref_slice %arg4[%c15_i32_46, %c0_i32_47] : memref<24x32xf32, #tpu.memory_space<vmem>> -> memref<1x32xf32, #tpu.memory_space<vmem>>
    %78 = tpu.memref_slice %arg5[%c15_i32] : memref<24x!tpu.dma_semaphore, #tpu.memory_space<semaphore_mem>> -> memref<1x!tpu.dma_semaphore, #tpu.memory_space<semaphore_mem>>
    %79 = tpu.memref_squeeze %78 : memref<1x!tpu.dma_semaphore, #tpu.memory_space<semaphore_mem>> -> memref<!tpu.dma_semaphore, #tpu.memory_space<semaphore_mem>>
    tpu.enqueue_dma source(%76 : memref<1x32xf32, #tpu.memory_space<any>>) target(%77 : memref<1x32xf32, #tpu.memory_space<vmem>>) target_semaphore(%79 : memref<!tpu.dma_semaphore, #tpu.memory_space<semaphore_mem>>)
    %c16 = arith.constant 16 : index
    %80 = memref.load %arg1[%c16] : memref<24xi32, #tpu.memory_space<smem>>
    %c16_i32 = arith.constant 16 : i32
    %c0_i32_48 = arith.constant 0 : i32
    %81 = tpu.memref_slice %arg2[%80, %c0_i32_48] : memref<64x32xf32, #tpu.memory_space<any>> -> memref<1x32xf32, #tpu.memory_space<any>>
    %c16_i32_49 = arith.constant 16 : i32
    %c0_i32_50 = arith.constant 0 : i32
    %82 = tpu.memref_slice %arg4[%c16_i32_49, %c0_i32_50] : memref<24x32xf32, #tpu.memory_space<vmem>> -> memref<1x32xf32, #tpu.memory_space<vmem>>
    %83 = tpu.memref_slice %arg5[%c16_i32] : memref<24x!tpu.dma_semaphore, #tpu.memory_space<semaphore_mem>> -> memref<1x!tpu.dma_semaphore, #tpu.memory_space<semaphore_mem>>
    %84 = tpu.memref_squeeze %83 : memref<1x!tpu.dma_semaphore, #tpu.memory_space<semaphore_mem>> -> memref<!tpu.dma_semaphore, #tpu.memory_space<semaphore_mem>>
    tpu.enqueue_dma source(%81 : memref<1x32xf32, #tpu.memory_space<any>>) target(%82 : memref<1x32xf32, #tpu.memory_space<vmem>>) target_semaphore(%84 : memref<!tpu.dma_semaphore, #tpu.memory_space<semaphore_mem>>)
    %c17 = arith.constant 17 : index
    %85 = memref.load %arg1[%c17] : memref<24xi32, #tpu.memory_space<smem>>
    %c17_i32 = arith.constant 17 : i32
    %c0_i32_51 = arith.constant 0 : i32
    %86 = tpu.memref_slice %arg2[%85, %c0_i32_51] : memref<64x32xf32, #tpu.memory_space<any>> -> memref<1x32xf32, #tpu.memory_space<any>>
    %c17_i32_52 = arith.constant 17 : i32
    %c0_i32_53 = arith.constant 0 : i32
    %87 = tpu.memref_slice %arg4[%c17_i32_52, %c0_i32_53] : memref<24x32xf32, #tpu.memory_space<vmem>> -> memref<1x32xf32, #tpu.memory_space<vmem>>
    %88 = tpu.memref_slice %arg5[%c17_i32] : memref<24x!tpu.dma_semaphore, #tpu.memory_space<semaphore_mem>> -> memref<1x!tpu.dma_semaphore, #tpu.memory_space<semaphore_mem>>
    %89 = tpu.memref_squeeze %88 : memref<1x!tpu.dma_semaphore, #tpu.memory_space<semaphore_mem>> -> memref<!tpu.dma_semaphore, #tpu.memory_space<semaphore_mem>>
    tpu.enqueue_dma source(%86 : memref<1x32xf32, #tpu.memory_space<any>>) target(%87 : memref<1x32xf32, #tpu.memory_space<vmem>>) target_semaphore(%89 : memref<!tpu.dma_semaphore, #tpu.memory_space<semaphore_mem>>)
    %c18 = arith.constant 18 : index
    %90 = memref.load %arg1[%c18] : memref<24xi32, #tpu.memory_space<smem>>
    %c18_i32 = arith.constant 18 : i32
    %c0_i32_54 = arith.constant 0 : i32
    %91 = tpu.memref_slice %arg2[%90, %c0_i32_54] : memref<64x32xf32, #tpu.memory_space<any>> -> memref<1x32xf32, #tpu.memory_space<any>>
    %c18_i32_55 = arith.constant 18 : i32
    %c0_i32_56 = arith.constant 0 : i32
    %92 = tpu.memref_slice %arg4[%c18_i32_55, %c0_i32_56] : memref<24x32xf32, #tpu.memory_space<vmem>> -> memref<1x32xf32, #tpu.memory_space<vmem>>
    %93 = tpu.memref_slice %arg5[%c18_i32] : memref<24x!tpu.dma_semaphore, #tpu.memory_space<semaphore_mem>> -> memref<1x!tpu.dma_semaphore, #tpu.memory_space<semaphore_mem>>
    %94 = tpu.memref_squeeze %93 : memref<1x!tpu.dma_semaphore, #tpu.memory_space<semaphore_mem>> -> memref<!tpu.dma_semaphore, #tpu.memory_space<semaphore_mem>>
    tpu.enqueue_dma source(%91 : memref<1x32xf32, #tpu.memory_space<any>>) target(%92 : memref<1x32xf32, #tpu.memory_space<vmem>>) target_semaphore(%94 : memref<!tpu.dma_semaphore, #tpu.memory_space<semaphore_mem>>)
    %c19 = arith.constant 19 : index
    %95 = memref.load %arg1[%c19] : memref<24xi32, #tpu.memory_space<smem>>
    %c19_i32 = arith.constant 19 : i32
    %c0_i32_57 = arith.constant 0 : i32
    %96 = tpu.memref_slice %arg2[%95, %c0_i32_57] : memref<64x32xf32, #tpu.memory_space<any>> -> memref<1x32xf32, #tpu.memory_space<any>>
    %c19_i32_58 = arith.constant 19 : i32
    %c0_i32_59 = arith.constant 0 : i32
    %97 = tpu.memref_slice %arg4[%c19_i32_58, %c0_i32_59] : memref<24x32xf32, #tpu.memory_space<vmem>> -> memref<1x32xf32, #tpu.memory_space<vmem>>
    %98 = tpu.memref_slice %arg5[%c19_i32] : memref<24x!tpu.dma_semaphore, #tpu.memory_space<semaphore_mem>> -> memref<1x!tpu.dma_semaphore, #tpu.memory_space<semaphore_mem>>
    %99 = tpu.memref_squeeze %98 : memref<1x!tpu.dma_semaphore, #tpu.memory_space<semaphore_mem>> -> memref<!tpu.dma_semaphore, #tpu.memory_space<semaphore_mem>>
    tpu.enqueue_dma source(%96 : memref<1x32xf32, #tpu.memory_space<any>>) target(%97 : memref<1x32xf32, #tpu.memory_space<vmem>>) target_semaphore(%99 : memref<!tpu.dma_semaphore, #tpu.memory_space<semaphore_mem>>)
    %c20 = arith.constant 20 : index
    %100 = memref.load %arg1[%c20] : memref<24xi32, #tpu.memory_space<smem>>
    %c20_i32 = arith.constant 20 : i32
    %c0_i32_60 = arith.constant 0 : i32
    %101 = tpu.memref_slice %arg2[%100, %c0_i32_60] : memref<64x32xf32, #tpu.memory_space<any>> -> memref<1x32xf32, #tpu.memory_space<any>>
    %c20_i32_61 = arith.constant 20 : i32
    %c0_i32_62 = arith.constant 0 : i32
    %102 = tpu.memref_slice %arg4[%c20_i32_61, %c0_i32_62] : memref<24x32xf32, #tpu.memory_space<vmem>> -> memref<1x32xf32, #tpu.memory_space<vmem>>
    %103 = tpu.memref_slice %arg5[%c20_i32] : memref<24x!tpu.dma_semaphore, #tpu.memory_space<semaphore_mem>> -> memref<1x!tpu.dma_semaphore, #tpu.memory_space<semaphore_mem>>
    %104 = tpu.memref_squeeze %103 : memref<1x!tpu.dma_semaphore, #tpu.memory_space<semaphore_mem>> -> memref<!tpu.dma_semaphore, #tpu.memory_space<semaphore_mem>>
    tpu.enqueue_dma source(%101 : memref<1x32xf32, #tpu.memory_space<any>>) target(%102 : memref<1x32xf32, #tpu.memory_space<vmem>>) target_semaphore(%104 : memref<!tpu.dma_semaphore, #tpu.memory_space<semaphore_mem>>)
    %c21 = arith.constant 21 : index
    %105 = memref.load %arg1[%c21] : memref<24xi32, #tpu.memory_space<smem>>
    %c21_i32 = arith.constant 21 : i32
    %c0_i32_63 = arith.constant 0 : i32
    %106 = tpu.memref_slice %arg2[%105, %c0_i32_63] : memref<64x32xf32, #tpu.memory_space<any>> -> memref<1x32xf32, #tpu.memory_space<any>>
    %c21_i32_64 = arith.constant 21 : i32
    %c0_i32_65 = arith.constant 0 : i32
    %107 = tpu.memref_slice %arg4[%c21_i32_64, %c0_i32_65] : memref<24x32xf32, #tpu.memory_space<vmem>> -> memref<1x32xf32, #tpu.memory_space<vmem>>
    %108 = tpu.memref_slice %arg5[%c21_i32] : memref<24x!tpu.dma_semaphore, #tpu.memory_space<semaphore_mem>> -> memref<1x!tpu.dma_semaphore, #tpu.memory_space<semaphore_mem>>
    %109 = tpu.memref_squeeze %108 : memref<1x!tpu.dma_semaphore, #tpu.memory_space<semaphore_mem>> -> memref<!tpu.dma_semaphore, #tpu.memory_space<semaphore_mem>>
    tpu.enqueue_dma source(%106 : memref<1x32xf32, #tpu.memory_space<any>>) target(%107 : memref<1x32xf32, #tpu.memory_space<vmem>>) target_semaphore(%109 : memref<!tpu.dma_semaphore, #tpu.memory_space<semaphore_mem>>)
    %c22 = arith.constant 22 : index
    %110 = memref.load %arg1[%c22] : memref<24xi32, #tpu.memory_space<smem>>
    %c22_i32 = arith.constant 22 : i32
    %c0_i32_66 = arith.constant 0 : i32
    %111 = tpu.memref_slice %arg2[%110, %c0_i32_66] : memref<64x32xf32, #tpu.memory_space<any>> -> memref<1x32xf32, #tpu.memory_space<any>>
    %c22_i32_67 = arith.constant 22 : i32
    %c0_i32_68 = arith.constant 0 : i32
    %112 = tpu.memref_slice %arg4[%c22_i32_67, %c0_i32_68] : memref<24x32xf32, #tpu.memory_space<vmem>> -> memref<1x32xf32, #tpu.memory_space<vmem>>
    %113 = tpu.memref_slice %arg5[%c22_i32] : memref<24x!tpu.dma_semaphore, #tpu.memory_space<semaphore_mem>> -> memref<1x!tpu.dma_semaphore, #tpu.memory_space<semaphore_mem>>
    %114 = tpu.memref_squeeze %113 : memref<1x!tpu.dma_semaphore, #tpu.memory_space<semaphore_mem>> -> memref<!tpu.dma_semaphore, #tpu.memory_space<semaphore_mem>>
    tpu.enqueue_dma source(%111 : memref<1x32xf32, #tpu.memory_space<any>>) target(%112 : memref<1x32xf32, #tpu.memory_space<vmem>>) target_semaphore(%114 : memref<!tpu.dma_semaphore, #tpu.memory_space<semaphore_mem>>)
    %c23 = arith.constant 23 : index
    %115 = memref.load %arg1[%c23] : memref<24xi32, #tpu.memory_space<smem>>
    %c23_i32 = arith.constant 23 : i32
    %c0_i32_69 = arith.constant 0 : i32
    %116 = tpu.memref_slice %arg2[%115, %c0_i32_69] : memref<64x32xf32, #tpu.memory_space<any>> -> memref<1x32xf32, #tpu.memory_space<any>>
    %c23_i32_70 = arith.constant 23 : i32
    %c0_i32_71 = arith.constant 0 : i32
    %117 = tpu.memref_slice %arg4[%c23_i32_70, %c0_i32_71] : memref<24x32xf32, #tpu.memory_space<vmem>> -> memref<1x32xf32, #tpu.memory_space<vmem>>
    %118 = tpu.memref_slice %arg5[%c23_i32] : memref<24x!tpu.dma_semaphore, #tpu.memory_space<semaphore_mem>> -> memref<1x!tpu.dma_semaphore, #tpu.memory_space<semaphore_mem>>
    %119 = tpu.memref_squeeze %118 : memref<1x!tpu.dma_semaphore, #tpu.memory_space<semaphore_mem>> -> memref<!tpu.dma_semaphore, #tpu.memory_space<semaphore_mem>>
    tpu.enqueue_dma source(%116 : memref<1x32xf32, #tpu.memory_space<any>>) target(%117 : memref<1x32xf32, #tpu.memory_space<vmem>>) target_semaphore(%119 : memref<!tpu.dma_semaphore, #tpu.memory_space<semaphore_mem>>)
    %c0_i32_72 = arith.constant 0 : i32
    %c0_i32_73 = arith.constant 0 : i32
    %120 = tpu.memref_slice %arg2[%0, %c0_i32_73] : memref<64x32xf32, #tpu.memory_space<any>> -> memref<1x32xf32, #tpu.memory_space<any>>
    %c0_i32_74 = arith.constant 0 : i32
    %c0_i32_75 = arith.constant 0 : i32
    %121 = tpu.memref_slice %arg4[%c0_i32_74, %c0_i32_75] : memref<24x32xf32, #tpu.memory_space<vmem>> -> memref<1x32xf32, #tpu.memory_space<vmem>>
    %122 = tpu.memref_slice %arg5[%c0_i32_72] : memref<24x!tpu.dma_semaphore, #tpu.memory_space<semaphore_mem>> -> memref<1x!tpu.dma_semaphore, #tpu.memory_space<semaphore_mem>>
    %123 = tpu.memref_squeeze %122 : memref<1x!tpu.dma_semaphore, #tpu.memory_space<semaphore_mem>> -> memref<!tpu.dma_semaphore, #tpu.memory_space<semaphore_mem>>
    tpu.wait_dma2 semaphore(%123 : memref<!tpu.dma_semaphore, #tpu.memory_space<semaphore_mem>>) src(%120 : memref<1x32xf32, #tpu.memory_space<any>>) dst(%121 : memref<1x32xf32, #tpu.memory_space<vmem>>)
    %c1_i32_76 = arith.constant 1 : i32
    %c0_i32_77 = arith.constant 0 : i32
    %124 = tpu.memref_slice %arg2[%5, %c0_i32_77] : memref<64x32xf32, #tpu.memory_space<any>> -> memref<1x32xf32, #tpu.memory_space<any>>
    %c1_i32_78 = arith.constant 1 : i32
    %c0_i32_79 = arith.constant 0 : i32
    %125 = tpu.memref_slice %arg4[%c1_i32_78, %c0_i32_79] : memref<24x32xf32, #tpu.memory_space<vmem>> -> memref<1x32xf32, #tpu.memory_space<vmem>>
    %126 = tpu.memref_slice %arg5[%c1_i32_76] : memref<24x!tpu.dma_semaphore, #tpu.memory_space<semaphore_mem>> -> memref<1x!tpu.dma_semaphore, #tpu.memory_space<semaphore_mem>>
    %127 = tpu.memref_squeeze %126 : memref<1x!tpu.dma_semaphore, #tpu.memory_space<semaphore_mem>> -> memref<!tpu.dma_semaphore, #tpu.memory_space<semaphore_mem>>
    tpu.wait_dma2 semaphore(%127 : memref<!tpu.dma_semaphore, #tpu.memory_space<semaphore_mem>>) src(%124 : memref<1x32xf32, #tpu.memory_space<any>>) dst(%125 : memref<1x32xf32, #tpu.memory_space<vmem>>)
    %c2_i32_80 = arith.constant 2 : i32
    %c0_i32_81 = arith.constant 0 : i32
    %128 = tpu.memref_slice %arg2[%10, %c0_i32_81] : memref<64x32xf32, #tpu.memory_space<any>> -> memref<1x32xf32, #tpu.memory_space<any>>
    %c2_i32_82 = arith.constant 2 : i32
    %c0_i32_83 = arith.constant 0 : i32
    %129 = tpu.memref_slice %arg4[%c2_i32_82, %c0_i32_83] : memref<24x32xf32, #tpu.memory_space<vmem>> -> memref<1x32xf32, #tpu.memory_space<vmem>>
    %130 = tpu.memref_slice %arg5[%c2_i32_80] : memref<24x!tpu.dma_semaphore, #tpu.memory_space<semaphore_mem>> -> memref<1x!tpu.dma_semaphore, #tpu.memory_space<semaphore_mem>>
    %131 = tpu.memref_squeeze %130 : memref<1x!tpu.dma_semaphore, #tpu.memory_space<semaphore_mem>> -> memref<!tpu.dma_semaphore, #tpu.memory_space<semaphore_mem>>
    tpu.wait_dma2 semaphore(%131 : memref<!tpu.dma_semaphore, #tpu.memory_space<semaphore_mem>>) src(%128 : memref<1x32xf32, #tpu.memory_space<any>>) dst(%129 : memref<1x32xf32, #tpu.memory_space<vmem>>)
    %c3_i32_84 = arith.constant 3 : i32
    %c0_i32_85 = arith.constant 0 : i32
    %132 = tpu.memref_slice %arg2[%15, %c0_i32_85] : memref<64x32xf32, #tpu.memory_space<any>> -> memref<1x32xf32, #tpu.memory_space<any>>
    %c3_i32_86 = arith.constant 3 : i32
    %c0_i32_87 = arith.constant 0 : i32
    %133 = tpu.memref_slice %arg4[%c3_i32_86, %c0_i32_87] : memref<24x32xf32, #tpu.memory_space<vmem>> -> memref<1x32xf32, #tpu.memory_space<vmem>>
    %134 = tpu.memref_slice %arg5[%c3_i32_84] : memref<24x!tpu.dma_semaphore, #tpu.memory_space<semaphore_mem>> -> memref<1x!tpu.dma_semaphore, #tpu.memory_space<semaphore_mem>>
    %135 = tpu.memref_squeeze %134 : memref<1x!tpu.dma_semaphore, #tpu.memory_space<semaphore_mem>> -> memref<!tpu.dma_semaphore, #tpu.memory_space<semaphore_mem>>
    tpu.wait_dma2 semaphore(%135 : memref<!tpu.dma_semaphore, #tpu.memory_space<semaphore_mem>>) src(%132 : memref<1x32xf32, #tpu.memory_space<any>>) dst(%133 : memref<1x32xf32, #tpu.memory_space<vmem>>)
    %c4_i32_88 = arith.constant 4 : i32
    %c0_i32_89 = arith.constant 0 : i32
    %136 = tpu.memref_slice %arg2[%20, %c0_i32_89] : memref<64x32xf32, #tpu.memory_space<any>> -> memref<1x32xf32, #tpu.memory_space<any>>
    %c4_i32_90 = arith.constant 4 : i32
    %c0_i32_91 = arith.constant 0 : i32
    %137 = tpu.memref_slice %arg4[%c4_i32_90, %c0_i32_91] : memref<24x32xf32, #tpu.memory_space<vmem>> -> memref<1x32xf32, #tpu.memory_space<vmem>>
    %138 = tpu.memref_slice %arg5[%c4_i32_88] : memref<24x!tpu.dma_semaphore, #tpu.memory_space<semaphore_mem>> -> memref<1x!tpu.dma_semaphore, #tpu.memory_space<semaphore_mem>>
    %139 = tpu.memref_squeeze %138 : memref<1x!tpu.dma_semaphore, #tpu.memory_space<semaphore_mem>> -> memref<!tpu.dma_semaphore, #tpu.memory_space<semaphore_mem>>
    tpu.wait_dma2 semaphore(%139 : memref<!tpu.dma_semaphore, #tpu.memory_space<semaphore_mem>>) src(%136 : memref<1x32xf32, #tpu.memory_space<any>>) dst(%137 : memref<1x32xf32, #tpu.memory_space<vmem>>)
    %c5_i32_92 = arith.constant 5 : i32
    %c0_i32_93 = arith.constant 0 : i32
    %140 = tpu.memref_slice %arg2[%25, %c0_i32_93] : memref<64x32xf32, #tpu.memory_space<any>> -> memref<1x32xf32, #tpu.memory_space<any>>
    %c5_i32_94 = arith.constant 5 : i32
    %c0_i32_95 = arith.constant 0 : i32
    %141 = tpu.memref_slice %arg4[%c5_i32_94, %c0_i32_95] : memref<24x32xf32, #tpu.memory_space<vmem>> -> memref<1x32xf32, #tpu.memory_space<vmem>>
    %142 = tpu.memref_slice %arg5[%c5_i32_92] : memref<24x!tpu.dma_semaphore, #tpu.memory_space<semaphore_mem>> -> memref<1x!tpu.dma_semaphore, #tpu.memory_space<semaphore_mem>>
    %143 = tpu.memref_squeeze %142 : memref<1x!tpu.dma_semaphore, #tpu.memory_space<semaphore_mem>> -> memref<!tpu.dma_semaphore, #tpu.memory_space<semaphore_mem>>
    tpu.wait_dma2 semaphore(%143 : memref<!tpu.dma_semaphore, #tpu.memory_space<semaphore_mem>>) src(%140 : memref<1x32xf32, #tpu.memory_space<any>>) dst(%141 : memref<1x32xf32, #tpu.memory_space<vmem>>)
    %c6_i32_96 = arith.constant 6 : i32
    %c0_i32_97 = arith.constant 0 : i32
    %144 = tpu.memref_slice %arg2[%30, %c0_i32_97] : memref<64x32xf32, #tpu.memory_space<any>> -> memref<1x32xf32, #tpu.memory_space<any>>
    %c6_i32_98 = arith.constant 6 : i32
    %c0_i32_99 = arith.constant 0 : i32
    %145 = tpu.memref_slice %arg4[%c6_i32_98, %c0_i32_99] : memref<24x32xf32, #tpu.memory_space<vmem>> -> memref<1x32xf32, #tpu.memory_space<vmem>>
    %146 = tpu.memref_slice %arg5[%c6_i32_96] : memref<24x!tpu.dma_semaphore, #tpu.memory_space<semaphore_mem>> -> memref<1x!tpu.dma_semaphore, #tpu.memory_space<semaphore_mem>>
    %147 = tpu.memref_squeeze %146 : memref<1x!tpu.dma_semaphore, #tpu.memory_space<semaphore_mem>> -> memref<!tpu.dma_semaphore, #tpu.memory_space<semaphore_mem>>
    tpu.wait_dma2 semaphore(%147 : memref<!tpu.dma_semaphore, #tpu.memory_space<semaphore_mem>>) src(%144 : memref<1x32xf32, #tpu.memory_space<any>>) dst(%145 : memref<1x32xf32, #tpu.memory_space<vmem>>)
    %c7_i32_100 = arith.constant 7 : i32
    %c0_i32_101 = arith.constant 0 : i32
    %148 = tpu.memref_slice %arg2[%35, %c0_i32_101] : memref<64x32xf32, #tpu.memory_space<any>> -> memref<1x32xf32, #tpu.memory_space<any>>
    %c7_i32_102 = arith.constant 7 : i32
    %c0_i32_103 = arith.constant 0 : i32
    %149 = tpu.memref_slice %arg4[%c7_i32_102, %c0_i32_103] : memref<24x32xf32, #tpu.memory_space<vmem>> -> memref<1x32xf32, #tpu.memory_space<vmem>>
    %150 = tpu.memref_slice %arg5[%c7_i32_100] : memref<24x!tpu.dma_semaphore, #tpu.memory_space<semaphore_mem>> -> memref<1x!tpu.dma_semaphore, #tpu.memory_space<semaphore_mem>>
    %151 = tpu.memref_squeeze %150 : memref<1x!tpu.dma_semaphore, #tpu.memory_space<semaphore_mem>> -> memref<!tpu.dma_semaphore, #tpu.memory_space<semaphore_mem>>
    tpu.wait_dma2 semaphore(%151 : memref<!tpu.dma_semaphore, #tpu.memory_space<semaphore_mem>>) src(%148 : memref<1x32xf32, #tpu.memory_space<any>>) dst(%149 : memref<1x32xf32, #tpu.memory_space<vmem>>)
    %c8_i32_104 = arith.constant 8 : i32
    %c0_i32_105 = arith.constant 0 : i32
    %152 = tpu.memref_slice %arg2[%40, %c0_i32_105] : memref<64x32xf32, #tpu.memory_space<any>> -> memref<1x32xf32, #tpu.memory_space<any>>
    %c8_i32_106 = arith.constant 8 : i32
    %c0_i32_107 = arith.constant 0 : i32
    %153 = tpu.memref_slice %arg4[%c8_i32_106, %c0_i32_107] : memref<24x32xf32, #tpu.memory_space<vmem>> -> memref<1x32xf32, #tpu.memory_space<vmem>>
    %154 = tpu.memref_slice %arg5[%c8_i32_104] : memref<24x!tpu.dma_semaphore, #tpu.memory_space<semaphore_mem>> -> memref<1x!tpu.dma_semaphore, #tpu.memory_space<semaphore_mem>>
    %155 = tpu.memref_squeeze %154 : memref<1x!tpu.dma_semaphore, #tpu.memory_space<semaphore_mem>> -> memref<!tpu.dma_semaphore, #tpu.memory_space<semaphore_mem>>
    tpu.wait_dma2 semaphore(%155 : memref<!tpu.dma_semaphore, #tpu.memory_space<semaphore_mem>>) src(%152 : memref<1x32xf32, #tpu.memory_space<any>>) dst(%153 : memref<1x32xf32, #tpu.memory_space<vmem>>)
    %c9_i32_108 = arith.constant 9 : i32
    %c0_i32_109 = arith.constant 0 : i32
    %156 = tpu.memref_slice %arg2[%45, %c0_i32_109] : memref<64x32xf32, #tpu.memory_space<any>> -> memref<1x32xf32, #tpu.memory_space<any>>
    %c9_i32_110 = arith.constant 9 : i32
    %c0_i32_111 = arith.constant 0 : i32
    %157 = tpu.memref_slice %arg4[%c9_i32_110, %c0_i32_111] : memref<24x32xf32, #tpu.memory_space<vmem>> -> memref<1x32xf32, #tpu.memory_space<vmem>>
    %158 = tpu.memref_slice %arg5[%c9_i32_108] : memref<24x!tpu.dma_semaphore, #tpu.memory_space<semaphore_mem>> -> memref<1x!tpu.dma_semaphore, #tpu.memory_space<semaphore_mem>>
    %159 = tpu.memref_squeeze %158 : memref<1x!tpu.dma_semaphore, #tpu.memory_space<semaphore_mem>> -> memref<!tpu.dma_semaphore, #tpu.memory_space<semaphore_mem>>
    tpu.wait_dma2 semaphore(%159 : memref<!tpu.dma_semaphore, #tpu.memory_space<semaphore_mem>>) src(%156 : memref<1x32xf32, #tpu.memory_space<any>>) dst(%157 : memref<1x32xf32, #tpu.memory_space<vmem>>)
    %c10_i32_112 = arith.constant 10 : i32
    %c0_i32_113 = arith.constant 0 : i32
    %160 = tpu.memref_slice %arg2[%50, %c0_i32_113] : memref<64x32xf32, #tpu.memory_space<any>> -> memref<1x32xf32, #tpu.memory_space<any>>
    %c10_i32_114 = arith.constant 10 : i32
    %c0_i32_115 = arith.constant 0 : i32
    %161 = tpu.memref_slice %arg4[%c10_i32_114, %c0_i32_115] : memref<24x32xf32, #tpu.memory_space<vmem>> -> memref<1x32xf32, #tpu.memory_space<vmem>>
    %162 = tpu.memref_slice %arg5[%c10_i32_112] : memref<24x!tpu.dma_semaphore, #tpu.memory_space<semaphore_mem>> -> memref<1x!tpu.dma_semaphore, #tpu.memory_space<semaphore_mem>>
    %163 = tpu.memref_squeeze %162 : memref<1x!tpu.dma_semaphore, #tpu.memory_space<semaphore_mem>> -> memref<!tpu.dma_semaphore, #tpu.memory_space<semaphore_mem>>
    tpu.wait_dma2 semaphore(%163 : memref<!tpu.dma_semaphore, #tpu.memory_space<semaphore_mem>>) src(%160 : memref<1x32xf32, #tpu.memory_space<any>>) dst(%161 : memref<1x32xf32, #tpu.memory_space<vmem>>)
    %c11_i32_116 = arith.constant 11 : i32
    %c0_i32_117 = arith.constant 0 : i32
    %164 = tpu.memref_slice %arg2[%55, %c0_i32_117] : memref<64x32xf32, #tpu.memory_space<any>> -> memref<1x32xf32, #tpu.memory_space<any>>
    %c11_i32_118 = arith.constant 11 : i32
    %c0_i32_119 = arith.constant 0 : i32
    %165 = tpu.memref_slice %arg4[%c11_i32_118, %c0_i32_119] : memref<24x32xf32, #tpu.memory_space<vmem>> -> memref<1x32xf32, #tpu.memory_space<vmem>>
    %166 = tpu.memref_slice %arg5[%c11_i32_116] : memref<24x!tpu.dma_semaphore, #tpu.memory_space<semaphore_mem>> -> memref<1x!tpu.dma_semaphore, #tpu.memory_space<semaphore_mem>>
    %167 = tpu.memref_squeeze %166 : memref<1x!tpu.dma_semaphore, #tpu.memory_space<semaphore_mem>> -> memref<!tpu.dma_semaphore, #tpu.memory_space<semaphore_mem>>
    tpu.wait_dma2 semaphore(%167 : memref<!tpu.dma_semaphore, #tpu.memory_space<semaphore_mem>>) src(%164 : memref<1x32xf32, #tpu.memory_space<any>>) dst(%165 : memref<1x32xf32, #tpu.memory_space<vmem>>)
    %c12_i32_120 = arith.constant 12 : i32
    %c0_i32_121 = arith.constant 0 : i32
    %168 = tpu.memref_slice %arg2[%60, %c0_i32_121] : memref<64x32xf32, #tpu.memory_space<any>> -> memref<1x32xf32, #tpu.memory_space<any>>
    %c12_i32_122 = arith.constant 12 : i32
    %c0_i32_123 = arith.constant 0 : i32
    %169 = tpu.memref_slice %arg4[%c12_i32_122, %c0_i32_123] : memref<24x32xf32, #tpu.memory_space<vmem>> -> memref<1x32xf32, #tpu.memory_space<vmem>>
    %170 = tpu.memref_slice %arg5[%c12_i32_120] : memref<24x!tpu.dma_semaphore, #tpu.memory_space<semaphore_mem>> -> memref<1x!tpu.dma_semaphore, #tpu.memory_space<semaphore_mem>>
    %171 = tpu.memref_squeeze %170 : memref<1x!tpu.dma_semaphore, #tpu.memory_space<semaphore_mem>> -> memref<!tpu.dma_semaphore, #tpu.memory_space<semaphore_mem>>
    tpu.wait_dma2 semaphore(%171 : memref<!tpu.dma_semaphore, #tpu.memory_space<semaphore_mem>>) src(%168 : memref<1x32xf32, #tpu.memory_space<any>>) dst(%169 : memref<1x32xf32, #tpu.memory_space<vmem>>)
    %c13_i32_124 = arith.constant 13 : i32
    %c0_i32_125 = arith.constant 0 : i32
    %172 = tpu.memref_slice %arg2[%65, %c0_i32_125] : memref<64x32xf32, #tpu.memory_space<any>> -> memref<1x32xf32, #tpu.memory_space<any>>
    %c13_i32_126 = arith.constant 13 : i32
    %c0_i32_127 = arith.constant 0 : i32
    %173 = tpu.memref_slice %arg4[%c13_i32_126, %c0_i32_127] : memref<24x32xf32, #tpu.memory_space<vmem>> -> memref<1x32xf32, #tpu.memory_space<vmem>>
    %174 = tpu.memref_slice %arg5[%c13_i32_124] : memref<24x!tpu.dma_semaphore, #tpu.memory_space<semaphore_mem>> -> memref<1x!tpu.dma_semaphore, #tpu.memory_space<semaphore_mem>>
    %175 = tpu.memref_squeeze %174 : memref<1x!tpu.dma_semaphore, #tpu.memory_space<semaphore_mem>> -> memref<!tpu.dma_semaphore, #tpu.memory_space<semaphore_mem>>
    tpu.wait_dma2 semaphore(%175 : memref<!tpu.dma_semaphore, #tpu.memory_space<semaphore_mem>>) src(%172 : memref<1x32xf32, #tpu.memory_space<any>>) dst(%173 : memref<1x32xf32, #tpu.memory_space<vmem>>)
    %c14_i32_128 = arith.constant 14 : i32
    %c0_i32_129 = arith.constant 0 : i32
    %176 = tpu.memref_slice %arg2[%70, %c0_i32_129] : memref<64x32xf32, #tpu.memory_space<any>> -> memref<1x32xf32, #tpu.memory_space<any>>
    %c14_i32_130 = arith.constant 14 : i32
    %c0_i32_131 = arith.constant 0 : i32
    %177 = tpu.memref_slice %arg4[%c14_i32_130, %c0_i32_131] : memref<24x32xf32, #tpu.memory_space<vmem>> -> memref<1x32xf32, #tpu.memory_space<vmem>>
    %178 = tpu.memref_slice %arg5[%c14_i32_128] : memref<24x!tpu.dma_semaphore, #tpu.memory_space<semaphore_mem>> -> memref<1x!tpu.dma_semaphore, #tpu.memory_space<semaphore_mem>>
    %179 = tpu.memref_squeeze %178 : memref<1x!tpu.dma_semaphore, #tpu.memory_space<semaphore_mem>> -> memref<!tpu.dma_semaphore, #tpu.memory_space<semaphore_mem>>
    tpu.wait_dma2 semaphore(%179 : memref<!tpu.dma_semaphore, #tpu.memory_space<semaphore_mem>>) src(%176 : memref<1x32xf32, #tpu.memory_space<any>>) dst(%177 : memref<1x32xf32, #tpu.memory_space<vmem>>)
    %c15_i32_132 = arith.constant 15 : i32
    %c0_i32_133 = arith.constant 0 : i32
    %180 = tpu.memref_slice %arg2[%75, %c0_i32_133] : memref<64x32xf32, #tpu.memory_space<any>> -> memref<1x32xf32, #tpu.memory_space<any>>
    %c15_i32_134 = arith.constant 15 : i32
    %c0_i32_135 = arith.constant 0 : i32
    %181 = tpu.memref_slice %arg4[%c15_i32_134, %c0_i32_135] : memref<24x32xf32, #tpu.memory_space<vmem>> -> memref<1x32xf32, #tpu.memory_space<vmem>>
    %182 = tpu.memref_slice %arg5[%c15_i32_132] : memref<24x!tpu.dma_semaphore, #tpu.memory_space<semaphore_mem>> -> memref<1x!tpu.dma_semaphore, #tpu.memory_space<semaphore_mem>>
    %183 = tpu.memref_squeeze %182 : memref<1x!tpu.dma_semaphore, #tpu.memory_space<semaphore_mem>> -> memref<!tpu.dma_semaphore, #tpu.memory_space<semaphore_mem>>
    tpu.wait_dma2 semaphore(%183 : memref<!tpu.dma_semaphore, #tpu.memory_space<semaphore_mem>>) src(%180 : memref<1x32xf32, #tpu.memory_space<any>>) dst(%181 : memref<1x32xf32, #tpu.memory_space<vmem>>)
    %c16_i32_136 = arith.constant 16 : i32
    %c0_i32_137 = arith.constant 0 : i32
    %184 = tpu.memref_slice %arg2[%80, %c0_i32_137] : memref<64x32xf32, #tpu.memory_space<any>> -> memref<1x32xf32, #tpu.memory_space<any>>
    %c16_i32_138 = arith.constant 16 : i32
    %c0_i32_139 = arith.constant 0 : i32
    %185 = tpu.memref_slice %arg4[%c16_i32_138, %c0_i32_139] : memref<24x32xf32, #tpu.memory_space<vmem>> -> memref<1x32xf32, #tpu.memory_space<vmem>>
    %186 = tpu.memref_slice %arg5[%c16_i32_136] : memref<24x!tpu.dma_semaphore, #tpu.memory_space<semaphore_mem>> -> memref<1x!tpu.dma_semaphore, #tpu.memory_space<semaphore_mem>>
    %187 = tpu.memref_squeeze %186 : memref<1x!tpu.dma_semaphore, #tpu.memory_space<semaphore_mem>> -> memref<!tpu.dma_semaphore, #tpu.memory_space<semaphore_mem>>
    tpu.wait_dma2 semaphore(%187 : memref<!tpu.dma_semaphore, #tpu.memory_space<semaphore_mem>>) src(%184 : memref<1x32xf32, #tpu.memory_space<any>>) dst(%185 : memref<1x32xf32, #tpu.memory_space<vmem>>)
    %c17_i32_140 = arith.constant 17 : i32
    %c0_i32_141 = arith.constant 0 : i32
    %188 = tpu.memref_slice %arg2[%85, %c0_i32_141] : memref<64x32xf32, #tpu.memory_space<any>> -> memref<1x32xf32, #tpu.memory_space<any>>
    %c17_i32_142 = arith.constant 17 : i32
    %c0_i32_143 = arith.constant 0 : i32
    %189 = tpu.memref_slice %arg4[%c17_i32_142, %c0_i32_143] : memref<24x32xf32, #tpu.memory_space<vmem>> -> memref<1x32xf32, #tpu.memory_space<vmem>>
    %190 = tpu.memref_slice %arg5[%c17_i32_140] : memref<24x!tpu.dma_semaphore, #tpu.memory_space<semaphore_mem>> -> memref<1x!tpu.dma_semaphore, #tpu.memory_space<semaphore_mem>>
    %191 = tpu.memref_squeeze %190 : memref<1x!tpu.dma_semaphore, #tpu.memory_space<semaphore_mem>> -> memref<!tpu.dma_semaphore, #tpu.memory_space<semaphore_mem>>
    tpu.wait_dma2 semaphore(%191 : memref<!tpu.dma_semaphore, #tpu.memory_space<semaphore_mem>>) src(%188 : memref<1x32xf32, #tpu.memory_space<any>>) dst(%189 : memref<1x32xf32, #tpu.memory_space<vmem>>)
    %c18_i32_144 = arith.constant 18 : i32
    %c0_i32_145 = arith.constant 0 : i32
    %192 = tpu.memref_slice %arg2[%90, %c0_i32_145] : memref<64x32xf32, #tpu.memory_space<any>> -> memref<1x32xf32, #tpu.memory_space<any>>
    %c18_i32_146 = arith.constant 18 : i32
    %c0_i32_147 = arith.constant 0 : i32
    %193 = tpu.memref_slice %arg4[%c18_i32_146, %c0_i32_147] : memref<24x32xf32, #tpu.memory_space<vmem>> -> memref<1x32xf32, #tpu.memory_space<vmem>>
    %194 = tpu.memref_slice %arg5[%c18_i32_144] : memref<24x!tpu.dma_semaphore, #tpu.memory_space<semaphore_mem>> -> memref<1x!tpu.dma_semaphore, #tpu.memory_space<semaphore_mem>>
    %195 = tpu.memref_squeeze %194 : memref<1x!tpu.dma_semaphore, #tpu.memory_space<semaphore_mem>> -> memref<!tpu.dma_semaphore, #tpu.memory_space<semaphore_mem>>
    tpu.wait_dma2 semaphore(%195 : memref<!tpu.dma_semaphore, #tpu.memory_space<semaphore_mem>>) src(%192 : memref<1x32xf32, #tpu.memory_space<any>>) dst(%193 : memref<1x32xf32, #tpu.memory_space<vmem>>)
    %c19_i32_148 = arith.constant 19 : i32
    %c0_i32_149 = arith.constant 0 : i32
    %196 = tpu.memref_slice %arg2[%95, %c0_i32_149] : memref<64x32xf32, #tpu.memory_space<any>> -> memref<1x32xf32, #tpu.memory_space<any>>
    %c19_i32_150 = arith.constant 19 : i32
    %c0_i32_151 = arith.constant 0 : i32
    %197 = tpu.memref_slice %arg4[%c19_i32_150, %c0_i32_151] : memref<24x32xf32, #tpu.memory_space<vmem>> -> memref<1x32xf32, #tpu.memory_space<vmem>>
    %198 = tpu.memref_slice %arg5[%c19_i32_148] : memref<24x!tpu.dma_semaphore, #tpu.memory_space<semaphore_mem>> -> memref<1x!tpu.dma_semaphore, #tpu.memory_space<semaphore_mem>>
    %199 = tpu.memref_squeeze %198 : memref<1x!tpu.dma_semaphore, #tpu.memory_space<semaphore_mem>> -> memref<!tpu.dma_semaphore, #tpu.memory_space<semaphore_mem>>
    tpu.wait_dma2 semaphore(%199 : memref<!tpu.dma_semaphore, #tpu.memory_space<semaphore_mem>>) src(%196 : memref<1x32xf32, #tpu.memory_space<any>>) dst(%197 : memref<1x32xf32, #tpu.memory_space<vmem>>)
    %c20_i32_152 = arith.constant 20 : i32
    %c0_i32_153 = arith.constant 0 : i32
    %200 = tpu.memref_slice %arg2[%100, %c0_i32_153] : memref<64x32xf32, #tpu.memory_space<any>> -> memref<1x32xf32, #tpu.memory_space<any>>
    %c20_i32_154 = arith.constant 20 : i32
    %c0_i32_155 = arith.constant 0 : i32
    %201 = tpu.memref_slice %arg4[%c20_i32_154, %c0_i32_155] : memref<24x32xf32, #tpu.memory_space<vmem>> -> memref<1x32xf32, #tpu.memory_space<vmem>>
    %202 = tpu.memref_slice %arg5[%c20_i32_152] : memref<24x!tpu.dma_semaphore, #tpu.memory_space<semaphore_mem>> -> memref<1x!tpu.dma_semaphore, #tpu.memory_space<semaphore_mem>>
    %203 = tpu.memref_squeeze %202 : memref<1x!tpu.dma_semaphore, #tpu.memory_space<semaphore_mem>> -> memref<!tpu.dma_semaphore, #tpu.memory_space<semaphore_mem>>
    tpu.wait_dma2 semaphore(%203 : memref<!tpu.dma_semaphore, #tpu.memory_space<semaphore_mem>>) src(%200 : memref<1x32xf32, #tpu.memory_space<any>>) dst(%201 : memref<1x32xf32, #tpu.memory_space<vmem>>)
    %c21_i32_156 = arith.constant 21 : i32
    %c0_i32_157 = arith.constant 0 : i32
    %204 = tpu.memref_slice %arg2[%105, %c0_i32_157] : memref<64x32xf32, #tpu.memory_space<any>> -> memref<1x32xf32, #tpu.memory_space<any>>
    %c21_i32_158 = arith.constant 21 : i32
    %c0_i32_159 = arith.constant 0 : i32
    %205 = tpu.memref_slice %arg4[%c21_i32_158, %c0_i32_159] : memref<24x32xf32, #tpu.memory_space<vmem>> -> memref<1x32xf32, #tpu.memory_space<vmem>>
    %206 = tpu.memref_slice %arg5[%c21_i32_156] : memref<24x!tpu.dma_semaphore, #tpu.memory_space<semaphore_mem>> -> memref<1x!tpu.dma_semaphore, #tpu.memory_space<semaphore_mem>>
    %207 = tpu.memref_squeeze %206 : memref<1x!tpu.dma_semaphore, #tpu.memory_space<semaphore_mem>> -> memref<!tpu.dma_semaphore, #tpu.memory_space<semaphore_mem>>
    tpu.wait_dma2 semaphore(%207 : memref<!tpu.dma_semaphore, #tpu.memory_space<semaphore_mem>>) src(%204 : memref<1x32xf32, #tpu.memory_space<any>>) dst(%205 : memref<1x32xf32, #tpu.memory_space<vmem>>)
    %c22_i32_160 = arith.constant 22 : i32
    %c0_i32_161 = arith.constant 0 : i32
    %208 = tpu.memref_slice %arg2[%110, %c0_i32_161] : memref<64x32xf32, #tpu.memory_space<any>> -> memref<1x32xf32, #tpu.memory_space<any>>
    %c22_i32_162 = arith.constant 22 : i32
    %c0_i32_163 = arith.constant 0 : i32
    %209 = tpu.memref_slice %arg4[%c22_i32_162, %c0_i32_163] : memref<24x32xf32, #tpu.memory_space<vmem>> -> memref<1x32xf32, #tpu.memory_space<vmem>>
    %210 = tpu.memref_slice %arg5[%c22_i32_160] : memref<24x!tpu.dma_semaphore, #tpu.memory_space<semaphore_mem>> -> memref<1x!tpu.dma_semaphore, #tpu.memory_space<semaphore_mem>>
    %211 = tpu.memref_squeeze %210 : memref<1x!tpu.dma_semaphore, #tpu.memory_space<semaphore_mem>> -> memref<!tpu.dma_semaphore, #tpu.memory_space<semaphore_mem>>
    tpu.wait_dma2 semaphore(%211 : memref<!tpu.dma_semaphore, #tpu.memory_space<semaphore_mem>>) src(%208 : memref<1x32xf32, #tpu.memory_space<any>>) dst(%209 : memref<1x32xf32, #tpu.memory_space<vmem>>)
    %c23_i32_164 = arith.constant 23 : i32
    %c0_i32_165 = arith.constant 0 : i32
    %212 = tpu.memref_slice %arg2[%115, %c0_i32_165] : memref<64x32xf32, #tpu.memory_space<any>> -> memref<1x32xf32, #tpu.memory_space<any>>
    %c23_i32_166 = arith.constant 23 : i32
    %c0_i32_167 = arith.constant 0 : i32
    %213 = tpu.memref_slice %arg4[%c23_i32_166, %c0_i32_167] : memref<24x32xf32, #tpu.memory_space<vmem>> -> memref<1x32xf32, #tpu.memory_space<vmem>>
    %214 = tpu.memref_slice %arg5[%c23_i32_164] : memref<24x!tpu.dma_semaphore, #tpu.memory_space<semaphore_mem>> -> memref<1x!tpu.dma_semaphore, #tpu.memory_space<semaphore_mem>>
    %215 = tpu.memref_squeeze %214 : memref<1x!tpu.dma_semaphore, #tpu.memory_space<semaphore_mem>> -> memref<!tpu.dma_semaphore, #tpu.memory_space<semaphore_mem>>
    tpu.wait_dma2 semaphore(%215 : memref<!tpu.dma_semaphore, #tpu.memory_space<semaphore_mem>>) src(%212 : memref<1x32xf32, #tpu.memory_space<any>>) dst(%213 : memref<1x32xf32, #tpu.memory_space<vmem>>)
    %c0_168 = arith.constant 0 : index
    %c0_169 = arith.constant 0 : index
    %216 = vector.load %arg4[%c0_168, %c0_169] : memref<24x32xf32, #tpu.memory_space<vmem>>, vector<24x32xf32>
    %217 = arith.mulf %216, %216 : vector<24x32xf32>
    %cst = arith.constant dense<0.000000e+00> : vector<24xf32>
    %218 = vector.multi_reduction <add>, %217, %cst [1] : vector<24x32xf32> to vector<24xf32>
    %219 = vector.shape_cast %218 : vector<24xf32> to vector<24x1xf32>
    %220 = math.sqrt %219 : vector<24x1xf32>
    %cst_170 = arith.constant 1.000000e+00 : f32
    %221 = vector.broadcast %cst_170 : f32 to vector<24x1xf32>
    %222 = arith.cmpf ogt, %220, %221 : vector<24x1xf32>
    %cst_171 = arith.constant 1.000000e-07 : f32
    %223 = vector.broadcast %cst_171 : f32 to vector<24x1xf32>
    %224 = arith.addf %220, %223 : vector<24x1xf32>
    %cst_172 = arith.constant 1.000000e+00 : f32
    %225 = vector.broadcast %cst_172 : f32 to vector<24x1xf32>
    %226 = arith.divf %225, %224 : vector<24x1xf32>
    %cst_173 = arith.constant 1.000000e+00 : f32
    %227 = vector.broadcast %cst_173 : f32 to vector<24x1xf32>
    %228 = arith.select %222, %226, %227 : vector<24x1xi1>, vector<24x1xf32>
    %229 = vector.broadcast %228 : vector<24x1xf32> to vector<24x32xf32>
    %230 = arith.mulf %216, %229 : vector<24x32xf32>
    %231 = tpu.iota {dimensions = array<i32: 1>} : vector<8x24xi32>
    %232 = tpu.iota {dimensions = array<i32: 0>} : vector<8x24xi32>
    %c6_i32_174 = arith.constant 6 : i32
    %233 = vector.broadcast %c6_i32_174 : i32 to vector<8x24xi32>
    %234 = arith.muli %232, %233 : vector<8x24xi32>
    %235 = arith.cmpi sge, %231, %234 : vector<8x24xi32>
    %c6_i32_175 = arith.constant 6 : i32
    %236 = vector.broadcast %c6_i32_175 : i32 to vector<8x24xi32>
    %237 = arith.addi %234, %236 : vector<8x24xi32>
    %238 = arith.cmpi slt, %231, %237 : vector<8x24xi32>
    %239 = arith.andi %235, %238 : vector<8x24xi1>
    %cst_176 = arith.constant 0.166666672 : f32
    %cst_177 = arith.constant 0.000000e+00 : f32
    %240 = vector.broadcast %cst_176 : f32 to vector<8x24xf32>
    %241 = vector.broadcast %cst_177 : f32 to vector<8x24xf32>
    %242 = arith.select %239, %240, %241 : vector<8x24xi1>, vector<8x24xf32>
    %cst_178 = arith.constant dense<0.000000e+00> : vector<8x32xf32>
    %243 = tpu.matmul %242, %230, %cst_178 {dimension_numbers = #tpu.dot_dimension_numbers<[1], [0], [0], [1], [0, 0, 1, 1], [], []>} : vector<8x24xf32>, vector<24x32xf32>, vector<8x32xf32> -> vector<8x32xf32>
    %c0_179 = arith.constant 0 : index
    %c0_180 = arith.constant 0 : index
    %244 = vector.load %arg3[%c0_179, %c0_180] : memref<8x32xf32, #tpu.memory_space<vmem>>, vector<8x32xf32>
    tpu.vector_store %arg3[%c0_179, %c0_180], %243 {strides = array<i32>} : memref<8x32xf32, #tpu.memory_space<vmem>>, vector<8x32xf32>,
    return
  }
  func.func @transform_1(%arg0: i32, %arg1: memref<24xi32, #tpu.memory_space<smem>>) -> (i32, i32) {
    %c0_i32 = arith.constant 0 : i32
    %c0_i32_0 = arith.constant 0 : i32
    %c0_i32_1 = arith.constant 0 : i32
    return %c0_i32, %c0_i32_0 : i32, i32
  }
}

</mosaic_0001>

<llo_original>
// kernel: tpu_custom_call.1
$region0: #{tpu_custom_call.1}
  #allocation0 [shape = 'u32[]', space=smem, size = 0x4, offset = 0x4, fixed_abs, tag = 'smem constant byte address 0x4 - core index']
  #allocation1 [shape = 'u32[144,128]{1,0:T(1,128)}', space=vmem, size = 0x12000, scoped, tag = 'internal scratch']
  #allocation2 [shape = 'f32[24,32]{1,0:T(8,128)}', space=vmem, size = 0x3000, scoped, tag = 'scratch operand']
  #allocation3 [shape = 's32[24]{0}', space=sflag, size = 0x60, scoped, tag = 'scratch operand']
  #allocation4 [shape = 's32[1]{0}', space=sflag, size = 0x4, scoped, tag = 'scoped memory for tpu_custom_call.1']
  #allocation5 [shape = 'u8[512]{0}', space=smem, size = 0x200, scoped, tag = 'prefetched SMEM operand 0']
  #allocation8 [shape = 's32[]', space=sflag, size = 0x4, offset = 0, fixed_abs, tag = 'sflag constant byte address 0x0 - dummy sync flag']
  #allocation9 [shape = 's32[]', space=sflag, size = 0x4, offset = 0, fixed_abs, tag = 'sflag constant byte address 0x0 - dummy sync flag']
  #allocation10 [shape = 's32[]', space=sflag, size = 0x4, offset = 0, fixed_abs, tag = 'sflag constant byte address 0x0 - dummy sync flag']
  #allocation11 [shape = 's32[]', space=sflag, size = 0x4, offset = 0, fixed_abs, tag = 'sflag constant byte address 0x0 - dummy sync flag']
  #allocation12 [shape = 's32[]', space=sflag, size = 0x4, offset = 0, fixed_abs, tag = 'sflag constant byte address 0x0 - dummy sync flag']
  #allocation13 [shape = 's32[]', space=sflag, size = 0x4, offset = 0, fixed_abs, tag = 'sflag constant byte address 0x0 - dummy sync flag']
  #allocation14 [shape = 's32[]', space=sflag, size = 0x4, offset = 0, fixed_abs, tag = 'sflag constant byte address 0x0 - dummy sync flag']
  #allocation15 [shape = 's32[]', space=sflag, size = 0x4, offset = 0, fixed_abs, tag = 'sflag constant byte address 0x0 - dummy sync flag']
  #allocation16 [shape = 's32[]', space=sflag, size = 0x4, offset = 0, fixed_abs, tag = 'sflag constant byte address 0x0 - dummy sync flag']
  #allocation17 [shape = 's32[]', space=sflag, size = 0x4, offset = 0, fixed_abs, tag = 'sflag constant byte address 0x0 - dummy sync flag']
  #allocation18 [shape = 's32[]', space=sflag, size = 0x4, offset = 0, fixed_abs, tag = 'sflag constant byte address 0x0 - dummy sync flag']
  #allocation19 [shape = 's32[]', space=sflag, size = 0x4, offset = 0, fixed_abs, tag = 'sflag constant byte address 0x0 - dummy sync flag']
  #allocation20 [shape = 's32[]', space=sflag, size = 0x4, offset = 0, fixed_abs, tag = 'sflag constant byte address 0x0 - dummy sync flag']
  #allocation21 [shape = 's32[]', space=sflag, size = 0x4, offset = 0, fixed_abs, tag = 'sflag constant byte address 0x0 - dummy sync flag']
  #allocation22 [shape = 's32[]', space=sflag, size = 0x4, offset = 0, fixed_abs, tag = 'sflag constant byte address 0x0 - dummy sync flag']
  #allocation23 [shape = 's32[]', space=sflag, size = 0x4, offset = 0, fixed_abs, tag = 'sflag constant byte address 0x0 - dummy sync flag']
  #allocation24 [shape = 's32[]', space=sflag, size = 0x4, offset = 0, fixed_abs, tag = 'sflag constant byte address 0x0 - dummy sync flag']
  #allocation25 [shape = 's32[]', space=sflag, size = 0x4, offset = 0, fixed_abs, tag = 'sflag constant byte address 0x0 - dummy sync flag']
  #allocation26 [shape = 's32[]', space=sflag, size = 0x4, offset = 0, fixed_abs, tag = 'sflag constant byte address 0x0 - dummy sync flag']
  #allocation27 [shape = 's32[]', space=sflag, size = 0x4, offset = 0, fixed_abs, tag = 'sflag constant byte address 0x0 - dummy sync flag']
  #allocation28 [shape = 's32[]', space=sflag, size = 0x4, offset = 0, fixed_abs, tag = 'sflag constant byte address 0x0 - dummy sync flag']
  #allocation29 [shape = 's32[]', space=sflag, size = 0x4, offset = 0, fixed_abs, tag = 'sflag constant byte address 0x0 - dummy sync flag']
  #allocation30 [shape = 's32[]', space=sflag, size = 0x4, offset = 0, fixed_abs, tag = 'sflag constant byte address 0x0 - dummy sync flag']
  #allocation31 [shape = 's32[]', space=sflag, size = 0x4, offset = 0, fixed_abs, tag = 'sflag constant byte address 0x0 - dummy sync flag']
  %s0 = inlined_call_operand.vmem [shape: s32[24], index: 0, kind: input, shape index: {}]
  %s1 = inlined_call_operand.vmem [shape: f32[64,32], index: 1, kind: input, shape index: {}]
  %s2 = inlined_call_operand.hbm [shape: f32[8,32], index: 2, kind: output, shape index: {}]
  %s3 = sld [smem:[#allocation0]]
  $region730: #{tpu_custom_call.1} parent=0
    _
  %s5 = ssub.s32 1, %s3
  %s6 = scalar_select 0, %s5, %s3
  %s7 = sshll.u32 %s0, 4
  %s8 = int_to_ptr.vmem [resolvable:$true] %s7
  %10 = dma.vmem_to_smem %s8, 16, [#allocation5], [#allocation4]
  %11 = dma.done [#allocation4], 16
  %12 = sfence
  $region1: #{tpu_custom_call.1} parent=0
    #allocation6 [shape = 'u8[4096]{0}', space=vmem, size = 0x1000, scoped, tag = 'output window, operand 0, single buffered']
    #allocation7 [shape = 's32[1]{0}', space=sflag, size = 0x4, scoped, tag = 'scoped memory for tpu_custom_call.1']
    %13 = vsyncpa [#allocation7], 0
    %s14 = sld [smem:[#allocation5]]
    %s15 = scalar_lea.vmem %s1, %s14
    %p17 = scmp.lt.u32.totalorder 1, 8
    %p18 = pneg %p17
    // Predicated region
    $region2: #{tpu_custom_call.1} parent=1 // pred_check
      _
    $region3: #{tpu_custom_call.1} parent=1 // pred_check_branch
      %20 = sbr.rel (%p17) target = $region5
    $region4: #{tpu_custom_call.1} parent=1 // pred_region
      %s35 = sand.u32 1, 7
      %p36 = scmp.eq.s32.totalorder %s35, 0
      %p37 = pneg %p36
      // Predicated region
      $region17: #{tpu_custom_call.1} parent=4 // pred_check
        _
      $region18: #{tpu_custom_call.1} parent=4 // pred_check_branch
        %39 = sbr.rel (%p36) target = $region20
      $region19: #{tpu_custom_call.1} parent=4 // pred_region
        %s40 = sand.u32 1, 7
        %s41 = ssub.s32 1, %s40
        %s42 = scalar_lea.vmem %s15, %s41
        %s43 = ssub.s32 1, %s40
        %s44 = scalar_lea.vmem [#allocation2], %s43
        %s45 = sshllo.u32 0, %s40
        loop: start=0, step=1, limit=1
        $region21: #{tpu_custom_call.1} parent=19 // loop_pre_header
          _
        $region22: #{tpu_custom_call.1} parent=19 // loop_header
          %s47 = sphi 0, %s51
          %p48 = scmp.ge.s32.totalorder %s47, 1
          %s52 = sphi %s42, %s42
          %s53 = sphi %s44, %s44
        $region23: #{tpu_custom_call.1} parent=19 // loop_header_branch
          %50 = sbr.rel (%p48) target = $region27
        $region24: #{tpu_custom_call.1} parent=19 // loop_body
          %v54 = vld [vmem:[%s52] sm:%s45]
          %55 = vst [vmem:[%s53] sm:%s45] %v54
        $region25: #{tpu_custom_call.1} parent=19 // loop_footer
          %s51 = sadd.s32 1, %s47
        $region26: #{tpu_custom_call.1} parent=19 // loop_footer_branch
          %46 = sbr.rel target = $region22
        $region27: #{tpu_custom_call.1} parent=19 // loop_exit
          _
      $region20: #{tpu_custom_call.1} parent=4 // pred_fallthru
        _
    $region5: #{tpu_custom_call.1} parent=1 // pred_fallthru
      _
    // Predicated region
    $region6: #{tpu_custom_call.1} parent=1 // pred_check
      %p21 = pneg %p17
    $region7: #{tpu_custom_call.1} parent=1 // pred_check_branch
      %23 = sbr.rel (%p21) target = $region9
    $region8: #{tpu_custom_call.1} parent=1 // pred_region
      %s24 = sshllo.u32 0, 1
      loop: start=0, step=1, limit=1
      $region10: #{tpu_custom_call.1} parent=8 // loop_pre_header
        _
      $region11: #{tpu_custom_call.1} parent=8 // loop_header
        %s26 = sphi 0, %s30
        %p27 = scmp.ge.s32.totalorder %s26, 1
        %s31 = sphi %s15, %s15
        %s32 = sphi [#allocation2], [#allocation2]
      $region12: #{tpu_custom_call.1} parent=8 // loop_header_branch
        %29 = sbr.rel (%p27) target = $region16
      $region13: #{tpu_custom_call.1} parent=8 // loop_body
        %v33 = vld [vmem:[%s31] sm:%s24]
        %34 = vst [vmem:[%s32] sm:%s24] %v33
      $region14: #{tpu_custom_call.1} parent=8 // loop_footer
        %s30 = sadd.s32 1, %s26
      $region15: #{tpu_custom_call.1} parent=8 // loop_footer_branch
        %25 = sbr.rel target = $region11
      $region16: #{tpu_custom_call.1} parent=8 // loop_exit
        _
    $region9: #{tpu_custom_call.1} parent=1 // pred_fallthru
      _
    // Predicated region
    $region28: #{tpu_custom_call.1} parent=1 // pred_check
      _
    $region29: #{tpu_custom_call.1} parent=1 // pred_check_branch
      %58 = sbr.rel (0) target = $region31
    $region30: #{tpu_custom_call.1} parent=1 // pred_region
      %59 = vsyncadd [#allocation3], 16
    $region31: #{tpu_custom_call.1} parent=1 // pred_fallthru
      _
    %s60 = sld [smem:[#allocation5 + $0x1]]
    %s61 = scalar_lea.vmem %s1, %s60
    %s62 = scalar_lea.vmem [#allocation2], 1
    %s63 = scalar_lea.sflag [#allocation3], 1
    %p65 = scmp.lt.u32.totalorder 1, 8
    %p66 = pneg %p65
    // Predicated region
    $region32: #{tpu_custom_call.1} parent=1 // pred_check
      _
    $region33: #{tpu_custom_call.1} parent=1 // pred_check_branch
      %68 = sbr.rel (%p65) target = $region35
    $region34: #{tpu_custom_call.1} parent=1 // pred_region
      %s83 = sand.u32 1, 7
      %p84 = scmp.eq.s32.totalorder %s83, 0
      %p85 = pneg %p84
      // Predicated region
      $region47: #{tpu_custom_call.1} parent=34 // pred_check
        _
      $region48: #{tpu_custom_call.1} parent=34 // pred_check_branch
        %87 = sbr.rel (%p84) target = $region50
      $region49: #{tpu_custom_call.1} parent=34 // pred_region
        %s88 = sand.u32 1, 7
        %s89 = ssub.s32 1, %s88
        %s90 = scalar_lea.vmem %s61, %s89
        %s91 = ssub.s32 1, %s88
        %s92 = scalar_lea.vmem %s62, %s91 [#allocation2]
        %s93 = sshllo.u32 0, %s88
        loop: start=0, step=1, limit=1
        $region51: #{tpu_custom_call.1} parent=49 // loop_pre_header
          _
        $region52: #{tpu_custom_call.1} parent=49 // loop_header
          %s95 = sphi 0, %s99
          %p96 = scmp.ge.s32.totalorder %s95, 1
          %s100 = sphi %s90, %s90
          %s101 = sphi %s92, %s92
        $region53: #{tpu_custom_call.1} parent=49 // loop_header_branch
          %98 = sbr.rel (%p96) target = $region57
        $region54: #{tpu_custom_call.1} parent=49 // loop_body
          %v102 = vld [vmem:[%s100] sm:%s93]
          %103 = vst [vmem:[%s101] sm:%s93] %v102
        $region55: #{tpu_custom_call.1} parent=49 // loop_footer
          %s99 = sadd.s32 1, %s95
        $region56: #{tpu_custom_call.1} parent=49 // loop_footer_branch
          %94 = sbr.rel target = $region52
        $region57: #{tpu_custom_call.1} parent=49 // loop_exit
          _
      $region50: #{tpu_custom_call.1} parent=34 // pred_fallthru
        _
    $region35: #{tpu_custom_call.1} parent=1 // pred_fallthru
      _
    // Predicated region
    $region36: #{tpu_custom_call.1} parent=1 // pred_check
      %p69 = pneg %p65
    $region37: #{tpu_custom_call.1} parent=1 // pred_check_branch
      %71 = sbr.rel (%p69) target = $region39
    $region38: #{tpu_custom_call.1} parent=1 // pred_region
      %s72 = sshllo.u32 0, 1
      loop: start=0, step=1, limit=1
      $region40: #{tpu_custom_call.1} parent=38 // loop_pre_header
        _
      $region41: #{tpu_custom_call.1} parent=38 // loop_header
        %s74 = sphi 0, %s78
        %p75 = scmp.ge.s32.totalorder %s74, 1
        %s79 = sphi %s61, %s61
        %s80 = sphi %s62, %s62
      $region42: #{tpu_custom_call.1} parent=38 // loop_header_branch
        %77 = sbr.rel (%p75) target = $region46
      $region43: #{tpu_custom_call.1} parent=38 // loop_body
        %v81 = vld [vmem:[%s79] sm:%s72]
        %82 = vst [vmem:[%s80] sm:%s72] %v81
      $region44: #{tpu_custom_call.1} parent=38 // loop_footer
        %s78 = sadd.s32 1, %s74
      $region45: #{tpu_custom_call.1} parent=38 // loop_footer_branch
        %73 = sbr.rel target = $region41
      $region46: #{tpu_custom_call.1} parent=38 // loop_exit
        _
    $region39: #{tpu_custom_call.1} parent=1 // pred_fallthru
      _
    // Predicated region
    $region58: #{tpu_custom_call.1} parent=1 // pred_check
      _
    $region59: #{tpu_custom_call.1} parent=1 // pred_check_branch
      %106 = sbr.rel (0) target = $region61
    $region60: #{tpu_custom_call.1} parent=1 // pred_region
      %107 = vsyncadd %s63, 16
    $region61: #{tpu_custom_call.1} parent=1 // pred_fallthru
      _
    %s108 = sld [smem:[#allocation5 + $0x2]]
    %s109 = scalar_lea.vmem %s1, %s108
    %s110 = scalar_lea.vmem [#allocation2], 2
    %s111 = scalar_lea.sflag [#allocation3], 2
    %p113 = scmp.lt.u32.totalorder 1, 8
    %p114 = pneg %p113
    // Predicated region
    $region62: #{tpu_custom_call.1} parent=1 // pred_check
      _
    $region63: #{tpu_custom_call.1} parent=1 // pred_check_branch
      %116 = sbr.rel (%p113) target = $region65
    $region64: #{tpu_custom_call.1} parent=1 // pred_region
      %s131 = sand.u32 1, 7
      %p132 = scmp.eq.s32.totalorder %s131, 0
      %p133 = pneg %p132
      // Predicated region
      $region77: #{tpu_custom_call.1} parent=64 // pred_check
        _
      $region78: #{tpu_custom_call.1} parent=64 // pred_check_branch
        %135 = sbr.rel (%p132) target = $region80
      $region79: #{tpu_custom_call.1} parent=64 // pred_region
        %s136 = sand.u32 1, 7
        %s137 = ssub.s32 1, %s136
        %s138 = scalar_lea.vmem %s109, %s137
        %s139 = ssub.s32 1, %s136
        %s140 = scalar_lea.vmem %s110, %s139 [#allocation2]
        %s141 = sshllo.u32 0, %s136
        loop: start=0, step=1, limit=1
        $region81: #{tpu_custom_call.1} parent=79 // loop_pre_header
          _
        $region82: #{tpu_custom_call.1} parent=79 // loop_header
          %s143 = sphi 0, %s147
          %p144 = scmp.ge.s32.totalorder %s143, 1
          %s148 = sphi %s138, %s138
          %s149 = sphi %s140, %s140
        $region83: #{tpu_custom_call.1} parent=79 // loop_header_branch
          %146 = sbr.rel (%p144) target = $region87
        $region84: #{tpu_custom_call.1} parent=79 // loop_body
          %v150 = vld [vmem:[%s148] sm:%s141]
          %151 = vst [vmem:[%s149] sm:%s141] %v150
        $region85: #{tpu_custom_call.1} parent=79 // loop_footer
          %s147 = sadd.s32 1, %s143
        $region86: #{tpu_custom_call.1} parent=79 // loop_footer_branch
          %142 = sbr.rel target = $region82
        $region87: #{tpu_custom_call.1} parent=79 // loop_exit
          _
      $region80: #{tpu_custom_call.1} parent=64 // pred_fallthru
        _
    $region65: #{tpu_custom_call.1} parent=1 // pred_fallthru
      _
    // Predicated region
    $region66: #{tpu_custom_call.1} parent=1 // pred_check
      %p117 = pneg %p113
    $region67: #{tpu_custom_call.1} parent=1 // pred_check_branch
      %119 = sbr.rel (%p117) target = $region69
    $region68: #{tpu_custom_call.1} parent=1 // pred_region
      %s120 = sshllo.u32 0, 1
      loop: start=0, step=1, limit=1
      $region70: #{tpu_custom_call.1} parent=68 // loop_pre_header
        _
      $region71: #{tpu_custom_call.1} parent=68 // loop_header
        %s122 = sphi 0, %s126
        %p123 = scmp.ge.s32.totalorder %s122, 1
        %s127 = sphi %s109, %s109
        %s128 = sphi %s110, %s110
      $region72: #{tpu_custom_call.1} parent=68 // loop_header_branch
        %125 = sbr.rel (%p123) target = $region76
      $region73: #{tpu_custom_call.1} parent=68 // loop_body
        %v129 = vld [vmem:[%s127] sm:%s120]
        %130 = vst [vmem:[%s128] sm:%s120] %v129
      $region74: #{tpu_custom_call.1} parent=68 // loop_footer
        %s126 = sadd.s32 1, %s122
      $region75: #{tpu_custom_call.1} parent=68 // loop_footer_branch
        %121 = sbr.rel target = $region71
      $region76: #{tpu_custom_call.1} parent=68 // loop_exit
        _
    $region69: #{tpu_custom_call.1} parent=1 // pred_fallthru
      _
    // Predicated region
    $region88: #{tpu_custom_call.1} parent=1 // pred_check
      _
    $region89: #{tpu_custom_call.1} parent=1 // pred_check_branch
      %154 = sbr.rel (0) target = $region91
    $region90: #{tpu_custom_call.1} parent=1 // pred_region
      %155 = vsyncadd %s111, 16
    $region91: #{tpu_custom_call.1} parent=1 // pred_fallthru
      _
    %s156 = sld [smem:[#allocation5 + $0x3]]
    %s157 = scalar_lea.vmem %s1, %s156
    %s158 = scalar_lea.vmem [#allocation2], 3
    %s159 = scalar_lea.sflag [#allocation3], 3
    %p161 = scmp.lt.u32.totalorder 1, 8
    %p162 = pneg %p161
    // Predicated region
    $region92: #{tpu_custom_call.1} parent=1 // pred_check
      _
    $region93: #{tpu_custom_call.1} parent=1 // pred_check_branch
      %164 = sbr.rel (%p161) target = $region95
    $region94: #{tpu_custom_call.1} parent=1 // pred_region
      %s179 = sand.u32 1, 7
      %p180 = scmp.eq.s32.totalorder %s179, 0
      %p181 = pneg %p180
      // Predicated region
      $region107: #{tpu_custom_call.1} parent=94 // pred_check
        _
      $region108: #{tpu_custom_call.1} parent=94 // pred_check_branch
        %183 = sbr.rel (%p180) target = $region110
      $region109: #{tpu_custom_call.1} parent=94 // pred_region
        %s184 = sand.u32 1, 7
        %s185 = ssub.s32 1, %s184
        %s186 = scalar_lea.vmem %s157, %s185
        %s187 = ssub.s32 1, %s184
        %s188 = scalar_lea.vmem %s158, %s187 [#allocation2]
        %s189 = sshllo.u32 0, %s184
        loop: start=0, step=1, limit=1
        $region111: #{tpu_custom_call.1} parent=109 // loop_pre_header
          _
        $region112: #{tpu_custom_call.1} parent=109 // loop_header
          %s191 = sphi 0, %s195
          %p192 = scmp.ge.s32.totalorder %s191, 1
          %s196 = sphi %s186, %s186
          %s197 = sphi %s188, %s188
        $region113: #{tpu_custom_call.1} parent=109 // loop_header_branch
          %194 = sbr.rel (%p192) target = $region117
        $region114: #{tpu_custom_call.1} parent=109 // loop_body
          %v198 = vld [vmem:[%s196] sm:%s189]
          %199 = vst [vmem:[%s197] sm:%s189] %v198
        $region115: #{tpu_custom_call.1} parent=109 // loop_footer
          %s195 = sadd.s32 1, %s191
        $region116: #{tpu_custom_call.1} parent=109 // loop_footer_branch
          %190 = sbr.rel target = $region112
        $region117: #{tpu_custom_call.1} parent=109 // loop_exit
          _
      $region110: #{tpu_custom_call.1} parent=94 // pred_fallthru
        _
    $region95: #{tpu_custom_call.1} parent=1 // pred_fallthru
      _
    // Predicated region
    $region96: #{tpu_custom_call.1} parent=1 // pred_check
      %p165 = pneg %p161
    $region97: #{tpu_custom_call.1} parent=1 // pred_check_branch
      %167 = sbr.rel (%p165) target = $region99
    $region98: #{tpu_custom_call.1} parent=1 // pred_region
      %s168 = sshllo.u32 0, 1
      loop: start=0, step=1, limit=1
      $region100: #{tpu_custom_call.1} parent=98 // loop_pre_header
        _
      $region101: #{tpu_custom_call.1} parent=98 // loop_header
        %s170 = sphi 0, %s174
        %p171 = scmp.ge.s32.totalorder %s170, 1
        %s175 = sphi %s157, %s157
        %s176 = sphi %s158, %s158
      $region102: #{tpu_custom_call.1} parent=98 // loop_header_branch
        %173 = sbr.rel (%p171) target = $region106
      $region103: #{tpu_custom_call.1} parent=98 // loop_body
        %v177 = vld [vmem:[%s175] sm:%s168]
        %178 = vst [vmem:[%s176] sm:%s168] %v177
      $region104: #{tpu_custom_call.1} parent=98 // loop_footer
        %s174 = sadd.s32 1, %s170
      $region105: #{tpu_custom_call.1} parent=98 // loop_footer_branch
        %169 = sbr.rel target = $region101
      $region106: #{tpu_custom_call.1} parent=98 // loop_exit
        _
    $region99: #{tpu_custom_call.1} parent=1 // pred_fallthru
      _
    // Predicated region
    $region118: #{tpu_custom_call.1} parent=1 // pred_check
      _
    $region119: #{tpu_custom_call.1} parent=1 // pred_check_branch
      %202 = sbr.rel (0) target = $region121
    $region120: #{tpu_custom_call.1} parent=1 // pred_region
      %203 = vsyncadd %s159, 16
    $region121: #{tpu_custom_call.1} parent=1 // pred_fallthru
      _
    %s204 = sld [smem:[#allocation5 + $0x4]]
    %s205 = scalar_lea.vmem %s1, %s204
    %s206 = scalar_lea.vmem [#allocation2], 4
    %s207 = scalar_lea.sflag [#allocation3], 4
    %p209 = scmp.lt.u32.totalorder 1, 8
    %p210 = pneg %p209
    // Predicated region
    $region122: #{tpu_custom_call.1} parent=1 // pred_check
      _
    $region123: #{tpu_custom_call.1} parent=1 // pred_check_branch
      %212 = sbr.rel (%p209) target = $region125
    $region124: #{tpu_custom_call.1} parent=1 // pred_region
      %s227 = sand.u32 1, 7
      %p228 = scmp.eq.s32.totalorder %s227, 0
      %p229 = pneg %p228
      // Predicated region
      $region137: #{tpu_custom_call.1} parent=124 // pred_check
        _
      $region138: #{tpu_custom_call.1} parent=124 // pred_check_branch
        %231 = sbr.rel (%p228) target = $region140
      $region139: #{tpu_custom_call.1} parent=124 // pred_region
        %s232 = sand.u32 1, 7
        %s233 = ssub.s32 1, %s232
        %s234 = scalar_lea.vmem %s205, %s233
        %s235 = ssub.s32 1, %s232
        %s236 = scalar_lea.vmem %s206, %s235 [#allocation2]
        %s237 = sshllo.u32 0, %s232
        loop: start=0, step=1, limit=1
        $region141: #{tpu_custom_call.1} parent=139 // loop_pre_header
          _
        $region142: #{tpu_custom_call.1} parent=139 // loop_header
          %s239 = sphi 0, %s243
          %p240 = scmp.ge.s32.totalorder %s239, 1
          %s244 = sphi %s234, %s234
          %s245 = sphi %s236, %s236
        $region143: #{tpu_custom_call.1} parent=139 // loop_header_branch
          %242 = sbr.rel (%p240) target = $region147
        $region144: #{tpu_custom_call.1} parent=139 // loop_body
          %v246 = vld [vmem:[%s244] sm:%s237]
          %247 = vst [vmem:[%s245] sm:%s237] %v246
        $region145: #{tpu_custom_call.1} parent=139 // loop_footer
          %s243 = sadd.s32 1, %s239
        $region146: #{tpu_custom_call.1} parent=139 // loop_footer_branch
          %238 = sbr.rel target = $region142
        $region147: #{tpu_custom_call.1} parent=139 // loop_exit
          _
      $region140: #{tpu_custom_call.1} parent=124 // pred_fallthru
        _
    $region125: #{tpu_custom_call.1} parent=1 // pred_fallthru
      _
    // Predicated region
    $region126: #{tpu_custom_call.1} parent=1 // pred_check
      %p213 = pneg %p209
    $region127: #{tpu_custom_call.1} parent=1 // pred_check_branch
      %215 = sbr.rel (%p213) target = $region129
    $region128: #{tpu_custom_call.1} parent=1 // pred_region
      %s216 = sshllo.u32 0, 1
      loop: start=0, step=1, limit=1
      $region130: #{tpu_custom_call.1} parent=128 // loop_pre_header
        _
      $region131: #{tpu_custom_call.1} parent=128 // loop_header
        %s218 = sphi 0, %s222
        %p219 = scmp.ge.s32.totalorder %s218, 1
        %s223 = sphi %s205, %s205
        %s224 = sphi %s206, %s206
      $region132: #{tpu_custom_call.1} parent=128 // loop_header_branch
        %221 = sbr.rel (%p219) target = $region136
      $region133: #{tpu_custom_call.1} parent=128 // loop_body
        %v225 = vld [vmem:[%s223] sm:%s216]
        %226 = vst [vmem:[%s224] sm:%s216] %v225
      $region134: #{tpu_custom_call.1} parent=128 // loop_footer
        %s222 = sadd.s32 1, %s218
      $region135: #{tpu_custom_call.1} parent=128 // loop_footer_branch
        %217 = sbr.rel target = $region131
      $region136: #{tpu_custom_call.1} parent=128 // loop_exit
        _
    $region129: #{tpu_custom_call.1} parent=1 // pred_fallthru
      _
    // Predicated region
    $region148: #{tpu_custom_call.1} parent=1 // pred_check
      _
    $region149: #{tpu_custom_call.1} parent=1 // pred_check_branch
      %250 = sbr.rel (0) target = $region151
    $region150: #{tpu_custom_call.1} parent=1 // pred_region
      %251 = vsyncadd %s207, 16
    $region151: #{tpu_custom_call.1} parent=1 // pred_fallthru
      _
    %s252 = sld [smem:[#allocation5 + $0x5]]
    %s253 = scalar_lea.vmem %s1, %s252
    %s254 = scalar_lea.vmem [#allocation2], 5
    %s255 = scalar_lea.sflag [#allocation3], 5
    %p257 = scmp.lt.u32.totalorder 1, 8
    %p258 = pneg %p257
    // Predicated region
    $region152: #{tpu_custom_call.1} parent=1 // pred_check
      _
    $region153: #{tpu_custom_call.1} parent=1 // pred_check_branch
      %260 = sbr.rel (%p257) target = $region155
    $region154: #{tpu_custom_call.1} parent=1 // pred_region
      %s275 = sand.u32 1, 7
      %p276 = scmp.eq.s32.totalorder %s275, 0
      %p277 = pneg %p276
      // Predicated region
      $region167: #{tpu_custom_call.1} parent=154 // pred_check
        _
      $region168: #{tpu_custom_call.1} parent=154 // pred_check_branch
        %279 = sbr.rel (%p276) target = $region170
      $region169: #{tpu_custom_call.1} parent=154 // pred_region
        %s280 = sand.u32 1, 7
        %s281 = ssub.s32 1, %s280
        %s282 = scalar_lea.vmem %s253, %s281
        %s283 = ssub.s32 1, %s280
        %s284 = scalar_lea.vmem %s254, %s283 [#allocation2]
        %s285 = sshllo.u32 0, %s280
        loop: start=0, step=1, limit=1
        $region171: #{tpu_custom_call.1} parent=169 // loop_pre_header
          _
        $region172: #{tpu_custom_call.1} parent=169 // loop_header
          %s287 = sphi 0, %s291
          %p288 = scmp.ge.s32.totalorder %s287, 1
          %s292 = sphi %s282, %s282
          %s293 = sphi %s284, %s284
        $region173: #{tpu_custom_call.1} parent=169 // loop_header_branch
          %290 = sbr.rel (%p288) target = $region177
        $region174: #{tpu_custom_call.1} parent=169 // loop_body
          %v294 = vld [vmem:[%s292] sm:%s285]
          %295 = vst [vmem:[%s293] sm:%s285] %v294
        $region175: #{tpu_custom_call.1} parent=169 // loop_footer
          %s291 = sadd.s32 1, %s287
        $region176: #{tpu_custom_call.1} parent=169 // loop_footer_branch
          %286 = sbr.rel target = $region172
        $region177: #{tpu_custom_call.1} parent=169 // loop_exit
          _
      $region170: #{tpu_custom_call.1} parent=154 // pred_fallthru
        _
    $region155: #{tpu_custom_call.1} parent=1 // pred_fallthru
      _
    // Predicated region
    $region156: #{tpu_custom_call.1} parent=1 // pred_check
      %p261 = pneg %p257
    $region157: #{tpu_custom_call.1} parent=1 // pred_check_branch
      %263 = sbr.rel (%p261) target = $region159
    $region158: #{tpu_custom_call.1} parent=1 // pred_region
      %s264 = sshllo.u32 0, 1
      loop: start=0, step=1, limit=1
      $region160: #{tpu_custom_call.1} parent=158 // loop_pre_header
        _
      $region161: #{tpu_custom_call.1} parent=158 // loop_header
        %s266 = sphi 0, %s270
        %p267 = scmp.ge.s32.totalorder %s266, 1
        %s271 = sphi %s253, %s253
        %s272 = sphi %s254, %s254
      $region162: #{tpu_custom_call.1} parent=158 // loop_header_branch
        %269 = sbr.rel (%p267) target = $region166
      $region163: #{tpu_custom_call.1} parent=158 // loop_body
        %v273 = vld [vmem:[%s271] sm:%s264]
        %274 = vst [vmem:[%s272] sm:%s264] %v273
      $region164: #{tpu_custom_call.1} parent=158 // loop_footer
        %s270 = sadd.s32 1, %s266
      $region165: #{tpu_custom_call.1} parent=158 // loop_footer_branch
        %265 = sbr.rel target = $region161
      $region166: #{tpu_custom_call.1} parent=158 // loop_exit
        _
    $region159: #{tpu_custom_call.1} parent=1 // pred_fallthru
      _
    // Predicated region
    $region178: #{tpu_custom_call.1} parent=1 // pred_check
      _
    $region179: #{tpu_custom_call.1} parent=1 // pred_check_branch
      %298 = sbr.rel (0) target = $region181
    $region180: #{tpu_custom_call.1} parent=1 // pred_region
      %299 = vsyncadd %s255, 16
    $region181: #{tpu_custom_call.1} parent=1 // pred_fallthru
      _
    %s300 = sld [smem:[#allocation5 + $0x6]]
    %s301 = scalar_lea.vmem %s1, %s300
    %s302 = scalar_lea.vmem [#allocation2], 6
    %s303 = scalar_lea.sflag [#allocation3], 6
    %p305 = scmp.lt.u32.totalorder 1, 8
    %p306 = pneg %p305
    // Predicated region
    $region182: #{tpu_custom_call.1} parent=1 // pred_check
      _
    $region183: #{tpu_custom_call.1} parent=1 // pred_check_branch
      %308 = sbr.rel (%p305) target = $region185
    $region184: #{tpu_custom_call.1} parent=1 // pred_region
      %s323 = sand.u32 1, 7
      %p324 = scmp.eq.s32.totalorder %s323, 0
      %p325 = pneg %p324
      // Predicated region
      $region197: #{tpu_custom_call.1} parent=184 // pred_check
        _
      $region198: #{tpu_custom_call.1} parent=184 // pred_check_branch
        %327 = sbr.rel (%p324) target = $region200
      $region199: #{tpu_custom_call.1} parent=184 // pred_region
        %s328 = sand.u32 1, 7
        %s329 = ssub.s32 1, %s328
        %s330 = scalar_lea.vmem %s301, %s329
        %s331 = ssub.s32 1, %s328
        %s332 = scalar_lea.vmem %s302, %s331 [#allocation2]
        %s333 = sshllo.u32 0, %s328
        loop: start=0, step=1, limit=1
        $region201: #{tpu_custom_call.1} parent=199 // loop_pre_header
          _
        $region202: #{tpu_custom_call.1} parent=199 // loop_header
          %s335 = sphi 0, %s339
          %p336 = scmp.ge.s32.totalorder %s335, 1
          %s340 = sphi %s330, %s330
          %s341 = sphi %s332, %s332
        $region203: #{tpu_custom_call.1} parent=199 // loop_header_branch
          %338 = sbr.rel (%p336) target = $region207
        $region204: #{tpu_custom_call.1} parent=199 // loop_body
          %v342 = vld [vmem:[%s340] sm:%s333]
          %343 = vst [vmem:[%s341] sm:%s333] %v342
        $region205: #{tpu_custom_call.1} parent=199 // loop_footer
          %s339 = sadd.s32 1, %s335
        $region206: #{tpu_custom_call.1} parent=199 // loop_footer_branch
          %334 = sbr.rel target = $region202
        $region207: #{tpu_custom_call.1} parent=199 // loop_exit
          _
      $region200: #{tpu_custom_call.1} parent=184 // pred_fallthru
        _
    $region185: #{tpu_custom_call.1} parent=1 // pred_fallthru
      _
    // Predicated region
    $region186: #{tpu_custom_call.1} parent=1 // pred_check
      %p309 = pneg %p305
    $region187: #{tpu_custom_call.1} parent=1 // pred_check_branch
      %311 = sbr.rel (%p309) target = $region189
    $region188: #{tpu_custom_call.1} parent=1 // pred_region
      %s312 = sshllo.u32 0, 1
      loop: start=0, step=1, limit=1
      $region190: #{tpu_custom_call.1} parent=188 // loop_pre_header
        _
      $region191: #{tpu_custom_call.1} parent=188 // loop_header
        %s314 = sphi 0, %s318
        %p315 = scmp.ge.s32.totalorder %s314, 1
        %s319 = sphi %s301, %s301
        %s320 = sphi %s302, %s302
      $region192: #{tpu_custom_call.1} parent=188 // loop_header_branch
        %317 = sbr.rel (%p315) target = $region196
      $region193: #{tpu_custom_call.1} parent=188 // loop_body
        %v321 = vld [vmem:[%s319] sm:%s312]
        %322 = vst [vmem:[%s320] sm:%s312] %v321
      $region194: #{tpu_custom_call.1} parent=188 // loop_footer
        %s318 = sadd.s32 1, %s314
      $region195: #{tpu_custom_call.1} parent=188 // loop_footer_branch
        %313 = sbr.rel target = $region191
      $region196: #{tpu_custom_call.1} parent=188 // loop_exit
        _
    $region189: #{tpu_custom_call.1} parent=1 // pred_fallthru
      _
    // Predicated region
    $region208: #{tpu_custom_call.1} parent=1 // pred_check
      _
    $region209: #{tpu_custom_call.1} parent=1 // pred_check_branch
      %346 = sbr.rel (0) target = $region211
    $region210: #{tpu_custom_call.1} parent=1 // pred_region
      %347 = vsyncadd %s303, 16
    $region211: #{tpu_custom_call.1} parent=1 // pred_fallthru
      _
    %s348 = sld [smem:[#allocation5 + $0x7]]
    %s349 = scalar_lea.vmem %s1, %s348
    %s350 = scalar_lea.vmem [#allocation2], 7
    %s351 = scalar_lea.sflag [#allocation3], 7
    %p353 = scmp.lt.u32.totalorder 1, 8
    %p354 = pneg %p353
    // Predicated region
    $region212: #{tpu_custom_call.1} parent=1 // pred_check
      _
    $region213: #{tpu_custom_call.1} parent=1 // pred_check_branch
      %356 = sbr.rel (%p353) target = $region215
    $region214: #{tpu_custom_call.1} parent=1 // pred_region
      %s371 = sand.u32 1, 7
      %p372 = scmp.eq.s32.totalorder %s371, 0
      %p373 = pneg %p372
      // Predicated region
      $region227: #{tpu_custom_call.1} parent=214 // pred_check
        _
      $region228: #{tpu_custom_call.1} parent=214 // pred_check_branch
        %375 = sbr.rel (%p372) target = $region230
      $region229: #{tpu_custom_call.1} parent=214 // pred_region
        %s376 = sand.u32 1, 7
        %s377 = ssub.s32 1, %s376
        %s378 = scalar_lea.vmem %s349, %s377
        %s379 = ssub.s32 1, %s376
        %s380 = scalar_lea.vmem %s350, %s379 [#allocation2]
        %s381 = sshllo.u32 0, %s376
        loop: start=0, step=1, limit=1
        $region231: #{tpu_custom_call.1} parent=229 // loop_pre_header
          _
        $region232: #{tpu_custom_call.1} parent=229 // loop_header
          %s383 = sphi 0, %s387
          %p384 = scmp.ge.s32.totalorder %s383, 1
          %s388 = sphi %s378, %s378
          %s389 = sphi %s380, %s380
        $region233: #{tpu_custom_call.1} parent=229 // loop_header_branch
          %386 = sbr.rel (%p384) target = $region237
        $region234: #{tpu_custom_call.1} parent=229 // loop_body
          %v390 = vld [vmem:[%s388] sm:%s381]
          %391 = vst [vmem:[%s389] sm:%s381] %v390
        $region235: #{tpu_custom_call.1} parent=229 // loop_footer
          %s387 = sadd.s32 1, %s383
        $region236: #{tpu_custom_call.1} parent=229 // loop_footer_branch
          %382 = sbr.rel target = $region232
        $region237: #{tpu_custom_call.1} parent=229 // loop_exit
          _
      $region230: #{tpu_custom_call.1} parent=214 // pred_fallthru
        _
    $region215: #{tpu_custom_call.1} parent=1 // pred_fallthru
      _
    // Predicated region
    $region216: #{tpu_custom_call.1} parent=1 // pred_check
      %p357 = pneg %p353
    $region217: #{tpu_custom_call.1} parent=1 // pred_check_branch
      %359 = sbr.rel (%p357) target = $region219
    $region218: #{tpu_custom_call.1} parent=1 // pred_region
      %s360 = sshllo.u32 0, 1
      loop: start=0, step=1, limit=1
      $region220: #{tpu_custom_call.1} parent=218 // loop_pre_header
        _
      $region221: #{tpu_custom_call.1} parent=218 // loop_header
        %s362 = sphi 0, %s366
        %p363 = scmp.ge.s32.totalorder %s362, 1
        %s367 = sphi %s349, %s349
        %s368 = sphi %s350, %s350
      $region222: #{tpu_custom_call.1} parent=218 // loop_header_branch
        %365 = sbr.rel (%p363) target = $region226
      $region223: #{tpu_custom_call.1} parent=218 // loop_body
        %v369 = vld [vmem:[%s367] sm:%s360]
        %370 = vst [vmem:[%s368] sm:%s360] %v369
      $region224: #{tpu_custom_call.1} parent=218 // loop_footer
        %s366 = sadd.s32 1, %s362
      $region225: #{tpu_custom_call.1} parent=218 // loop_footer_branch
        %361 = sbr.rel target = $region221
      $region226: #{tpu_custom_call.1} parent=218 // loop_exit
        _
    $region219: #{tpu_custom_call.1} parent=1 // pred_fallthru
      _
    // Predicated region
    $region238: #{tpu_custom_call.1} parent=1 // pred_check
      _
    $region239: #{tpu_custom_call.1} parent=1 // pred_check_branch
      %394 = sbr.rel (0) target = $region241
    $region240: #{tpu_custom_call.1} parent=1 // pred_region
      %395 = vsyncadd %s351, 16
    $region241: #{tpu_custom_call.1} parent=1 // pred_fallthru
      _
    %s396 = sld [smem:[#allocation5 + $0x8]]
    %s397 = scalar_lea.vmem %s1, %s396
    %s398 = scalar_lea.vmem [#allocation2], 8
    %s399 = scalar_lea.sflag [#allocation3], 8
    %p401 = scmp.lt.u32.totalorder 1, 8
    %p402 = pneg %p401
    // Predicated region
    $region242: #{tpu_custom_call.1} parent=1 // pred_check
      _
    $region243: #{tpu_custom_call.1} parent=1 // pred_check_branch
      %404 = sbr.rel (%p401) target = $region245
    $region244: #{tpu_custom_call.1} parent=1 // pred_region
      %s419 = sand.u32 1, 7
      %p420 = scmp.eq.s32.totalorder %s419, 0
      %p421 = pneg %p420
      // Predicated region
      $region257: #{tpu_custom_call.1} parent=244 // pred_check
        _
      $region258: #{tpu_custom_call.1} parent=244 // pred_check_branch
        %423 = sbr.rel (%p420) target = $region260
      $region259: #{tpu_custom_call.1} parent=244 // pred_region
        %s424 = sand.u32 1, 7
        %s425 = ssub.s32 1, %s424
        %s426 = scalar_lea.vmem %s397, %s425
        %s427 = ssub.s32 1, %s424
        %s428 = scalar_lea.vmem %s398, %s427 [#allocation2]
        %s429 = sshllo.u32 0, %s424
        loop: start=0, step=1, limit=1
        $region261: #{tpu_custom_call.1} parent=259 // loop_pre_header
          _
        $region262: #{tpu_custom_call.1} parent=259 // loop_header
          %s431 = sphi 0, %s435
          %p432 = scmp.ge.s32.totalorder %s431, 1
          %s436 = sphi %s426, %s426
          %s437 = sphi %s428, %s428
        $region263: #{tpu_custom_call.1} parent=259 // loop_header_branch
          %434 = sbr.rel (%p432) target = $region267
        $region264: #{tpu_custom_call.1} parent=259 // loop_body
          %v438 = vld [vmem:[%s436] sm:%s429]
          %439 = vst [vmem:[%s437] sm:%s429] %v438
        $region265: #{tpu_custom_call.1} parent=259 // loop_footer
          %s435 = sadd.s32 1, %s431
        $region266: #{tpu_custom_call.1} parent=259 // loop_footer_branch
          %430 = sbr.rel target = $region262
        $region267: #{tpu_custom_call.1} parent=259 // loop_exit
          _
      $region260: #{tpu_custom_call.1} parent=244 // pred_fallthru
        _
    $region245: #{tpu_custom_call.1} parent=1 // pred_fallthru
      _
    // Predicated region
    $region246: #{tpu_custom_call.1} parent=1 // pred_check
      %p405 = pneg %p401
    $region247: #{tpu_custom_call.1} parent=1 // pred_check_branch
      %407 = sbr.rel (%p405) target = $region249
    $region248: #{tpu_custom_call.1} parent=1 // pred_region
      %s408 = sshllo.u32 0, 1
      loop: start=0, step=1, limit=1
      $region250: #{tpu_custom_call.1} parent=248 // loop_pre_header
        _
      $region251: #{tpu_custom_call.1} parent=248 // loop_header
        %s410 = sphi 0, %s414
        %p411 = scmp.ge.s32.totalorder %s410, 1
        %s415 = sphi %s397, %s397
        %s416 = sphi %s398, %s398
      $region252: #{tpu_custom_call.1} parent=248 // loop_header_branch
        %413 = sbr.rel (%p411) target = $region256
      $region253: #{tpu_custom_call.1} parent=248 // loop_body
        %v417 = vld [vmem:[%s415] sm:%s408]
        %418 = vst [vmem:[%s416] sm:%s408] %v417
      $region254: #{tpu_custom_call.1} parent=248 // loop_footer
        %s414 = sadd.s32 1, %s410
      $region255: #{tpu_custom_call.1} parent=248 // loop_footer_branch
        %409 = sbr.rel target = $region251
      $region256: #{tpu_custom_call.1} parent=248 // loop_exit
        _
    $region249: #{tpu_custom_call.1} parent=1 // pred_fallthru
      _
    // Predicated region
    $region268: #{tpu_custom_call.1} parent=1 // pred_check
      _
    $region269: #{tpu_custom_call.1} parent=1 // pred_check_branch
      %442 = sbr.rel (0) target = $region271
    $region270: #{tpu_custom_call.1} parent=1 // pred_region
      %443 = vsyncadd %s399, 16
    $region271: #{tpu_custom_call.1} parent=1 // pred_fallthru
      _
    %s444 = sld [smem:[#allocation5 + $0x9]]
    %s445 = scalar_lea.vmem %s1, %s444
    %s446 = scalar_lea.vmem [#allocation2], 9
    %s447 = scalar_lea.sflag [#allocation3], 9
    %p449 = scmp.lt.u32.totalorder 1, 8
    %p450 = pneg %p449
    // Predicated region
    $region272: #{tpu_custom_call.1} parent=1 // pred_check
      _
    $region273: #{tpu_custom_call.1} parent=1 // pred_check_branch
      %452 = sbr.rel (%p449) target = $region275
    $region274: #{tpu_custom_call.1} parent=1 // pred_region
      %s467 = sand.u32 1, 7
      %p468 = scmp.eq.s32.totalorder %s467, 0
      %p469 = pneg %p468
      // Predicated region
      $region287: #{tpu_custom_call.1} parent=274 // pred_check
        _
      $region288: #{tpu_custom_call.1} parent=274 // pred_check_branch
        %471 = sbr.rel (%p468) target = $region290
      $region289: #{tpu_custom_call.1} parent=274 // pred_region
        %s472 = sand.u32 1, 7
        %s473 = ssub.s32 1, %s472
        %s474 = scalar_lea.vmem %s445, %s473
        %s475 = ssub.s32 1, %s472
        %s476 = scalar_lea.vmem %s446, %s475 [#allocation2]
        %s477 = sshllo.u32 0, %s472
        loop: start=0, step=1, limit=1
        $region291: #{tpu_custom_call.1} parent=289 // loop_pre_header
          _
        $region292: #{tpu_custom_call.1} parent=289 // loop_header
          %s479 = sphi 0, %s483
          %p480 = scmp.ge.s32.totalorder %s479, 1
          %s484 = sphi %s474, %s474
          %s485 = sphi %s476, %s476
        $region293: #{tpu_custom_call.1} parent=289 // loop_header_branch
          %482 = sbr.rel (%p480) target = $region297
        $region294: #{tpu_custom_call.1} parent=289 // loop_body
          %v486 = vld [vmem:[%s484] sm:%s477]
          %487 = vst [vmem:[%s485] sm:%s477] %v486
        $region295: #{tpu_custom_call.1} parent=289 // loop_footer
          %s483 = sadd.s32 1, %s479
        $region296: #{tpu_custom_call.1} parent=289 // loop_footer_branch
          %478 = sbr.rel target = $region292
        $region297: #{tpu_custom_call.1} parent=289 // loop_exit
          _
      $region290: #{tpu_custom_call.1} parent=274 // pred_fallthru
        _
    $region275: #{tpu_custom_call.1} parent=1 // pred_fallthru
      _
    // Predicated region
    $region276: #{tpu_custom_call.1} parent=1 // pred_check
      %p453 = pneg %p449
    $region277: #{tpu_custom_call.1} parent=1 // pred_check_branch
      %455 = sbr.rel (%p453) target = $region279
    $region278: #{tpu_custom_call.1} parent=1 // pred_region
      %s456 = sshllo.u32 0, 1
      loop: start=0, step=1, limit=1
      $region280: #{tpu_custom_call.1} parent=278 // loop_pre_header
        _
      $region281: #{tpu_custom_call.1} parent=278 // loop_header
        %s458 = sphi 0, %s462
        %p459 = scmp.ge.s32.totalorder %s458, 1
        %s463 = sphi %s445, %s445
        %s464 = sphi %s446, %s446
      $region282: #{tpu_custom_call.1} parent=278 // loop_header_branch
        %461 = sbr.rel (%p459) target = $region286
      $region283: #{tpu_custom_call.1} parent=278 // loop_body
        %v465 = vld [vmem:[%s463] sm:%s456]
        %466 = vst [vmem:[%s464] sm:%s456] %v465
      $region284: #{tpu_custom_call.1} parent=278 // loop_footer
        %s462 = sadd.s32 1, %s458
      $region285: #{tpu_custom_call.1} parent=278 // loop_footer_branch
        %457 = sbr.rel target = $region281
      $region286: #{tpu_custom_call.1} parent=278 // loop_exit
        _
    $region279: #{tpu_custom_call.1} parent=1 // pred_fallthru
      _
    // Predicated region
    $region298: #{tpu_custom_call.1} parent=1 // pred_check
      _
    $region299: #{tpu_custom_call.1} parent=1 // pred_check_branch
      %490 = sbr.rel (0) target = $region301
    $region300: #{tpu_custom_call.1} parent=1 // pred_region
      %491 = vsyncadd %s447, 16
    $region301: #{tpu_custom_call.1} parent=1 // pred_fallthru
      _
    %s492 = sld [smem:[#allocation5 + $0xa]]
    %s493 = scalar_lea.vmem %s1, %s492
    %s494 = scalar_lea.vmem [#allocation2], 10
    %s495 = scalar_lea.sflag [#allocation3], 10
    %p497 = scmp.lt.u32.totalorder 1, 8
    %p498 = pneg %p497
    // Predicated region
    $region302: #{tpu_custom_call.1} parent=1 // pred_check
      _
    $region303: #{tpu_custom_call.1} parent=1 // pred_check_branch
      %500 = sbr.rel (%p497) target = $region305
    $region304: #{tpu_custom_call.1} parent=1 // pred_region
      %s515 = sand.u32 1, 7
      %p516 = scmp.eq.s32.totalorder %s515, 0
      %p517 = pneg %p516
      // Predicated region
      $region317: #{tpu_custom_call.1} parent=304 // pred_check
        _
      $region318: #{tpu_custom_call.1} parent=304 // pred_check_branch
        %519 = sbr.rel (%p516) target = $region320
      $region319: #{tpu_custom_call.1} parent=304 // pred_region
        %s520 = sand.u32 1, 7
        %s521 = ssub.s32 1, %s520
        %s522 = scalar_lea.vmem %s493, %s521
        %s523 = ssub.s32 1, %s520
        %s524 = scalar_lea.vmem %s494, %s523 [#allocation2]
        %s525 = sshllo.u32 0, %s520
        loop: start=0, step=1, limit=1
        $region321: #{tpu_custom_call.1} parent=319 // loop_pre_header
          _
        $region322: #{tpu_custom_call.1} parent=319 // loop_header
          %s527 = sphi 0, %s531
          %p528 = scmp.ge.s32.totalorder %s527, 1
          %s532 = sphi %s522, %s522
          %s533 = sphi %s524, %s524
        $region323: #{tpu_custom_call.1} parent=319 // loop_header_branch
          %530 = sbr.rel (%p528) target = $region327
        $region324: #{tpu_custom_call.1} parent=319 // loop_body
          %v534 = vld [vmem:[%s532] sm:%s525]
          %535 = vst [vmem:[%s533] sm:%s525] %v534
        $region325: #{tpu_custom_call.1} parent=319 // loop_footer
          %s531 = sadd.s32 1, %s527
        $region326: #{tpu_custom_call.1} parent=319 // loop_footer_branch
          %526 = sbr.rel target = $region322
        $region327: #{tpu_custom_call.1} parent=319 // loop_exit
          _
      $region320: #{tpu_custom_call.1} parent=304 // pred_fallthru
        _
    $region305: #{tpu_custom_call.1} parent=1 // pred_fallthru
      _
    // Predicated region
    $region306: #{tpu_custom_call.1} parent=1 // pred_check
      %p501 = pneg %p497
    $region307: #{tpu_custom_call.1} parent=1 // pred_check_branch
      %503 = sbr.rel (%p501) target = $region309
    $region308: #{tpu_custom_call.1} parent=1 // pred_region
      %s504 = sshllo.u32 0, 1
      loop: start=0, step=1, limit=1
      $region310: #{tpu_custom_call.1} parent=308 // loop_pre_header
        _
      $region311: #{tpu_custom_call.1} parent=308 // loop_header
        %s506 = sphi 0, %s510
        %p507 = scmp.ge.s32.totalorder %s506, 1
        %s511 = sphi %s493, %s493
        %s512 = sphi %s494, %s494
      $region312: #{tpu_custom_call.1} parent=308 // loop_header_branch
        %509 = sbr.rel (%p507) target = $region316
      $region313: #{tpu_custom_call.1} parent=308 // loop_body
        %v513 = vld [vmem:[%s511] sm:%s504]
        %514 = vst [vmem:[%s512] sm:%s504] %v513
      $region314: #{tpu_custom_call.1} parent=308 // loop_footer
        %s510 = sadd.s32 1, %s506
      $region315: #{tpu_custom_call.1} parent=308 // loop_footer_branch
        %505 = sbr.rel target = $region311
      $region316: #{tpu_custom_call.1} parent=308 // loop_exit
        _
    $region309: #{tpu_custom_call.1} parent=1 // pred_fallthru
      _
    // Predicated region
    $region328: #{tpu_custom_call.1} parent=1 // pred_check
      _
    $region329: #{tpu_custom_call.1} parent=1 // pred_check_branch
      %538 = sbr.rel (0) target = $region331
    $region330: #{tpu_custom_call.1} parent=1 // pred_region
      %539 = vsyncadd %s495, 16
    $region331: #{tpu_custom_call.1} parent=1 // pred_fallthru
      _
    %s540 = sld [smem:[#allocation5 + $0xb]]
    %s541 = scalar_lea.vmem %s1, %s540
    %s542 = scalar_lea.vmem [#allocation2], 11
    %s543 = scalar_lea.sflag [#allocation3], 11
    %p545 = scmp.lt.u32.totalorder 1, 8
    %p546 = pneg %p545
    // Predicated region
    $region332: #{tpu_custom_call.1} parent=1 // pred_check
      _
    $region333: #{tpu_custom_call.1} parent=1 // pred_check_branch
      %548 = sbr.rel (%p545) target = $region335
    $region334: #{tpu_custom_call.1} parent=1 // pred_region
      %s563 = sand.u32 1, 7
      %p564 = scmp.eq.s32.totalorder %s563, 0
      %p565 = pneg %p564
      // Predicated region
      $region347: #{tpu_custom_call.1} parent=334 // pred_check
        _
      $region348: #{tpu_custom_call.1} parent=334 // pred_check_branch
        %567 = sbr.rel (%p564) target = $region350
      $region349: #{tpu_custom_call.1} parent=334 // pred_region
        %s568 = sand.u32 1, 7
        %s569 = ssub.s32 1, %s568
        %s570 = scalar_lea.vmem %s541, %s569
        %s571 = ssub.s32 1, %s568
        %s572 = scalar_lea.vmem %s542, %s571 [#allocation2]
        %s573 = sshllo.u32 0, %s568
        loop: start=0, step=1, limit=1
        $region351: #{tpu_custom_call.1} parent=349 // loop_pre_header
          _
        $region352: #{tpu_custom_call.1} parent=349 // loop_header
          %s575 = sphi 0, %s579
          %p576 = scmp.ge.s32.totalorder %s575, 1
          %s580 = sphi %s570, %s570
          %s581 = sphi %s572, %s572
        $region353: #{tpu_custom_call.1} parent=349 // loop_header_branch
          %578 = sbr.rel (%p576) target = $region357
        $region354: #{tpu_custom_call.1} parent=349 // loop_body
          %v582 = vld [vmem:[%s580] sm:%s573]
          %583 = vst [vmem:[%s581] sm:%s573] %v582
        $region355: #{tpu_custom_call.1} parent=349 // loop_footer
          %s579 = sadd.s32 1, %s575
        $region356: #{tpu_custom_call.1} parent=349 // loop_footer_branch
          %574 = sbr.rel target = $region352
        $region357: #{tpu_custom_call.1} parent=349 // loop_exit
          _
      $region350: #{tpu_custom_call.1} parent=334 // pred_fallthru
        _
    $region335: #{tpu_custom_call.1} parent=1 // pred_fallthru
      _
    // Predicated region
    $region336: #{tpu_custom_call.1} parent=1 // pred_check
      %p549 = pneg %p545
    $region337: #{tpu_custom_call.1} parent=1 // pred_check_branch
      %551 = sbr.rel (%p549) target = $region339
    $region338: #{tpu_custom_call.1} parent=1 // pred_region
      %s552 = sshllo.u32 0, 1
      loop: start=0, step=1, limit=1
      $region340: #{tpu_custom_call.1} parent=338 // loop_pre_header
        _
      $region341: #{tpu_custom_call.1} parent=338 // loop_header
        %s554 = sphi 0, %s558
        %p555 = scmp.ge.s32.totalorder %s554, 1
        %s559 = sphi %s541, %s541
        %s560 = sphi %s542, %s542
      $region342: #{tpu_custom_call.1} parent=338 // loop_header_branch
        %557 = sbr.rel (%p555) target = $region346
      $region343: #{tpu_custom_call.1} parent=338 // loop_body
        %v561 = vld [vmem:[%s559] sm:%s552]
        %562 = vst [vmem:[%s560] sm:%s552] %v561
      $region344: #{tpu_custom_call.1} parent=338 // loop_footer
        %s558 = sadd.s32 1, %s554
      $region345: #{tpu_custom_call.1} parent=338 // loop_footer_branch
        %553 = sbr.rel target = $region341
      $region346: #{tpu_custom_call.1} parent=338 // loop_exit
        _
    $region339: #{tpu_custom_call.1} parent=1 // pred_fallthru
      _
    // Predicated region
    $region358: #{tpu_custom_call.1} parent=1 // pred_check
      _
    $region359: #{tpu_custom_call.1} parent=1 // pred_check_branch
      %586 = sbr.rel (0) target = $region361
    $region360: #{tpu_custom_call.1} parent=1 // pred_region
      %587 = vsyncadd %s543, 16
    $region361: #{tpu_custom_call.1} parent=1 // pred_fallthru
      _
    %s588 = sld [smem:[#allocation5 + $0xc]]
    %s589 = scalar_lea.vmem %s1, %s588
    %s590 = scalar_lea.vmem [#allocation2], 12
    %s591 = scalar_lea.sflag [#allocation3], 12
    %p593 = scmp.lt.u32.totalorder 1, 8
    %p594 = pneg %p593
    // Predicated region
    $region362: #{tpu_custom_call.1} parent=1 // pred_check
      _
    $region363: #{tpu_custom_call.1} parent=1 // pred_check_branch
      %596 = sbr.rel (%p593) target = $region365
    $region364: #{tpu_custom_call.1} parent=1 // pred_region
      %s611 = sand.u32 1, 7
      %p612 = scmp.eq.s32.totalorder %s611, 0
      %p613 = pneg %p612
      // Predicated region
      $region377: #{tpu_custom_call.1} parent=364 // pred_check
        _
      $region378: #{tpu_custom_call.1} parent=364 // pred_check_branch
        %615 = sbr.rel (%p612) target = $region380
      $region379: #{tpu_custom_call.1} parent=364 // pred_region
        %s616 = sand.u32 1, 7
        %s617 = ssub.s32 1, %s616
        %s618 = scalar_lea.vmem %s589, %s617
        %s619 = ssub.s32 1, %s616
        %s620 = scalar_lea.vmem %s590, %s619 [#allocation2]
        %s621 = sshllo.u32 0, %s616
        loop: start=0, step=1, limit=1
        $region381: #{tpu_custom_call.1} parent=379 // loop_pre_header
          _
        $region382: #{tpu_custom_call.1} parent=379 // loop_header
          %s623 = sphi 0, %s627
          %p624 = scmp.ge.s32.totalorder %s623, 1
          %s628 = sphi %s618, %s618
          %s629 = sphi %s620, %s620
        $region383: #{tpu_custom_call.1} parent=379 // loop_header_branch
          %626 = sbr.rel (%p624) target = $region387
        $region384: #{tpu_custom_call.1} parent=379 // loop_body
          %v630 = vld [vmem:[%s628] sm:%s621]
          %631 = vst [vmem:[%s629] sm:%s621] %v630
        $region385: #{tpu_custom_call.1} parent=379 // loop_footer
          %s627 = sadd.s32 1, %s623
        $region386: #{tpu_custom_call.1} parent=379 // loop_footer_branch
          %622 = sbr.rel target = $region382
        $region387: #{tpu_custom_call.1} parent=379 // loop_exit
          _
      $region380: #{tpu_custom_call.1} parent=364 // pred_fallthru
        _
    $region365: #{tpu_custom_call.1} parent=1 // pred_fallthru
      _
    // Predicated region
    $region366: #{tpu_custom_call.1} parent=1 // pred_check
      %p597 = pneg %p593
    $region367: #{tpu_custom_call.1} parent=1 // pred_check_branch
      %599 = sbr.rel (%p597) target = $region369
    $region368: #{tpu_custom_call.1} parent=1 // pred_region
      %s600 = sshllo.u32 0, 1
      loop: start=0, step=1, limit=1
      $region370: #{tpu_custom_call.1} parent=368 // loop_pre_header
        _
      $region371: #{tpu_custom_call.1} parent=368 // loop_header
        %s602 = sphi 0, %s606
        %p603 = scmp.ge.s32.totalorder %s602, 1
        %s607 = sphi %s589, %s589
        %s608 = sphi %s590, %s590
      $region372: #{tpu_custom_call.1} parent=368 // loop_header_branch
        %605 = sbr.rel (%p603) target = $region376
      $region373: #{tpu_custom_call.1} parent=368 // loop_body
        %v609 = vld [vmem:[%s607] sm:%s600]
        %610 = vst [vmem:[%s608] sm:%s600] %v609
      $region374: #{tpu_custom_call.1} parent=368 // loop_footer
        %s606 = sadd.s32 1, %s602
      $region375: #{tpu_custom_call.1} parent=368 // loop_footer_branch
        %601 = sbr.rel target = $region371
      $region376: #{tpu_custom_call.1} parent=368 // loop_exit
        _
    $region369: #{tpu_custom_call.1} parent=1 // pred_fallthru
      _
    // Predicated region
    $region388: #{tpu_custom_call.1} parent=1 // pred_check
      _
    $region389: #{tpu_custom_call.1} parent=1 // pred_check_branch
      %634 = sbr.rel (0) target = $region391
    $region390: #{tpu_custom_call.1} parent=1 // pred_region
      %635 = vsyncadd %s591, 16
    $region391: #{tpu_custom_call.1} parent=1 // pred_fallthru
      _
    %s636 = sld [smem:[#allocation5 + $0xd]]
    %s637 = scalar_lea.vmem %s1, %s636
    %s638 = scalar_lea.vmem [#allocation2], 13
    %s639 = scalar_lea.sflag [#allocation3], 13
    %p641 = scmp.lt.u32.totalorder 1, 8
    %p642 = pneg %p641
    // Predicated region
    $region392: #{tpu_custom_call.1} parent=1 // pred_check
      _
    $region393: #{tpu_custom_call.1} parent=1 // pred_check_branch
      %644 = sbr.rel (%p641) target = $region395
    $region394: #{tpu_custom_call.1} parent=1 // pred_region
      %s659 = sand.u32 1, 7
      %p660 = scmp.eq.s32.totalorder %s659, 0
      %p661 = pneg %p660
      // Predicated region
      $region407: #{tpu_custom_call.1} parent=394 // pred_check
        _
      $region408: #{tpu_custom_call.1} parent=394 // pred_check_branch
        %663 = sbr.rel (%p660) target = $region410
      $region409: #{tpu_custom_call.1} parent=394 // pred_region
        %s664 = sand.u32 1, 7
        %s665 = ssub.s32 1, %s664
        %s666 = scalar_lea.vmem %s637, %s665
        %s667 = ssub.s32 1, %s664
        %s668 = scalar_lea.vmem %s638, %s667 [#allocation2]
        %s669 = sshllo.u32 0, %s664
        loop: start=0, step=1, limit=1
        $region411: #{tpu_custom_call.1} parent=409 // loop_pre_header
          _
        $region412: #{tpu_custom_call.1} parent=409 // loop_header
          %s671 = sphi 0, %s675
          %p672 = scmp.ge.s32.totalorder %s671, 1
          %s676 = sphi %s666, %s666
          %s677 = sphi %s668, %s668
        $region413: #{tpu_custom_call.1} parent=409 // loop_header_branch
          %674 = sbr.rel (%p672) target = $region417
        $region414: #{tpu_custom_call.1} parent=409 // loop_body
          %v678 = vld [vmem:[%s676] sm:%s669]
          %679 = vst [vmem:[%s677] sm:%s669] %v678
        $region415: #{tpu_custom_call.1} parent=409 // loop_footer
          %s675 = sadd.s32 1, %s671
        $region416: #{tpu_custom_call.1} parent=409 // loop_footer_branch
          %670 = sbr.rel target = $region412
        $region417: #{tpu_custom_call.1} parent=409 // loop_exit
          _
      $region410: #{tpu_custom_call.1} parent=394 // pred_fallthru
        _
    $region395: #{tpu_custom_call.1} parent=1 // pred_fallthru
      _
    // Predicated region
    $region396: #{tpu_custom_call.1} parent=1 // pred_check
      %p645 = pneg %p641
    $region397: #{tpu_custom_call.1} parent=1 // pred_check_branch
      %647 = sbr.rel (%p645) target = $region399
    $region398: #{tpu_custom_call.1} parent=1 // pred_region
      %s648 = sshllo.u32 0, 1
      loop: start=0, step=1, limit=1
      $region400: #{tpu_custom_call.1} parent=398 // loop_pre_header
        _
      $region401: #{tpu_custom_call.1} parent=398 // loop_header
        %s650 = sphi 0, %s654
        %p651 = scmp.ge.s32.totalorder %s650, 1
        %s655 = sphi %s637, %s637
        %s656 = sphi %s638, %s638
      $region402: #{tpu_custom_call.1} parent=398 // loop_header_branch
        %653 = sbr.rel (%p651) target = $region406
      $region403: #{tpu_custom_call.1} parent=398 // loop_body
        %v657 = vld [vmem:[%s655] sm:%s648]
        %658 = vst [vmem:[%s656] sm:%s648] %v657
      $region404: #{tpu_custom_call.1} parent=398 // loop_footer
        %s654 = sadd.s32 1, %s650
      $region405: #{tpu_custom_call.1} parent=398 // loop_footer_branch
        %649 = sbr.rel target = $region401
      $region406: #{tpu_custom_call.1} parent=398 // loop_exit
        _
    $region399: #{tpu_custom_call.1} parent=1 // pred_fallthru
      _
    // Predicated region
    $region418: #{tpu_custom_call.1} parent=1 // pred_check
      _
    $region419: #{tpu_custom_call.1} parent=1 // pred_check_branch
      %682 = sbr.rel (0) target = $region421
    $region420: #{tpu_custom_call.1} parent=1 // pred_region
      %683 = vsyncadd %s639, 16
    $region421: #{tpu_custom_call.1} parent=1 // pred_fallthru
      _
    %s684 = sld [smem:[#allocation5 + $0xe]]
    %s685 = scalar_lea.vmem %s1, %s684
    %s686 = scalar_lea.vmem [#allocation2], 14
    %s687 = scalar_lea.sflag [#allocation3], 14
    %p689 = scmp.lt.u32.totalorder 1, 8
    %p690 = pneg %p689
    // Predicated region
    $region422: #{tpu_custom_call.1} parent=1 // pred_check
      _
    $region423: #{tpu_custom_call.1} parent=1 // pred_check_branch
      %692 = sbr.rel (%p689) target = $region425
    $region424: #{tpu_custom_call.1} parent=1 // pred_region
      %s707 = sand.u32 1, 7
      %p708 = scmp.eq.s32.totalorder %s707, 0
      %p709 = pneg %p708
      // Predicated region
      $region437: #{tpu_custom_call.1} parent=424 // pred_check
        _
      $region438: #{tpu_custom_call.1} parent=424 // pred_check_branch
        %711 = sbr.rel (%p708) target = $region440
      $region439: #{tpu_custom_call.1} parent=424 // pred_region
        %s712 = sand.u32 1, 7
        %s713 = ssub.s32 1, %s712
        %s714 = scalar_lea.vmem %s685, %s713
        %s715 = ssub.s32 1, %s712
        %s716 = scalar_lea.vmem %s686, %s715 [#allocation2]
        %s717 = sshllo.u32 0, %s712
        loop: start=0, step=1, limit=1
        $region441: #{tpu_custom_call.1} parent=439 // loop_pre_header
          _
        $region442: #{tpu_custom_call.1} parent=439 // loop_header
          %s719 = sphi 0, %s723
          %p720 = scmp.ge.s32.totalorder %s719, 1
          %s724 = sphi %s714, %s714
          %s725 = sphi %s716, %s716
        $region443: #{tpu_custom_call.1} parent=439 // loop_header_branch
          %722 = sbr.rel (%p720) target = $region447
        $region444: #{tpu_custom_call.1} parent=439 // loop_body
          %v726 = vld [vmem:[%s724] sm:%s717]
          %727 = vst [vmem:[%s725] sm:%s717] %v726
        $region445: #{tpu_custom_call.1} parent=439 // loop_footer
          %s723 = sadd.s32 1, %s719
        $region446: #{tpu_custom_call.1} parent=439 // loop_footer_branch
          %718 = sbr.rel target = $region442
        $region447: #{tpu_custom_call.1} parent=439 // loop_exit
          _
      $region440: #{tpu_custom_call.1} parent=424 // pred_fallthru
        _
    $region425: #{tpu_custom_call.1} parent=1 // pred_fallthru
      _
    // Predicated region
    $region426: #{tpu_custom_call.1} parent=1 // pred_check
      %p693 = pneg %p689
    $region427: #{tpu_custom_call.1} parent=1 // pred_check_branch
      %695 = sbr.rel (%p693) target = $region429
    $region428: #{tpu_custom_call.1} parent=1 // pred_region
      %s696 = sshllo.u32 0, 1
      loop: start=0, step=1, limit=1
      $region430: #{tpu_custom_call.1} parent=428 // loop_pre_header
        _
      $region431: #{tpu_custom_call.1} parent=428 // loop_header
        %s698 = sphi 0, %s702
        %p699 = scmp.ge.s32.totalorder %s698, 1
        %s703 = sphi %s685, %s685
        %s704 = sphi %s686, %s686
      $region432: #{tpu_custom_call.1} parent=428 // loop_header_branch
        %701 = sbr.rel (%p699) target = $region436
      $region433: #{tpu_custom_call.1} parent=428 // loop_body
        %v705 = vld [vmem:[%s703] sm:%s696]
        %706 = vst [vmem:[%s704] sm:%s696] %v705
      $region434: #{tpu_custom_call.1} parent=428 // loop_footer
        %s702 = sadd.s32 1, %s698
      $region435: #{tpu_custom_call.1} parent=428 // loop_footer_branch
        %697 = sbr.rel target = $region431
      $region436: #{tpu_custom_call.1} parent=428 // loop_exit
        _
    $region429: #{tpu_custom_call.1} parent=1 // pred_fallthru
      _
    // Predicated region
    $region448: #{tpu_custom_call.1} parent=1 // pred_check
      _
    $region449: #{tpu_custom_call.1} parent=1 // pred_check_branch
      %730 = sbr.rel (0) target = $region451
    $region450: #{tpu_custom_call.1} parent=1 // pred_region
      %731 = vsyncadd %s687, 16
    $region451: #{tpu_custom_call.1} parent=1 // pred_fallthru
      _
    %s732 = sld [smem:[#allocation5 + $0xf]]
    %s733 = scalar_lea.vmem %s1, %s732
    %s734 = scalar_lea.vmem [#allocation2], 15
    %s735 = scalar_lea.sflag [#allocation3], 15
    %p737 = scmp.lt.u32.totalorder 1, 8
    %p738 = pneg %p737
    // Predicated region
    $region452: #{tpu_custom_call.1} parent=1 // pred_check
      _
    $region453: #{tpu_custom_call.1} parent=1 // pred_check_branch
      %740 = sbr.rel (%p737) target = $region455
    $region454: #{tpu_custom_call.1} parent=1 // pred_region
      %s755 = sand.u32 1, 7
      %p756 = scmp.eq.s32.totalorder %s755, 0
      %p757 = pneg %p756
      // Predicated region
      $region467: #{tpu_custom_call.1} parent=454 // pred_check
        _
      $region468: #{tpu_custom_call.1} parent=454 // pred_check_branch
        %759 = sbr.rel (%p756) target = $region470
      $region469: #{tpu_custom_call.1} parent=454 // pred_region
        %s760 = sand.u32 1, 7
        %s761 = ssub.s32 1, %s760
        %s762 = scalar_lea.vmem %s733, %s761
        %s763 = ssub.s32 1, %s760
        %s764 = scalar_lea.vmem %s734, %s763 [#allocation2]
        %s765 = sshllo.u32 0, %s760
        loop: start=0, step=1, limit=1
        $region471: #{tpu_custom_call.1} parent=469 // loop_pre_header
          _
        $region472: #{tpu_custom_call.1} parent=469 // loop_header
          %s767 = sphi 0, %s771
          %p768 = scmp.ge.s32.totalorder %s767, 1
          %s772 = sphi %s762, %s762
          %s773 = sphi %s764, %s764
        $region473: #{tpu_custom_call.1} parent=469 // loop_header_branch
          %770 = sbr.rel (%p768) target = $region477
        $region474: #{tpu_custom_call.1} parent=469 // loop_body
          %v774 = vld [vmem:[%s772] sm:%s765]
          %775 = vst [vmem:[%s773] sm:%s765] %v774
        $region475: #{tpu_custom_call.1} parent=469 // loop_footer
          %s771 = sadd.s32 1, %s767
        $region476: #{tpu_custom_call.1} parent=469 // loop_footer_branch
          %766 = sbr.rel target = $region472
        $region477: #{tpu_custom_call.1} parent=469 // loop_exit
          _
      $region470: #{tpu_custom_call.1} parent=454 // pred_fallthru
        _
    $region455: #{tpu_custom_call.1} parent=1 // pred_fallthru
      _
    // Predicated region
    $region456: #{tpu_custom_call.1} parent=1 // pred_check
      %p741 = pneg %p737
    $region457: #{tpu_custom_call.1} parent=1 // pred_check_branch
      %743 = sbr.rel (%p741) target = $region459
    $region458: #{tpu_custom_call.1} parent=1 // pred_region
      %s744 = sshllo.u32 0, 1
      loop: start=0, step=1, limit=1
      $region460: #{tpu_custom_call.1} parent=458 // loop_pre_header
        _
      $region461: #{tpu_custom_call.1} parent=458 // loop_header
        %s746 = sphi 0, %s750
        %p747 = scmp.ge.s32.totalorder %s746, 1
        %s751 = sphi %s733, %s733
        %s752 = sphi %s734, %s734
      $region462: #{tpu_custom_call.1} parent=458 // loop_header_branch
        %749 = sbr.rel (%p747) target = $region466
      $region463: #{tpu_custom_call.1} parent=458 // loop_body
        %v753 = vld [vmem:[%s751] sm:%s744]
        %754 = vst [vmem:[%s752] sm:%s744] %v753
      $region464: #{tpu_custom_call.1} parent=458 // loop_footer
        %s750 = sadd.s32 1, %s746
      $region465: #{tpu_custom_call.1} parent=458 // loop_footer_branch
        %745 = sbr.rel target = $region461
      $region466: #{tpu_custom_call.1} parent=458 // loop_exit
        _
    $region459: #{tpu_custom_call.1} parent=1 // pred_fallthru
      _
    // Predicated region
    $region478: #{tpu_custom_call.1} parent=1 // pred_check
      _
    $region479: #{tpu_custom_call.1} parent=1 // pred_check_branch
      %778 = sbr.rel (0) target = $region481
    $region480: #{tpu_custom_call.1} parent=1 // pred_region
      %779 = vsyncadd %s735, 16
    $region481: #{tpu_custom_call.1} parent=1 // pred_fallthru
      _
    %s780 = sld [smem:[#allocation5 + $0x10]]
    %s781 = scalar_lea.vmem %s1, %s780
    %s782 = scalar_lea.vmem [#allocation2], 16
    %s783 = scalar_lea.sflag [#allocation3], 16
    %p785 = scmp.lt.u32.totalorder 1, 8
    %p786 = pneg %p785
    // Predicated region
    $region482: #{tpu_custom_call.1} parent=1 // pred_check
      _
    $region483: #{tpu_custom_call.1} parent=1 // pred_check_branch
      %788 = sbr.rel (%p785) target = $region485
    $region484: #{tpu_custom_call.1} parent=1 // pred_region
      %s803 = sand.u32 1, 7
      %p804 = scmp.eq.s32.totalorder %s803, 0
      %p805 = pneg %p804
      // Predicated region
      $region497: #{tpu_custom_call.1} parent=484 // pred_check
        _
      $region498: #{tpu_custom_call.1} parent=484 // pred_check_branch
        %807 = sbr.rel (%p804) target = $region500
      $region499: #{tpu_custom_call.1} parent=484 // pred_region
        %s808 = sand.u32 1, 7
        %s809 = ssub.s32 1, %s808
        %s810 = scalar_lea.vmem %s781, %s809
        %s811 = ssub.s32 1, %s808
        %s812 = scalar_lea.vmem %s782, %s811 [#allocation2]
        %s813 = sshllo.u32 0, %s808
        loop: start=0, step=1, limit=1
        $region501: #{tpu_custom_call.1} parent=499 // loop_pre_header
          _
        $region502: #{tpu_custom_call.1} parent=499 // loop_header
          %s815 = sphi 0, %s819
          %p816 = scmp.ge.s32.totalorder %s815, 1
          %s820 = sphi %s810, %s810
          %s821 = sphi %s812, %s812
        $region503: #{tpu_custom_call.1} parent=499 // loop_header_branch
          %818 = sbr.rel (%p816) target = $region507
        $region504: #{tpu_custom_call.1} parent=499 // loop_body
          %v822 = vld [vmem:[%s820] sm:%s813]
          %823 = vst [vmem:[%s821] sm:%s813] %v822
        $region505: #{tpu_custom_call.1} parent=499 // loop_footer
          %s819 = sadd.s32 1, %s815
        $region506: #{tpu_custom_call.1} parent=499 // loop_footer_branch
          %814 = sbr.rel target = $region502
        $region507: #{tpu_custom_call.1} parent=499 // loop_exit
          _
      $region500: #{tpu_custom_call.1} parent=484 // pred_fallthru
        _
    $region485: #{tpu_custom_call.1} parent=1 // pred_fallthru
      _
    // Predicated region
    $region486: #{tpu_custom_call.1} parent=1 // pred_check
      %p789 = pneg %p785
    $region487: #{tpu_custom_call.1} parent=1 // pred_check_branch
      %791 = sbr.rel (%p789) target = $region489
    $region488: #{tpu_custom_call.1} parent=1 // pred_region
      %s792 = sshllo.u32 0, 1
      loop: start=0, step=1, limit=1
      $region490: #{tpu_custom_call.1} parent=488 // loop_pre_header
        _
      $region491: #{tpu_custom_call.1} parent=488 // loop_header
        %s794 = sphi 0, %s798
        %p795 = scmp.ge.s32.totalorder %s794, 1
        %s799 = sphi %s781, %s781
        %s800 = sphi %s782, %s782
      $region492: #{tpu_custom_call.1} parent=488 // loop_header_branch
        %797 = sbr.rel (%p795) target = $region496
      $region493: #{tpu_custom_call.1} parent=488 // loop_body
        %v801 = vld [vmem:[%s799] sm:%s792]
        %802 = vst [vmem:[%s800] sm:%s792] %v801
      $region494: #{tpu_custom_call.1} parent=488 // loop_footer
        %s798 = sadd.s32 1, %s794
      $region495: #{tpu_custom_call.1} parent=488 // loop_footer_branch
        %793 = sbr.rel target = $region491
      $region496: #{tpu_custom_call.1} parent=488 // loop_exit
        _
    $region489: #{tpu_custom_call.1} parent=1 // pred_fallthru
      _
    // Predicated region
    $region508: #{tpu_custom_call.1} parent=1 // pred_check
      _
    $region509: #{tpu_custom_call.1} parent=1 // pred_check_branch
      %826 = sbr.rel (0) target = $region511
    $region510: #{tpu_custom_call.1} parent=1 // pred_region
      %827 = vsyncadd %s783, 16
    $region511: #{tpu_custom_call.1} parent=1 // pred_fallthru
      _
    %s828 = sld [smem:[#allocation5 + $0x11]]
    %s829 = scalar_lea.vmem %s1, %s828
    %s830 = scalar_lea.vmem [#allocation2], 17
    %s831 = scalar_lea.sflag [#allocation3], 17
    %p833 = scmp.lt.u32.totalorder 1, 8
    %p834 = pneg %p833
    // Predicated region
    $region512: #{tpu_custom_call.1} parent=1 // pred_check
      _
    $region513: #{tpu_custom_call.1} parent=1 // pred_check_branch
      %836 = sbr.rel (%p833) target = $region515
    $region514: #{tpu_custom_call.1} parent=1 // pred_region
      %s851 = sand.u32 1, 7
      %p852 = scmp.eq.s32.totalorder %s851, 0
      %p853 = pneg %p852
      // Predicated region
      $region527: #{tpu_custom_call.1} parent=514 // pred_check
        _
      $region528: #{tpu_custom_call.1} parent=514 // pred_check_branch
        %855 = sbr.rel (%p852) target = $region530
      $region529: #{tpu_custom_call.1} parent=514 // pred_region
        %s856 = sand.u32 1, 7
        %s857 = ssub.s32 1, %s856
        %s858 = scalar_lea.vmem %s829, %s857
        %s859 = ssub.s32 1, %s856
        %s860 = scalar_lea.vmem %s830, %s859 [#allocation2]
        %s861 = sshllo.u32 0, %s856
        loop: start=0, step=1, limit=1
        $region531: #{tpu_custom_call.1} parent=529 // loop_pre_header
          _
        $region532: #{tpu_custom_call.1} parent=529 // loop_header
          %s863 = sphi 0, %s867
          %p864 = scmp.ge.s32.totalorder %s863, 1
          %s868 = sphi %s858, %s858
          %s869 = sphi %s860, %s860
        $region533: #{tpu_custom_call.1} parent=529 // loop_header_branch
          %866 = sbr.rel (%p864) target = $region537
        $region534: #{tpu_custom_call.1} parent=529 // loop_body
          %v870 = vld [vmem:[%s868] sm:%s861]
          %871 = vst [vmem:[%s869] sm:%s861] %v870
        $region535: #{tpu_custom_call.1} parent=529 // loop_footer
          %s867 = sadd.s32 1, %s863
        $region536: #{tpu_custom_call.1} parent=529 // loop_footer_branch
          %862 = sbr.rel target = $region532
        $region537: #{tpu_custom_call.1} parent=529 // loop_exit
          _
      $region530: #{tpu_custom_call.1} parent=514 // pred_fallthru
        _
    $region515: #{tpu_custom_call.1} parent=1 // pred_fallthru
      _
    // Predicated region
    $region516: #{tpu_custom_call.1} parent=1 // pred_check
      %p837 = pneg %p833
    $region517: #{tpu_custom_call.1} parent=1 // pred_check_branch
      %839 = sbr.rel (%p837) target = $region519
    $region518: #{tpu_custom_call.1} parent=1 // pred_region
      %s840 = sshllo.u32 0, 1
      loop: start=0, step=1, limit=1
      $region520: #{tpu_custom_call.1} parent=518 // loop_pre_header
        _
      $region521: #{tpu_custom_call.1} parent=518 // loop_header
        %s842 = sphi 0, %s846
        %p843 = scmp.ge.s32.totalorder %s842, 1
        %s847 = sphi %s829, %s829
        %s848 = sphi %s830, %s830
      $region522: #{tpu_custom_call.1} parent=518 // loop_header_branch
        %845 = sbr.rel (%p843) target = $region526
      $region523: #{tpu_custom_call.1} parent=518 // loop_body
        %v849 = vld [vmem:[%s847] sm:%s840]
        %850 = vst [vmem:[%s848] sm:%s840] %v849
      $region524: #{tpu_custom_call.1} parent=518 // loop_footer
        %s846 = sadd.s32 1, %s842
      $region525: #{tpu_custom_call.1} parent=518 // loop_footer_branch
        %841 = sbr.rel target = $region521
      $region526: #{tpu_custom_call.1} parent=518 // loop_exit
        _
    $region519: #{tpu_custom_call.1} parent=1 // pred_fallthru
      _
    // Predicated region
    $region538: #{tpu_custom_call.1} parent=1 // pred_check
      _
    $region539: #{tpu_custom_call.1} parent=1 // pred_check_branch
      %874 = sbr.rel (0) target = $region541
    $region540: #{tpu_custom_call.1} parent=1 // pred_region
      %875 = vsyncadd %s831, 16
    $region541: #{tpu_custom_call.1} parent=1 // pred_fallthru
      _
    %s876 = sld [smem:[#allocation5 + $0x12]]
    %s877 = scalar_lea.vmem %s1, %s876
    %s878 = scalar_lea.vmem [#allocation2], 18
    %s879 = scalar_lea.sflag [#allocation3], 18
    %p881 = scmp.lt.u32.totalorder 1, 8
    %p882 = pneg %p881
    // Predicated region
    $region542: #{tpu_custom_call.1} parent=1 // pred_check
      _
    $region543: #{tpu_custom_call.1} parent=1 // pred_check_branch
      %884 = sbr.rel (%p881) target = $region545
    $region544: #{tpu_custom_call.1} parent=1 // pred_region
      %s899 = sand.u32 1, 7
      %p900 = scmp.eq.s32.totalorder %s899, 0
      %p901 = pneg %p900
      // Predicated region
      $region557: #{tpu_custom_call.1} parent=544 // pred_check
        _
      $region558: #{tpu_custom_call.1} parent=544 // pred_check_branch
        %903 = sbr.rel (%p900) target = $region560
      $region559: #{tpu_custom_call.1} parent=544 // pred_region
        %s904 = sand.u32 1, 7
        %s905 = ssub.s32 1, %s904
        %s906 = scalar_lea.vmem %s877, %s905
        %s907 = ssub.s32 1, %s904
        %s908 = scalar_lea.vmem %s878, %s907 [#allocation2]
        %s909 = sshllo.u32 0, %s904
        loop: start=0, step=1, limit=1
        $region561: #{tpu_custom_call.1} parent=559 // loop_pre_header
          _
        $region562: #{tpu_custom_call.1} parent=559 // loop_header
          %s911 = sphi 0, %s915
          %p912 = scmp.ge.s32.totalorder %s911, 1
          %s916 = sphi %s906, %s906
          %s917 = sphi %s908, %s908
        $region563: #{tpu_custom_call.1} parent=559 // loop_header_branch
          %914 = sbr.rel (%p912) target = $region567
        $region564: #{tpu_custom_call.1} parent=559 // loop_body
          %v918 = vld [vmem:[%s916] sm:%s909]
          %919 = vst [vmem:[%s917] sm:%s909] %v918
        $region565: #{tpu_custom_call.1} parent=559 // loop_footer
          %s915 = sadd.s32 1, %s911
        $region566: #{tpu_custom_call.1} parent=559 // loop_footer_branch
          %910 = sbr.rel target = $region562
        $region567: #{tpu_custom_call.1} parent=559 // loop_exit
          _
      $region560: #{tpu_custom_call.1} parent=544 // pred_fallthru
        _
    $region545: #{tpu_custom_call.1} parent=1 // pred_fallthru
      _
    // Predicated region
    $region546: #{tpu_custom_call.1} parent=1 // pred_check
      %p885 = pneg %p881
    $region547: #{tpu_custom_call.1} parent=1 // pred_check_branch
      %887 = sbr.rel (%p885) target = $region549
    $region548: #{tpu_custom_call.1} parent=1 // pred_region
      %s888 = sshllo.u32 0, 1
      loop: start=0, step=1, limit=1
      $region550: #{tpu_custom_call.1} parent=548 // loop_pre_header
        _
      $region551: #{tpu_custom_call.1} parent=548 // loop_header
        %s890 = sphi 0, %s894
        %p891 = scmp.ge.s32.totalorder %s890, 1
        %s895 = sphi %s877, %s877
        %s896 = sphi %s878, %s878
      $region552: #{tpu_custom_call.1} parent=548 // loop_header_branch
        %893 = sbr.rel (%p891) target = $region556
      $region553: #{tpu_custom_call.1} parent=548 // loop_body
        %v897 = vld [vmem:[%s895] sm:%s888]
        %898 = vst [vmem:[%s896] sm:%s888] %v897
      $region554: #{tpu_custom_call.1} parent=548 // loop_footer
        %s894 = sadd.s32 1, %s890
      $region555: #{tpu_custom_call.1} parent=548 // loop_footer_branch
        %889 = sbr.rel target = $region551
      $region556: #{tpu_custom_call.1} parent=548 // loop_exit
        _
    $region549: #{tpu_custom_call.1} parent=1 // pred_fallthru
      _
    // Predicated region
    $region568: #{tpu_custom_call.1} parent=1 // pred_check
      _
    $region569: #{tpu_custom_call.1} parent=1 // pred_check_branch
      %922 = sbr.rel (0) target = $region571
    $region570: #{tpu_custom_call.1} parent=1 // pred_region
      %923 = vsyncadd %s879, 16
    $region571: #{tpu_custom_call.1} parent=1 // pred_fallthru
      _
    %s924 = sld [smem:[#allocation5 + $0x13]]
    %s925 = scalar_lea.vmem %s1, %s924
    %s926 = scalar_lea.vmem [#allocation2], 19
    %s927 = scalar_lea.sflag [#allocation3], 19
    %p929 = scmp.lt.u32.totalorder 1, 8
    %p930 = pneg %p929
    // Predicated region
    $region572: #{tpu_custom_call.1} parent=1 // pred_check
      _
    $region573: #{tpu_custom_call.1} parent=1 // pred_check_branch
      %932 = sbr.rel (%p929) target = $region575
    $region574: #{tpu_custom_call.1} parent=1 // pred_region
      %s947 = sand.u32 1, 7
      %p948 = scmp.eq.s32.totalorder %s947, 0
      %p949 = pneg %p948
      // Predicated region
      $region587: #{tpu_custom_call.1} parent=574 // pred_check
        _
      $region588: #{tpu_custom_call.1} parent=574 // pred_check_branch
        %951 = sbr.rel (%p948) target = $region590
      $region589: #{tpu_custom_call.1} parent=574 // pred_region
        %s952 = sand.u32 1, 7
        %s953 = ssub.s32 1, %s952
        %s954 = scalar_lea.vmem %s925, %s953
        %s955 = ssub.s32 1, %s952
        %s956 = scalar_lea.vmem %s926, %s955 [#allocation2]
        %s957 = sshllo.u32 0, %s952
        loop: start=0, step=1, limit=1
        $region591: #{tpu_custom_call.1} parent=589 // loop_pre_header
          _
        $region592: #{tpu_custom_call.1} parent=589 // loop_header
          %s959 = sphi 0, %s963
          %p960 = scmp.ge.s32.totalorder %s959, 1
          %s964 = sphi %s954, %s954
          %s965 = sphi %s956, %s956
        $region593: #{tpu_custom_call.1} parent=589 // loop_header_branch
          %962 = sbr.rel (%p960) target = $region597
        $region594: #{tpu_custom_call.1} parent=589 // loop_body
          %v966 = vld [vmem:[%s964] sm:%s957]
          %967 = vst [vmem:[%s965] sm:%s957] %v966
        $region595: #{tpu_custom_call.1} parent=589 // loop_footer
          %s963 = sadd.s32 1, %s959
        $region596: #{tpu_custom_call.1} parent=589 // loop_footer_branch
          %958 = sbr.rel target = $region592
        $region597: #{tpu_custom_call.1} parent=589 // loop_exit
          _
      $region590: #{tpu_custom_call.1} parent=574 // pred_fallthru
        _
    $region575: #{tpu_custom_call.1} parent=1 // pred_fallthru
      _
    // Predicated region
    $region576: #{tpu_custom_call.1} parent=1 // pred_check
      %p933 = pneg %p929
    $region577: #{tpu_custom_call.1} parent=1 // pred_check_branch
      %935 = sbr.rel (%p933) target = $region579
    $region578: #{tpu_custom_call.1} parent=1 // pred_region
      %s936 = sshllo.u32 0, 1
      loop: start=0, step=1, limit=1
      $region580: #{tpu_custom_call.1} parent=578 // loop_pre_header
        _
      $region581: #{tpu_custom_call.1} parent=578 // loop_header
        %s938 = sphi 0, %s942
        %p939 = scmp.ge.s32.totalorder %s938, 1
        %s943 = sphi %s925, %s925
        %s944 = sphi %s926, %s926
      $region582: #{tpu_custom_call.1} parent=578 // loop_header_branch
        %941 = sbr.rel (%p939) target = $region586
      $region583: #{tpu_custom_call.1} parent=578 // loop_body
        %v945 = vld [vmem:[%s943] sm:%s936]
        %946 = vst [vmem:[%s944] sm:%s936] %v945
      $region584: #{tpu_custom_call.1} parent=578 // loop_footer
        %s942 = sadd.s32 1, %s938
      $region585: #{tpu_custom_call.1} parent=578 // loop_footer_branch
        %937 = sbr.rel target = $region581
      $region586: #{tpu_custom_call.1} parent=578 // loop_exit
        _
    $region579: #{tpu_custom_call.1} parent=1 // pred_fallthru
      _
    // Predicated region
    $region598: #{tpu_custom_call.1} parent=1 // pred_check
      _
    $region599: #{tpu_custom_call.1} parent=1 // pred_check_branch
      %970 = sbr.rel (0) target = $region601
    $region600: #{tpu_custom_call.1} parent=1 // pred_region
      %971 = vsyncadd %s927, 16
    $region601: #{tpu_custom_call.1} parent=1 // pred_fallthru
      _
    %s972 = sld [smem:[#allocation5 + $0x14]]
    %s973 = scalar_lea.vmem %s1, %s972
    %s974 = scalar_lea.vmem [#allocation2], 20
    %s975 = scalar_lea.sflag [#allocation3], 20
    %p977 = scmp.lt.u32.totalorder 1, 8
    %p978 = pneg %p977
    // Predicated region
    $region602: #{tpu_custom_call.1} parent=1 // pred_check
      _
    $region603: #{tpu_custom_call.1} parent=1 // pred_check_branch
      %980 = sbr.rel (%p977) target = $region605
    $region604: #{tpu_custom_call.1} parent=1 // pred_region
      %s995 = sand.u32 1, 7
      %p996 = scmp.eq.s32.totalorder %s995, 0
      %p997 = pneg %p996
      // Predicated region
      $region617: #{tpu_custom_call.1} parent=604 // pred_check
        _
      $region618: #{tpu_custom_call.1} parent=604 // pred_check_branch
        %999 = sbr.rel (%p996) target = $region620
      $region619: #{tpu_custom_call.1} parent=604 // pred_region
        %s1000 = sand.u32 1, 7
        %s1001 = ssub.s32 1, %s1000
        %s1002 = scalar_lea.vmem %s973, %s1001
        %s1003 = ssub.s32 1, %s1000
        %s1004 = scalar_lea.vmem %s974, %s1003 [#allocation2]
        %s1005 = sshllo.u32 0, %s1000
        loop: start=0, step=1, limit=1
        $region621: #{tpu_custom_call.1} parent=619 // loop_pre_header
          _
        $region622: #{tpu_custom_call.1} parent=619 // loop_header
          %s1007 = sphi 0, %s1011
          %p1008 = scmp.ge.s32.totalorder %s1007, 1
          %s1012 = sphi %s1002, %s1002
          %s1013 = sphi %s1004, %s1004
        $region623: #{tpu_custom_call.1} parent=619 // loop_header_branch
          %1010 = sbr.rel (%p1008) target = $region627
        $region624: #{tpu_custom_call.1} parent=619 // loop_body
          %v1014 = vld [vmem:[%s1012] sm:%s1005]
          %1015 = vst [vmem:[%s1013] sm:%s1005] %v1014
        $region625: #{tpu_custom_call.1} parent=619 // loop_footer
          %s1011 = sadd.s32 1, %s1007
        $region626: #{tpu_custom_call.1} parent=619 // loop_footer_branch
          %1006 = sbr.rel target = $region622
        $region627: #{tpu_custom_call.1} parent=619 // loop_exit
          _
      $region620: #{tpu_custom_call.1} parent=604 // pred_fallthru
        _
    $region605: #{tpu_custom_call.1} parent=1 // pred_fallthru
      _
    // Predicated region
    $region606: #{tpu_custom_call.1} parent=1 // pred_check
      %p981 = pneg %p977
    $region607: #{tpu_custom_call.1} parent=1 // pred_check_branch
      %983 = sbr.rel (%p981) target = $region609
    $region608: #{tpu_custom_call.1} parent=1 // pred_region
      %s984 = sshllo.u32 0, 1
      loop: start=0, step=1, limit=1
      $region610: #{tpu_custom_call.1} parent=608 // loop_pre_header
        _
      $region611: #{tpu_custom_call.1} parent=608 // loop_header
        %s986 = sphi 0, %s990
        %p987 = scmp.ge.s32.totalorder %s986, 1
        %s991 = sphi %s973, %s973
        %s992 = sphi %s974, %s974
      $region612: #{tpu_custom_call.1} parent=608 // loop_header_branch
        %989 = sbr.rel (%p987) target = $region616
      $region613: #{tpu_custom_call.1} parent=608 // loop_body
        %v993 = vld [vmem:[%s991] sm:%s984]
        %994 = vst [vmem:[%s992] sm:%s984] %v993
      $region614: #{tpu_custom_call.1} parent=608 // loop_footer
        %s990 = sadd.s32 1, %s986
      $region615: #{tpu_custom_call.1} parent=608 // loop_footer_branch
        %985 = sbr.rel target = $region611
      $region616: #{tpu_custom_call.1} parent=608 // loop_exit
        _
    $region609: #{tpu_custom_call.1} parent=1 // pred_fallthru
      _
    // Predicated region
    $region628: #{tpu_custom_call.1} parent=1 // pred_check
      _
    $region629: #{tpu_custom_call.1} parent=1 // pred_check_branch
      %1018 = sbr.rel (0) target = $region631
    $region630: #{tpu_custom_call.1} parent=1 // pred_region
      %1019 = vsyncadd %s975, 16
    $region631: #{tpu_custom_call.1} parent=1 // pred_fallthru
      _
    %s1020 = sld [smem:[#allocation5 + $0x15]]
    %s1021 = scalar_lea.vmem %s1, %s1020
    %s1022 = scalar_lea.vmem [#allocation2], 21
    %s1023 = scalar_lea.sflag [#allocation3], 21
    %p1025 = scmp.lt.u32.totalorder 1, 8
    %p1026 = pneg %p1025
    // Predicated region
    $region632: #{tpu_custom_call.1} parent=1 // pred_check
      _
    $region633: #{tpu_custom_call.1} parent=1 // pred_check_branch
      %1028 = sbr.rel (%p1025) target = $region635
    $region634: #{tpu_custom_call.1} parent=1 // pred_region
      %s1043 = sand.u32 1, 7
      %p1044 = scmp.eq.s32.totalorder %s1043, 0
      %p1045 = pneg %p1044
      // Predicated region
      $region647: #{tpu_custom_call.1} parent=634 // pred_check
        _
      $region648: #{tpu_custom_call.1} parent=634 // pred_check_branch
        %1047 = sbr.rel (%p1044) target = $region650
      $region649: #{tpu_custom_call.1} parent=634 // pred_region
        %s1048 = sand.u32 1, 7
        %s1049 = ssub.s32 1, %s1048
        %s1050 = scalar_lea.vmem %s1021, %s1049
        %s1051 = ssub.s32 1, %s1048
        %s1052 = scalar_lea.vmem %s1022, %s1051 [#allocation2]
        %s1053 = sshllo.u32 0, %s1048
        loop: start=0, step=1, limit=1
        $region651: #{tpu_custom_call.1} parent=649 // loop_pre_header
          _
        $region652: #{tpu_custom_call.1} parent=649 // loop_header
          %s1055 = sphi 0, %s1059
          %p1056 = scmp.ge.s32.totalorder %s1055, 1
          %s1060 = sphi %s1050, %s1050
          %s1061 = sphi %s1052, %s1052
        $region653: #{tpu_custom_call.1} parent=649 // loop_header_branch
          %1058 = sbr.rel (%p1056) target = $region657
        $region654: #{tpu_custom_call.1} parent=649 // loop_body
          %v1062 = vld [vmem:[%s1060] sm:%s1053]
          %1063 = vst [vmem:[%s1061] sm:%s1053] %v1062
        $region655: #{tpu_custom_call.1} parent=649 // loop_footer
          %s1059 = sadd.s32 1, %s1055
        $region656: #{tpu_custom_call.1} parent=649 // loop_footer_branch
          %1054 = sbr.rel target = $region652
        $region657: #{tpu_custom_call.1} parent=649 // loop_exit
          _
      $region650: #{tpu_custom_call.1} parent=634 // pred_fallthru
        _
    $region635: #{tpu_custom_call.1} parent=1 // pred_fallthru
      _
    // Predicated region
    $region636: #{tpu_custom_call.1} parent=1 // pred_check
      %p1029 = pneg %p1025
    $region637: #{tpu_custom_call.1} parent=1 // pred_check_branch
      %1031 = sbr.rel (%p1029) target = $region639
    $region638: #{tpu_custom_call.1} parent=1 // pred_region
      %s1032 = sshllo.u32 0, 1
      loop: start=0, step=1, limit=1
      $region640: #{tpu_custom_call.1} parent=638 // loop_pre_header
        _
      $region641: #{tpu_custom_call.1} parent=638 // loop_header
        %s1034 = sphi 0, %s1038
        %p1035 = scmp.ge.s32.totalorder %s1034, 1
        %s1039 = sphi %s1021, %s1021
        %s1040 = sphi %s1022, %s1022
      $region642: #{tpu_custom_call.1} parent=638 // loop_header_branch
        %1037 = sbr.rel (%p1035) target = $region646
      $region643: #{tpu_custom_call.1} parent=638 // loop_body
        %v1041 = vld [vmem:[%s1039] sm:%s1032]
        %1042 = vst [vmem:[%s1040] sm:%s1032] %v1041
      $region644: #{tpu_custom_call.1} parent=638 // loop_footer
        %s1038 = sadd.s32 1, %s1034
      $region645: #{tpu_custom_call.1} parent=638 // loop_footer_branch
        %1033 = sbr.rel target = $region641
      $region646: #{tpu_custom_call.1} parent=638 // loop_exit
        _
    $region639: #{tpu_custom_call.1} parent=1 // pred_fallthru
      _
    // Predicated region
    $region658: #{tpu_custom_call.1} parent=1 // pred_check
      _
    $region659: #{tpu_custom_call.1} parent=1 // pred_check_branch
      %1066 = sbr.rel (0) target = $region661
    $region660: #{tpu_custom_call.1} parent=1 // pred_region
      %1067 = vsyncadd %s1023, 16
    $region661: #{tpu_custom_call.1} parent=1 // pred_fallthru
      _
    %s1068 = sld [smem:[#allocation5 + $0x16]]
    %s1069 = scalar_lea.vmem %s1, %s1068
    %s1070 = scalar_lea.vmem [#allocation2], 22
    %s1071 = scalar_lea.sflag [#allocation3], 22
    %p1073 = scmp.lt.u32.totalorder 1, 8
    %p1074 = pneg %p1073
    // Predicated region
    $region662: #{tpu_custom_call.1} parent=1 // pred_check
      _
    $region663: #{tpu_custom_call.1} parent=1 // pred_check_branch
      %1076 = sbr.rel (%p1073) target = $region665
    $region664: #{tpu_custom_call.1} parent=1 // pred_region
      %s1091 = sand.u32 1, 7
      %p1092 = scmp.eq.s32.totalorder %s1091, 0
      %p1093 = pneg %p1092
      // Predicated region
      $region677: #{tpu_custom_call.1} parent=664 // pred_check
        _
      $region678: #{tpu_custom_call.1} parent=664 // pred_check_branch
        %1095 = sbr.rel (%p1092) target = $region680
      $region679: #{tpu_custom_call.1} parent=664 // pred_region
        %s1096 = sand.u32 1, 7
        %s1097 = ssub.s32 1, %s1096
        %s1098 = scalar_lea.vmem %s1069, %s1097
        %s1099 = ssub.s32 1, %s1096
        %s1100 = scalar_lea.vmem %s1070, %s1099 [#allocation2]
        %s1101 = sshllo.u32 0, %s1096
        loop: start=0, step=1, limit=1
        $region681: #{tpu_custom_call.1} parent=679 // loop_pre_header
          _
        $region682: #{tpu_custom_call.1} parent=679 // loop_header
          %s1103 = sphi 0, %s1107
          %p1104 = scmp.ge.s32.totalorder %s1103, 1
          %s1108 = sphi %s1098, %s1098
          %s1109 = sphi %s1100, %s1100
        $region683: #{tpu_custom_call.1} parent=679 // loop_header_branch
          %1106 = sbr.rel (%p1104) target = $region687
        $region684: #{tpu_custom_call.1} parent=679 // loop_body
          %v1110 = vld [vmem:[%s1108] sm:%s1101]
          %1111 = vst [vmem:[%s1109] sm:%s1101] %v1110
        $region685: #{tpu_custom_call.1} parent=679 // loop_footer
          %s1107 = sadd.s32 1, %s1103
        $region686: #{tpu_custom_call.1} parent=679 // loop_footer_branch
          %1102 = sbr.rel target = $region682
        $region687: #{tpu_custom_call.1} parent=679 // loop_exit
          _
      $region680: #{tpu_custom_call.1} parent=664 // pred_fallthru
        _
    $region665: #{tpu_custom_call.1} parent=1 // pred_fallthru
      _
    // Predicated region
    $region666: #{tpu_custom_call.1} parent=1 // pred_check
      %p1077 = pneg %p1073
    $region667: #{tpu_custom_call.1} parent=1 // pred_check_branch
      %1079 = sbr.rel (%p1077) target = $region669
    $region668: #{tpu_custom_call.1} parent=1 // pred_region
      %s1080 = sshllo.u32 0, 1
      loop: start=0, step=1, limit=1
      $region670: #{tpu_custom_call.1} parent=668 // loop_pre_header
        _
      $region671: #{tpu_custom_call.1} parent=668 // loop_header
        %s1082 = sphi 0, %s1086
        %p1083 = scmp.ge.s32.totalorder %s1082, 1
        %s1087 = sphi %s1069, %s1069
        %s1088 = sphi %s1070, %s1070
      $region672: #{tpu_custom_call.1} parent=668 // loop_header_branch
        %1085 = sbr.rel (%p1083) target = $region676
      $region673: #{tpu_custom_call.1} parent=668 // loop_body
        %v1089 = vld [vmem:[%s1087] sm:%s1080]
        %1090 = vst [vmem:[%s1088] sm:%s1080] %v1089
      $region674: #{tpu_custom_call.1} parent=668 // loop_footer
        %s1086 = sadd.s32 1, %s1082
      $region675: #{tpu_custom_call.1} parent=668 // loop_footer_branch
        %1081 = sbr.rel target = $region671
      $region676: #{tpu_custom_call.1} parent=668 // loop_exit
        _
    $region669: #{tpu_custom_call.1} parent=1 // pred_fallthru
      _
    // Predicated region
    $region688: #{tpu_custom_call.1} parent=1 // pred_check
      _
    $region689: #{tpu_custom_call.1} parent=1 // pred_check_branch
      %1114 = sbr.rel (0) target = $region691
    $region690: #{tpu_custom_call.1} parent=1 // pred_region
      %1115 = vsyncadd %s1071, 16
    $region691: #{tpu_custom_call.1} parent=1 // pred_fallthru
      _
    %s1116 = sld [smem:[#allocation5 + $0x17]]
    %s1117 = scalar_lea.vmem %s1, %s1116
    %s1118 = scalar_lea.vmem [#allocation2], 23
    %s1119 = scalar_lea.sflag [#allocation3], 23
    %p1121 = scmp.lt.u32.totalorder 1, 8
    %p1122 = pneg %p1121
    // Predicated region
    $region692: #{tpu_custom_call.1} parent=1 // pred_check
      _
    $region693: #{tpu_custom_call.1} parent=1 // pred_check_branch
      %1124 = sbr.rel (%p1121) target = $region695
    $region694: #{tpu_custom_call.1} parent=1 // pred_region
      %s1139 = sand.u32 1, 7
      %p1140 = scmp.eq.s32.totalorder %s1139, 0
      %p1141 = pneg %p1140
      // Predicated region
      $region707: #{tpu_custom_call.1} parent=694 // pred_check
        _
      $region708: #{tpu_custom_call.1} parent=694 // pred_check_branch
        %1143 = sbr.rel (%p1140) target = $region710
      $region709: #{tpu_custom_call.1} parent=694 // pred_region
        %s1144 = sand.u32 1, 7
        %s1145 = ssub.s32 1, %s1144
        %s1146 = scalar_lea.vmem %s1117, %s1145
        %s1147 = ssub.s32 1, %s1144
        %s1148 = scalar_lea.vmem %s1118, %s1147 [#allocation2]
        %s1149 = sshllo.u32 0, %s1144
        loop: start=0, step=1, limit=1
        $region711: #{tpu_custom_call.1} parent=709 // loop_pre_header
          _
        $region712: #{tpu_custom_call.1} parent=709 // loop_header
          %s1151 = sphi 0, %s1155
          %p1152 = scmp.ge.s32.totalorder %s1151, 1
          %s1156 = sphi %s1146, %s1146
          %s1157 = sphi %s1148, %s1148
        $region713: #{tpu_custom_call.1} parent=709 // loop_header_branch
          %1154 = sbr.rel (%p1152) target = $region717
        $region714: #{tpu_custom_call.1} parent=709 // loop_body
          %v1158 = vld [vmem:[%s1156] sm:%s1149]
          %1159 = vst [vmem:[%s1157] sm:%s1149] %v1158
        $region715: #{tpu_custom_call.1} parent=709 // loop_footer
          %s1155 = sadd.s32 1, %s1151
        $region716: #{tpu_custom_call.1} parent=709 // loop_footer_branch
          %1150 = sbr.rel target = $region712
        $region717: #{tpu_custom_call.1} parent=709 // loop_exit
          _
      $region710: #{tpu_custom_call.1} parent=694 // pred_fallthru
        _
    $region695: #{tpu_custom_call.1} parent=1 // pred_fallthru
      _
    // Predicated region
    $region696: #{tpu_custom_call.1} parent=1 // pred_check
      %p1125 = pneg %p1121
    $region697: #{tpu_custom_call.1} parent=1 // pred_check_branch
      %1127 = sbr.rel (%p1125) target = $region699
    $region698: #{tpu_custom_call.1} parent=1 // pred_region
      %s1128 = sshllo.u32 0, 1
      loop: start=0, step=1, limit=1
      $region700: #{tpu_custom_call.1} parent=698 // loop_pre_header
        _
      $region701: #{tpu_custom_call.1} parent=698 // loop_header
        %s1130 = sphi 0, %s1134
        %p1131 = scmp.ge.s32.totalorder %s1130, 1
        %s1135 = sphi %s1117, %s1117
        %s1136 = sphi %s1118, %s1118
      $region702: #{tpu_custom_call.1} parent=698 // loop_header_branch
        %1133 = sbr.rel (%p1131) target = $region706
      $region703: #{tpu_custom_call.1} parent=698 // loop_body
        %v1137 = vld [vmem:[%s1135] sm:%s1128]
        %1138 = vst [vmem:[%s1136] sm:%s1128] %v1137
      $region704: #{tpu_custom_call.1} parent=698 // loop_footer
        %s1134 = sadd.s32 1, %s1130
      $region705: #{tpu_custom_call.1} parent=698 // loop_footer_branch
        %1129 = sbr.rel target = $region701
      $region706: #{tpu_custom_call.1} parent=698 // loop_exit
        _
    $region699: #{tpu_custom_call.1} parent=1 // pred_fallthru
      _
    // Predicated region
    $region718: #{tpu_custom_call.1} parent=1 // pred_check
      _
    $region719: #{tpu_custom_call.1} parent=1 // pred_check_branch
      %1162 = sbr.rel (0) target = $region721
    $region720: #{tpu_custom_call.1} parent=1 // pred_region
      %1163 = vsyncadd %s1119, 16
    $region721: #{tpu_custom_call.1} parent=1 // pred_fallthru
      _
    %s1164 = smul.u32 1, 1
    %s1165 = sshll.u32 %s1164, 4
    %1166 = dma.done [#allocation3], %s1165
    %s1167 = sshll.u32 %s1164, 4
    %1168 = dma.done %s63, %s1167
    %s1169 = sshll.u32 %s1164, 4
    %1170 = dma.done %s111, %s1169
    %s1171 = sshll.u32 %s1164, 4
    %1172 = dma.done %s159, %s1171
    %s1173 = sshll.u32 %s1164, 4
    %1174 = dma.done %s207, %s1173
    %s1175 = sshll.u32 %s1164, 4
    %1176 = dma.done %s255, %s1175
    %s1177 = sshll.u32 %s1164, 4
    %1178 = dma.done %s303, %s1177
    %s1179 = sshll.u32 %s1164, 4
    %1180 = dma.done %s351, %s1179
    %s1181 = sshll.u32 %s1164, 4
    %1182 = dma.done %s399, %s1181
    %s1183 = sshll.u32 %s1164, 4
    %1184 = dma.done %s447, %s1183
    %s1185 = sshll.u32 %s1164, 4
    %1186 = dma.done %s495, %s1185
    %s1187 = sshll.u32 %s1164, 4
    %1188 = dma.done %s543, %s1187
    %s1189 = sshll.u32 %s1164, 4
    %1190 = dma.done %s591, %s1189
    %s1191 = sshll.u32 %s1164, 4
    %1192 = dma.done %s639, %s1191
    %s1193 = sshll.u32 %s1164, 4
    %1194 = dma.done %s687, %s1193
    %s1195 = sshll.u32 %s1164, 4
    %1196 = dma.done %s735, %s1195
    %s1197 = sshll.u32 %s1164, 4
    %1198 = dma.done %s783, %s1197
    %s1199 = sshll.u32 %s1164, 4
    %1200 = dma.done %s831, %s1199
    %s1201 = sshll.u32 %s1164, 4
    %1202 = dma.done %s879, %s1201
    %s1203 = sshll.u32 %s1164, 4
    %1204 = dma.done %s927, %s1203
    %s1205 = sshll.u32 %s1164, 4
    %1206 = dma.done %s975, %s1205
    %s1207 = sshll.u32 %s1164, 4
    %1208 = dma.done %s1023, %s1207
    %s1209 = sshll.u32 %s1164, 4
    %1210 = dma.done %s1071, %s1209
    %s1211 = sshll.u32 %s1164, 4
    %1212 = dma.done %s1119, %s1211
    %v1213 = vld [vmem:[#allocation2] sm:$0xff]
    %v1214 = vld [vmem:[#allocation2 + $0x8] sm:$0xff]
    %v1215 = vld [vmem:[#allocation2 + $0x10] sm:$0xff]
    %v1216 = vmul.f32 %v1213, %v1213
    %v1217 = vmul.f32 %v1214, %v1214
    %v1218 = vmul.f32 %v1215, %v1215
    %vm1219 = vcmask 261120
    %v1220 = vsel %vm1219, %v1216, 0.0
    %1221 = vadd.xlane.f32.xlu0 %v1220
    %v1222 = vpop.xlane.xlu0 %1221
    %v1223 = vsel %vm1219, %v1217, 0.0
    %1224 = vadd.xlane.f32.xlu0 %v1223
    %v1225 = vpop.xlane.xlu0 %1224
    %v1226 = vsel %vm1219, %v1218, 0.0
    %1227 = vadd.xlane.f32.xlu0 %v1226
    %v1228 = vpop.xlane.xlu0 %1227
    %v1229 = vrsqrt.pop %v1222
    %v1230 = vmul.f32 %v1222, %v1229
    %vm1231 = vcmp.eq.f32.partialorder %v1222, inf
    %v1232 = vsel %vm1231, %v1222, %v1230
    %vm1233 = vcmp.eq.f32.partialorder %v1222, 0.0
    %v1234 = vand.u32 %v1222, 2147483648
    %v1235 = vsel %vm1233, %v1234, %v1232
    %v1236 = vrsqrt.pop %v1225
    %v1237 = vmul.f32 %v1225, %v1236
    %vm1238 = vcmp.eq.f32.partialorder %v1225, inf
    %v1239 = vsel %vm1238, %v1225, %v1237
    %vm1240 = vcmp.eq.f32.partialorder %v1225, 0.0
    %v1241 = vand.u32 %v1225, 2147483648
    %v1242 = vsel %vm1240, %v1241, %v1239
    %v1243 = vrsqrt.pop %v1228
    %v1244 = vmul.f32 %v1228, %v1243
    %vm1245 = vcmp.eq.f32.partialorder %v1228, inf
    %v1246 = vsel %vm1245, %v1228, %v1244
    %vm1247 = vcmp.eq.f32.partialorder %v1228, 0.0
    %v1248 = vand.u32 %v1228, 2147483648
    %v1249 = vsel %vm1247, %v1248, %v1246
    %vm1250 = vcmp.gt.f32.partialorder %v1235, 1.0
    %vm1251 = vcmp.gt.f32.partialorder %v1242, 1.0
    %vm1252 = vcmp.gt.f32.partialorder %v1249, 1.0
    %v1253 = vadd.f32 %v1235, 1e-07
    %v1254 = vadd.f32 %v1242, 1e-07
    %v1255 = vadd.f32 %v1249, 1e-07
    %v1256 = vrcp.pop %v1253
    %v1257 = vmul.f32 1.0, %v1256
    %v1258 = vrcp.pop %v1254
    %v1259 = vmul.f32 1.0, %v1258
    %v1260 = vrcp.pop %v1255
    %v1261 = vmul.f32 1.0, %v1260
    %v1262 = vsel %vm1250, %v1257, 1.0
    %v1263 = vsel %vm1251, %v1259, 1.0
    %v1264 = vsel %vm1252, %v1261, 1.0
    %v1265 = vmul.f32 %v1213, %v1262
    %v1266 = vmul.f32 %v1214, %v1263
    %v1267 = vmul.f32 %v1215, %v1264
    %v1268 = vlaneseq
    %v1269 = vand.u32 %v1268, 127
    %v1270 = vlaneseq
    %v1271 = vshrl.u32 %v1270, 7
    %v1272 = vmul.u32 %v1271, 6
    %vm1273 = vcmp.ge.s32.totalorder %v1269, %v1272
    %v1274 = vadd.s32 %v1272, 6
    %vm1275 = vcmp.lt.s32.totalorder %v1269, %v1274
    %vm1276 = vmand %vm1273, %vm1275
    %v1277 = vsel %vm1276, 0.16666667, 0.0
    %vm1278 = vcmask 195584
    %v1280 = vsel %vm1278, %v1277, 0
    %1282 = vmatprep.subr.mxu0 0.0
    %1283 = vmatpush1.msra.mxu0 %v1265
    %1284 = vmatprep.subr.mxu0 0.0
    %1285 = vmatpush1.msra.mxu0 %v1266
    %1286 = vmatprep.subr.mxu0 0.0
    %1287 = vmatpush1.msra.mxu0 %v1267
    %1288 = vmatprep.subr.mxu0 0.0
    %1289 = vmatpush1.msra.mxu0 0.0
    %1290 = vmatprep.subr.mxu0 0.0
    %1291 = vmatpush1.msra.mxu0 0.0
    %1292 = vmatprep.subr.mxu0 0.0
    %1293 = vmatpush1.msra.mxu0 0.0
    %1294 = vmatprep.subr.mxu0 0.0
    %1295 = vmatpush1.msra.mxu0 0.0
    %1296 = vmatprep.subr.mxu0 0.0
    %1297 = vmatpush1.msra.mxu0 0.0
    %1298 = vmatprep.subr.mxu0 0.0
    %1299 = vmatpush1.msra.mxu0 0.0
    %1300 = vmatprep.subr.mxu0 0.0
    %1301 = vmatpush1.msra.mxu0 0.0
    %1302 = vmatprep.subr.mxu0 0.0
    %1303 = vmatpush1.msra.mxu0 0.0
    %1304 = vmatprep.subr.mxu0 0.0
    %1305 = vmatpush1.msra.mxu0 0.0
    %1306 = vmatprep.subr.mxu0 0.0
    %1307 = vmatpush1.msra.mxu0 0.0
    %1308 = vmatprep.subr.mxu0 0.0
    %1309 = vmatpush1.msra.mxu0 0.0
    %1310 = vmatprep.subr.mxu0 0.0
    %1311 = vmatpush1.msra.mxu0 0.0
    %1312 = vmatprep.subr.mxu0 0.0
    %1313 = vmatpush1.msra.mxu0 0.0
    %1314 = vmatprep.subr.mxu0 0.0
    %1315 = vmatpush1.msra.mxu0 0.0
    %1316 = vmatprep.subr.mxu0 0.0
    %1317 = vmatpush1.msra.mxu0 0.0
    %1318 = vmatprep.subr.mxu0 0.0
    %1319 = vmatpush1.msra.mxu0 0.0
    %1320 = vmatprep.subr.mxu0 0.0
    %1321 = vmatpush1.msra.mxu0 0.0
    %1322 = vmatprep.subr.mxu0 0.0
    %1323 = vmatpush1.msra.mxu0 0.0
    %1324 = vmatprep.subr.mxu0 0.0
    %1325 = vmatpush1.msra.mxu0 0.0
    %1326 = vmatprep.subr.mxu0 0.0
    %1327 = vmatpush1.msra.mxu0 0.0
    %1328 = vmatprep.subr.mxu0 0.0
    %1329 = vmatpush1.msra.mxu0 0.0
    %1330 = vmatprep.subr.mxu0 0.0
    %1331 = vmatpush1.msra.mxu0 0.0
    %1332 = vmatprep.subr.mxu0 0.0
    %1333 = vmatpush1.msra.mxu0 0.0
    %1334 = vmatprep.subr.mxu0 0.0
    %1335 = vmatpush1.msra.mxu0 0.0
    %1336 = vmatprep.subr.mxu0 0.0
    %1337 = vmatpush1.msra.mxu0 0.0
    %1338 = vmatprep.subr.mxu0 0.0
    %1339 = vmatpush1.msra.mxu0 0.0
    %1340 = vmatprep.subr.mxu0 0.0
    %1341 = vmatpush1.msra.mxu0 0.0
    %1342 = vmatprep.subr.mxu0 0.0
    %1343 = vmatpush1.msra.mxu0 0.0
    %1344 = vmatprep.subr.mxu0 0.0
    %1345 = vmatpush1.msra.mxu0 0.0
    %1346 = vmatprep.mubr.f32.mxu0 0.0
    %1347 = vmatmul.mubr.f32.gmra.mrb[0].mxu0 %v1280
    %v1348 = vpop.f32.mrb[0].mxu0
    %v1349 = vadd.f32 0.0, %v1348
    %v1350 = vpop.f32.mrb[0].mxu0
    %1351 = vdwg.mxu0
    %1352 = vst.msk [vmem:[#allocation6] sm:$0xff] %vm1219, %v1349
    // Predicated region
    $region722: #{tpu_custom_call.1} parent=1 // pred_check
      _
    $region723: #{tpu_custom_call.1} parent=1 // pred_check_branch
      %1354 = sbr.rel (0) target = $region725
    $region724: #{tpu_custom_call.1} parent=1 // pred_region
      %s1356 = ssub.s32 128, 128
      %1357 = vsyncadd [#allocation7], %s1356
      %s1359 = sshll.u32 [#allocation6], 4
      %s1360 = int_to_ptr.vmem [resolvable:$true] %s1359
      %1362 = dma.vmem_to_hbm [thread:$0]  %s1360, 128, %s2, [#allocation7]
    $region725: #{tpu_custom_call.1} parent=1 // pred_fallthru
      _
    // Predicated region
    $region726: #{tpu_custom_call.1} parent=1 // pred_check
      _
    $region727: #{tpu_custom_call.1} parent=1 // pred_check_branch
      %1364 = sbr.rel (0) target = $region729
    $region728: #{tpu_custom_call.1} parent=1 // pred_region
      %1365 = dma.done [#allocation7], 128
    $region729: #{tpu_custom_call.1} parent=1 // pred_fallthru
      _
    %1366 = vsyncpa [#allocation7], 1
  %1367 = vsyncmov [#allocation3]
  %s1368 = vpop.sfrf %1367
  %p1369 = scmp.eq.s32.totalorder %s1368, 0
  %p1370 = pneg %p1369
  %1372 = shalt.err (%p1370)
  %s1373 = scalar_lea.sflag [#allocation3], 1
  %1374 = vsyncmov %s1373
  %s1375 = vpop.sfrf %1374
  %p1376 = scmp.eq.s32.totalorder %s1375, 0
  %p1377 = pneg %p1376
  %1379 = shalt.err (%p1377)
  %s1380 = scalar_lea.sflag [#allocation3], 2
  %1381 = vsyncmov %s1380
  %s1382 = vpop.sfrf %1381
  %p1383 = scmp.eq.s32.totalorder %s1382, 0
  %p1384 = pneg %p1383
  %1386 = shalt.err (%p1384)
  %s1387 = scalar_lea.sflag [#allocation3], 3
  %1388 = vsyncmov %s1387
  %s1389 = vpop.sfrf %1388
  %p1390 = scmp.eq.s32.totalorder %s1389, 0
  %p1391 = pneg %p1390
  %1393 = shalt.err (%p1391)
  %s1394 = scalar_lea.sflag [#allocation3], 4
  %1395 = vsyncmov %s1394
  %s1396 = vpop.sfrf %1395
  %p1397 = scmp.eq.s32.totalorder %s1396, 0
  %p1398 = pneg %p1397
  %1400 = shalt.err (%p1398)
  %s1401 = scalar_lea.sflag [#allocation3], 5
  %1402 = vsyncmov %s1401
  %s1403 = vpop.sfrf %1402
  %p1404 = scmp.eq.s32.totalorder %s1403, 0
  %p1405 = pneg %p1404
  %1407 = shalt.err (%p1405)
  %s1408 = scalar_lea.sflag [#allocation3], 6
  %1409 = vsyncmov %s1408
  %s1410 = vpop.sfrf %1409
  %p1411 = scmp.eq.s32.totalorder %s1410, 0
  %p1412 = pneg %p1411
  %1414 = shalt.err (%p1412)
  %s1415 = scalar_lea.sflag [#allocation3], 7
  %1416 = vsyncmov %s1415
  %s1417 = vpop.sfrf %1416
  %p1418 = scmp.eq.s32.totalorder %s1417, 0
  %p1419 = pneg %p1418
  %1421 = shalt.err (%p1419)
  %s1422 = scalar_lea.sflag [#allocation3], 8
  %1423 = vsyncmov %s1422
  %s1424 = vpop.sfrf %1423
  %p1425 = scmp.eq.s32.totalorder %s1424, 0
  %p1426 = pneg %p1425
  %1428 = shalt.err (%p1426)
  %s1429 = scalar_lea.sflag [#allocation3], 9
  %1430 = vsyncmov %s1429
  %s1431 = vpop.sfrf %1430
  %p1432 = scmp.eq.s32.totalorder %s1431, 0
  %p1433 = pneg %p1432
  %1435 = shalt.err (%p1433)
  %s1436 = scalar_lea.sflag [#allocation3], 10
  %1437 = vsyncmov %s1436
  %s1438 = vpop.sfrf %1437
  %p1439 = scmp.eq.s32.totalorder %s1438, 0
  %p1440 = pneg %p1439
  %1442 = shalt.err (%p1440)
  %s1443 = scalar_lea.sflag [#allocation3], 11
  %1444 = vsyncmov %s1443
  %s1445 = vpop.sfrf %1444
  %p1446 = scmp.eq.s32.totalorder %s1445, 0
  %p1447 = pneg %p1446
  %1449 = shalt.err (%p1447)
  %s1450 = scalar_lea.sflag [#allocation3], 12
  %1451 = vsyncmov %s1450
  %s1452 = vpop.sfrf %1451
  %p1453 = scmp.eq.s32.totalorder %s1452, 0
  %p1454 = pneg %p1453
  %1456 = shalt.err (%p1454)
  %s1457 = scalar_lea.sflag [#allocation3], 13
  %1458 = vsyncmov %s1457
  %s1459 = vpop.sfrf %1458
  %p1460 = scmp.eq.s32.totalorder %s1459, 0
  %p1461 = pneg %p1460
  %1463 = shalt.err (%p1461)
  %s1464 = scalar_lea.sflag [#allocation3], 14
  %1465 = vsyncmov %s1464
  %s1466 = vpop.sfrf %1465
  %p1467 = scmp.eq.s32.totalorder %s1466, 0
  %p1468 = pneg %p1467
  %1470 = shalt.err (%p1468)
  %s1471 = scalar_lea.sflag [#allocation3], 15
  %1472 = vsyncmov %s1471
  %s1473 = vpop.sfrf %1472
  %p1474 = scmp.eq.s32.totalorder %s1473, 0
  %p1475 = pneg %p1474
  %1477 = shalt.err (%p1475)
  %s1478 = scalar_lea.sflag [#allocation3], 16
  %1479 = vsyncmov %s1478
  %s1480 = vpop.sfrf %1479
  %p1481 = scmp.eq.s32.totalorder %s1480, 0
  %p1482 = pneg %p1481
  %1484 = shalt.err (%p1482)
  %s1485 = scalar_lea.sflag [#allocation3], 17
  %1486 = vsyncmov %s1485
  %s1487 = vpop.sfrf %1486
  %p1488 = scmp.eq.s32.totalorder %s1487, 0
  %p1489 = pneg %p1488
  %1491 = shalt.err (%p1489)
  %s1492 = scalar_lea.sflag [#allocation3], 18
  %1493 = vsyncmov %s1492
  %s1494 = vpop.sfrf %1493
  %p1495 = scmp.eq.s32.totalorder %s1494, 0
  %p1496 = pneg %p1495
  %1498 = shalt.err (%p1496)
  %s1499 = scalar_lea.sflag [#allocation3], 19
  %1500 = vsyncmov %s1499
  %s1501 = vpop.sfrf %1500
  %p1502 = scmp.eq.s32.totalorder %s1501, 0
  %p1503 = pneg %p1502
  %1505 = shalt.err (%p1503)
  %s1506 = scalar_lea.sflag [#allocation3], 20
  %1507 = vsyncmov %s1506
  %s1508 = vpop.sfrf %1507
  %p1509 = scmp.eq.s32.totalorder %s1508, 0
  %p1510 = pneg %p1509
  %1512 = shalt.err (%p1510)
  %s1513 = scalar_lea.sflag [#allocation3], 21
  %1514 = vsyncmov %s1513
  %s1515 = vpop.sfrf %1514
  %p1516 = scmp.eq.s32.totalorder %s1515, 0
  %p1517 = pneg %p1516
  %1519 = shalt.err (%p1517)
  %s1520 = scalar_lea.sflag [#allocation3], 22
  %1521 = vsyncmov %s1520
  %s1522 = vpop.sfrf %1521
  %p1523 = scmp.eq.s32.totalorder %s1522, 0
  %p1524 = pneg %p1523
  %1526 = shalt.err (%p1524)
  %s1527 = scalar_lea.sflag [#allocation3], 23
  %1528 = vsyncmov %s1527
  %s1529 = vpop.sfrf %1528
  %p1530 = scmp.eq.s32.totalorder %s1529, 0
  %p1531 = pneg %p1530
  %1533 = shalt.err (%p1531)

</llo_original>
